<compile_context>
chip_gen: v7x
topology: tpu7x:2x2x1
jax: 0.10.0
libtpu: 0.0.40
codegen_flags: <defaults>
</compile_context>

<pallas_src>
import functools

import jax
import jax.numpy as jnp
import numpy as np
from jax.experimental import pallas as pl
from jax.experimental.pallas import tpu as pltpu


# ----------------------------------------------------------------------------
# Generation-aware VMEM budget
# ----------------------------------------------------------------------------
@functools.lru_cache(maxsize=None)
def _vmem_budget_and_limit():
    """(tile-selection budget, vmem_limit_bytes) derived from the chip's VMEM."""
    cap = None
    try:
        info = pltpu.get_tpu_info()
        cap = getattr(info, "vmem_capacity_bytes", None)
    except Exception:
        cap = None
    if not cap:
        cap = 64 * 1024 * 1024                    # conservative (v7x-sized)
    budget = min(40 * 1024 * 1024, max(cap // 2 - 8 * 1024 * 1024, 12 * 1024 * 1024))
    limit = int(min(cap - 16 * 1024 * 1024, budget + 16 * 1024 * 1024))
    return int(budget), limit


def _largest_divisor_leq(n, cap, even=False):
    cap = max(1, min(int(cap), n))
    for d in range(cap, 0, -1):
        if n % d == 0 and (not even or d % 2 == 0):
            return d
    return 2 if even else 1


def _lane_pack_factor(cout, w_out):
    """How many output columns to pack into the last dim so stores are lane-dense."""
    if cout >= 128:
        return 1
    pf = max(1, 128 // cout)
    while pf > 1 and w_out % pf != 0:
        pf //= 2
    return max(pf, 1)


def _conv_tiles(N, H, W, Cin, Cout, mode, fused, act_bytes, budget, max_row_tile):
    """Pick (row tile TH, images per step TN) for the main conv kernel."""
    k_op = 3 * Cin if mode == "im2col3" else Cin
    w_bytes = 2 * 9 * Cin * Cout * act_bytes + 2 * Cout * 4   # resident weights+bias
    avail = max(budget - w_bytes, 1 << 20)
    per_row = (2 * (W + 2) * Cin * act_bytes       # halo-staged input, 2 slots
               + 2 * W * Cout * 4                  # f32 accumulator / epilogue values
               + 2 * W * k_op * act_bytes          # im2col / tap operand temporaries
               + 2 * W * Cout * act_bytes)         # double-buffered output rows
    rows_cap = max(1, avail // per_row)
    rows_cap = min(rows_cap, max(1, 16384 // max(W, 1)))      # keep matmul M moderate
    if max_row_tile is not None:
        rows_cap = min(rows_cap, max(2 if fused else 1, max_row_tile))
    TH = _largest_divisor_leq(H, rows_cap, even=fused)
    TN = 1
    if TH == H:                                    # whole image per step -> batch it
        TN = _largest_divisor_leq(N, max(1, min(rows_cap // H, 8)))
    return TH, TN


# ----------------------------------------------------------------------------
# Main kernel: conv3x3 (pad=1) + bias + ReLU (+ optional fused MaxPool 2x2)
# ----------------------------------------------------------------------------
def _conv3x3_kernel(x_hbm, w_ref, b_ref, o_ref, xbuf, sem, *,
                    TN, TH, H, W, Cin, Cout, HT, mode, fused, pf):
    """One (batch-group, row-tile) grid step.

    x_hbm : (N, H, W, Cin) full input left in HBM (memory_space=pl.ANY)
    w_ref : packed, VMEM-resident weights (constant index map -> fetched once)
    b_ref : (1, Cout) f32 bias
    o_ref : (TN, TH_out, W_out//pf, pf*Cout) lane-dense output tile
    xbuf  : (n_slots*TN, TH+2, W+2, Cin) halo-staged input, manual double buffer
    sem   : (n_slots*TN, 3) DMA semaphores (interior / top halo / bottom halo)
    """
    nb = pl.program_id(0)
    ht = pl.program_id(1)
    n0 = nb * TN
    dt = xbuf.dtype
    prefetch = HT > 1
    nbuf = xbuf.shape[0]

    def window_copies(window_ht, slot):
        """DMA descriptors staging row-tile `window_ht` into buffer slot `slot`."""
        row0 = window_ht * TH
        cs = []
        for t in range(TN):
            img = n0 + t
            base = slot * TN + t
            cs.append(pltpu.make_async_copy(
                x_hbm.at[img, pl.ds(row0, TH)],
                xbuf.at[base, 1:TH + 1, 1:W + 1],
                sem.at[base, 0]))
            if prefetch:
                top = jnp.maximum(row0 - 1, 0)          # clamped; zeroed at the edge
                bot = jnp.minimum(row0 + TH, H - 1)
                cs.append(pltpu.make_async_copy(
                    x_hbm.at[img, pl.ds(top, 1)],
                    xbuf.at[base, 0:1, 1:W + 1],
                    sem.at[base, 1]))
                cs.append(pltpu.make_async_copy(
                    x_hbm.at[img, pl.ds(bot, 1)],
                    xbuf.at[base, TH + 1:TH + 2, 1:W + 1],
                    sem.at[base, 2]))
        return cs

    # ---- left/right halo columns: never DMA'd, zero once per batch group ----
    @pl.when(ht == 0)
    def _zero_cols():
        zcol = jnp.zeros((nbuf, TH + 2, 1, Cin), dt)
        xbuf[:, :, 0:1, :] = zcol
        xbuf[:, :, W + 1:W + 2, :] = zcol

    # ---- stage current window / wait / prefetch next row tile ----
    if prefetch:
        slot = ht % 2

        @pl.when(ht == 0)
        def _stage_first():
            for c in window_copies(ht, 0):
                c.start()

        for c in window_copies(ht, slot):
            c.wait()

        @pl.when(ht + 1 < HT)
        def _prefetch_next():
            for c in window_copies(ht + 1, 1 - slot):
                c.start()
    else:
        slot = 0
        cs = window_copies(ht, 0)
        for c in cs:
            c.start()
        for c in cs:
            c.wait()

    # ---- vertical zero padding at the image boundary (after the waits) ----
    zrow = jnp.zeros((1, W + 2, Cin), dt)

    @pl.when(ht == 0)
    def _zero_top():                                 # ht==0 always lands in slot 0
        for t in range(TN):
            xbuf[t, 0:1, :, :] = zrow

    bslot = (HT - 1) % 2 if prefetch else 0          # slot of the last row tile (static)

    @pl.when(ht == HT - 1)
    def _zero_bot():
        for t in range(TN):
            xbuf[bslot * TN + t, TH + 1:TH + 2, :, :] = zrow

    # ---- 3x3 conv as large matmuls with weights resident in VMEM ----
    bias = b_ref[...]                                # (1, Cout) f32, read once
    M = TH * W
    TH_o = TH // 2 if fused else TH
    W_o = W // 2 if fused else W

    for t in range(TN):
        xt = xbuf[slot * TN + t]                     # (TH+2, W+2, Cin)

        def slab(ky, kx):
            return xt[ky:ky + TH, kx:kx + W, :]

        acc = None
        if mode == "im2col3":                        # K = 3*Cin (Cin < 128 layers)
            for ky in range(3):
                a = jnp.concatenate([slab(ky, kx) for kx in range(3)],
                                    axis=-1).reshape(M, 3 * Cin)
                p = jnp.dot(a, w_ref[ky], preferred_element_type=jnp.float32)
                acc = p if acc is None else acc + p
        else:                                        # "tap": K = Cin (deep layers)
            for ky in range(3):
                for kx in range(3):
                    a = slab(ky, kx).reshape(M, Cin)
                    p = jnp.dot(a, w_ref[ky, kx],
                                preferred_element_type=jnp.float32)
                    acc = p if acc is None else acc + p

        z = jnp.maximum(acc + bias, 0.0).reshape(TH, W, Cout)
        if fused:                                    # fused MaxPool 2x2 stride 2
            z = z.reshape(TH // 2, 2, W, Cout)
            z = jnp.maximum(z[:, 0], z[:, 1])
            z = z.reshape(TH // 2, W // 2, 2, Cout)
            z = jnp.max(z, axis=2)
        o_ref[t] = z.reshape(TH_o, W_o // pf, pf * Cout).astype(o_ref.dtype)


def conv3x3_relu(x, w, b, *, fuse_pool=False, compute_dtype=None,
                 k_mode=None, max_row_tile=None):
    """NHWC conv3x3(pad=1, stride=1) + bias + ReLU, optionally fused maxpool 2x2/2.

    x: (N, H, W, Cin)   w: (3, 3, Cin, Cout) HWIO   b: (1, Cout) or (Cout,)
    returns (N, H, W, Cout), or (N, H//2, W//2, Cout) if fuse_pool.
    """
    N, H, W, Cin = x.shape
    Cout = w.shape[-1]
    dt = jnp.dtype(compute_dtype) if compute_dtype is not None else jnp.dtype(x.dtype)
    x = x.astype(dt)
    w = w.astype(dt)
    b_p = b.reshape(1, Cout).astype(jnp.float32)
    if fuse_pool:
        assert H % 2 == 0 and W % 2 == 0, "fused maxpool needs even H, W"

    mode = k_mode or ("tap" if Cin >= 128 else "im2col3")
    assert mode in ("im2col3", "tap")
    budget, vmem_limit = _vmem_budget_and_limit()
    ib = dt.itemsize

    TH, TN = _conv_tiles(N, H, W, Cin, Cout, mode, fuse_pool, ib, budget, max_row_tile)
    HT = H // TH
    n_slots = 2 if HT > 1 else 1

    TH_o = TH // 2 if fuse_pool else TH
    H_o = H // 2 if fuse_pool else H
    W_o = W // 2 if fuse_pool else W
    pf = _lane_pack_factor(Cout, W_o)

    if mode == "im2col3":
        w_p = w.reshape(3, 3 * Cin, Cout)
        w_spec = pl.BlockSpec((3, 3 * Cin, Cout), lambda nb, h: (0, 0, 0))
    else:
        w_p = w
        w_spec = pl.BlockSpec((3, 3, Cin, Cout), lambda nb, h: (0, 0, 0, 0))

    kernel = functools.partial(
        _conv3x3_kernel, TN=TN, TH=TH, H=H, W=W, Cin=Cin, Cout=Cout, HT=HT,
        mode=mode, fused=fuse_pool, pf=pf)

    out = pl.pallas_call(
        kernel,
        out_shape=jax.ShapeDtypeStruct((N, H_o, W_o // pf, pf * Cout), dt),
        grid=(N // TN, HT),
        in_specs=[
            pl.BlockSpec(memory_space=pl.ANY),        # input stays in HBM, manual DMA
            w_spec,                                   # constant index -> resident
            pl.BlockSpec((1, Cout), lambda nb, h: (0, 0)),
        ],
        out_specs=pl.BlockSpec((TN, TH_o, W_o // pf, pf * Cout),
                               lambda nb, h: (nb, h, 0, 0)),
        scratch_shapes=[
            pltpu.VMEM((n_slots * TN, TH + 2, W + 2, Cin), dt),
            pltpu.SemaphoreType.DMA((n_slots * TN, 3)),
        ],
        compiler_params=pltpu.CompilerParams(
            dimension_semantics=("parallel", "arbitrary"),
            vmem_limit_bytes=vmem_limit),
    )(x, w_p, b_p)
    return out.reshape(N, H_o, W_o, Cout)


# ----------------------------------------------------------------------------
# First layer (tiny Cin, e.g. RGB): host-side im2col + lane-friendly matmul kernel
# ----------------------------------------------------------------------------
def _pointwise_kernel(x_ref, w_ref, b_ref, o_ref, *, fused, pf):
    TN, TH, W, K = x_ref.shape
    Cout = w_ref.shape[-1]
    bias = b_ref[...]
    TH_o = TH // 2 if fused else TH
    W_o = W // 2 if fused else W
    for t in range(TN):
        a = x_ref[t].reshape(TH * W, K)
        acc = jnp.dot(a, w_ref[...], preferred_element_type=jnp.float32)
        z = jnp.maximum(acc + bias, 0.0).reshape(TH, W, Cout)
        if fused:
            z = z.reshape(TH // 2, 2, W, Cout)
            z = jnp.maximum(z[:, 0], z[:, 1])
            z = z.reshape(TH // 2, W // 2, 2, Cout)
            z = jnp.max(z, axis=2)
        o_ref[t] = z.reshape(TH_o, W_o // pf, pf * Cout).astype(o_ref.dtype)


def conv3x3_relu_small_cin(x, w, b, *, fuse_pool=False, compute_dtype=None,
                           max_row_tile=None):
    """Conv3x3+ReLU(+pool) for very small Cin (the RGB first layer): im2col in the
    wrapper (K = 9*Cin features) then one lane-dense Pallas matmul per row tile."""
    N, H, W, Cin = x.shape
    Cout = w.shape[-1]
    dt = jnp.dtype(compute_dtype) if compute_dtype is not None else jnp.dtype(x.dtype)
    budget, vmem_limit = _vmem_budget_and_limit()
    ib = dt.itemsize

    xp = jnp.pad(x.astype(dt), ((0, 0), (1, 1), (1, 1), (0, 0)))
    pats = jnp.concatenate(
        [xp[:, ky:ky + H, kx:kx + W, :] for ky in range(3) for kx in range(3)],
        axis=-1)                                       # (N, H, W, 9*Cin), (ky,kx,c) order
    K = 9 * Cin
    w_p = w.reshape(K, Cout).astype(dt)                # HWIO -> (9*Cin, Cout)
    b_p = b.reshape(1, Cout).astype(jnp.float32)

    per_row = 2 * W * K * ib + 2 * W * Cout * 4 + 2 * W * Cout * ib
    rows_cap = max(1, (budget - 2 * K * Cout * ib) // per_row)
    rows_cap = min(rows_cap, max(1, 16384 // max(W, 1)))
    if max_row_tile is not None:
        rows_cap = min(rows_cap, max(2 if fuse_pool else 1, max_row_tile))
    TH = _largest_divisor_leq(H, rows_cap, even=fuse_pool)
    HT = H // TH
    TN = 1
    if TH == H:
        TN = _largest_divisor_leq(N, max(1, min(rows_cap // H, 8)))

    TH_o = TH // 2 if fuse_pool else TH
    H_o = H // 2 if fuse_pool else H
    W_o = W // 2 if fuse_pool else W
    pf = _lane_pack_factor(Cout, W_o)

    out = pl.pallas_call(
        functools.partial(_pointwise_kernel, fused=fuse_pool, pf=pf),
        out_shape=jax.ShapeDtypeStruct((N, H_o, W_o // pf, pf * Cout), dt),
        grid=(N // TN, HT),
        in_specs=[
            pl.BlockSpec((TN, TH, W, K), lambda nb, h: (nb, h, 0, 0)),
            pl.BlockSpec((K, Cout), lambda nb, h: (0, 0)),
            pl.BlockSpec((1, Cout), lambda nb, h: (0, 0)),
        ],
        out_specs=pl.BlockSpec((TN, TH_o, W_o // pf, pf * Cout),
                               lambda nb, h: (nb, h, 0, 0)),
        compiler_params=pltpu.CompilerParams(
            dimension_semantics=("parallel", "arbitrary"),
            vmem_limit_bytes=vmem_limit),
    )(pats, w_p, b_p)
    return out.reshape(N, H_o, W_o, Cout)


# ----------------------------------------------------------------------------
# Standalone MaxPool 2x2 / stride 2 (only used when not fused into the conv)
# ----------------------------------------------------------------------------
def _maxpool2x2_kernel(x_ref, o_ref):
    _, THo, Wo, C = o_ref.shape
    x = x_ref[0]
    x2 = x.reshape(THo, 2, 2 * Wo, C)
    zv = jnp.maximum(x2[:, 0], x2[:, 1])
    zr = zv.reshape(THo, Wo, 2, C)
    o_ref[0] = jnp.max(zr, axis=2).astype(o_ref.dtype)


def maxpool2x2(x):
    """NHWC maxpool 2x2, stride 2 (floor behaviour, as in PyTorch), row-tiled."""
    N, H, W, C = x.shape
    Ho, Wo = H // 2, W // 2
    x = x[:, :2 * Ho, :2 * Wo, :]
    budget, vmem_limit = _vmem_budget_and_limit()
    ib = jnp.dtype(x.dtype).itemsize
    per_row = (2 * (2 * Wo) * C + Wo * C) * ib * 2
    cap = max(1, min(Ho, budget // max(per_row, 1)))
    THo = _largest_divisor_leq(Ho, cap)
    return pl.pallas_call(
        _maxpool2x2_kernel,
        out_shape=jax.ShapeDtypeStruct((N, Ho, Wo, C), x.dtype),
        grid=(N, Ho // THo),
        in_specs=[pl.BlockSpec((1, 2 * THo, 2 * Wo, C), lambda n, h: (n, h, 0, 0))],
        out_specs=pl.BlockSpec((1, THo, Wo, C), lambda n, h: (n, h, 0, 0)),
        compiler_params=pltpu.CompilerParams(
            dimension_semantics=("parallel", "arbitrary"),
            vmem_limit_bytes=vmem_limit),
    )(x)


# ----------------------------------------------------------------------------
# Parameter init (matches PyTorch _initialize_weights statistics)
# ----------------------------------------------------------------------------
def init_vgg_params(cfg_list, key, in_channels=3):
    params = []
    c_in = in_channels
    for v in cfg_list:
        if v == "M":
            continue
        key, k = jax.random.split(key)
        fan_out = v * 3 * 3
        std = (2.0 / fan_out) ** 0.5                   # kaiming_normal_, fan_out, relu
        w = std * jax.random.normal(k, (3, 3, c_in, v), jnp.float32)
        b = jnp.zeros((1, v), jnp.float32)             # nn.init.constant_(bias, 0)
        params.append((w, b))
        c_in = v
    return params


# ----------------------------------------------------------------------------
# VGG_features.forward
# ----------------------------------------------------------------------------
def vgg_features_forward(x_nchw, cfg_list, params, *, compute_dtype=jnp.bfloat16,
                         fuse_pool=True, max_row_tile=None):
    """Forward pass.  Input/output PyTorch NCHW; kernels run in NHWC.
    When the next cfg entry is 'M', the maxpool is fused into the conv epilogue."""
    x = jnp.transpose(x_nchw, (0, 2, 3, 1)).astype(compute_dtype)
    pi = 0
    i = 0
    while i < len(cfg_list):
        v = cfg_list[i]
        if v == "M":
            x = maxpool2x2(x)
            i += 1
            continue
        w, b = params[pi]
        pi += 1
        do_fuse = (fuse_pool and i + 1 < len(cfg_list) and cfg_list[i + 1] == "M"
                   and x.shape[1] % 2 == 0 and x.shape[2] % 2 == 0)
        if x.shape[-1] < 8:                            # RGB-like first layer
            x = conv3x3_relu_small_cin(x, w, b, fuse_pool=do_fuse,
                                       compute_dtype=compute_dtype,
                                       max_row_tile=max_row_tile)
        else:
            x = conv3x3_relu(x, w, b, fuse_pool=do_fuse, compute_dtype=compute_dtype,
                             max_row_tile=max_row_tile)
        i += 2 if do_fuse else 1
    return jnp.transpose(x, (0, 3, 1, 2)).astype(x_nchw.dtype)


# ----------------------------------------------------------------------------
# Pure-JAX references (for correctness checks only)
# ----------------------------------------------------------------------------
def vgg_features_reference(x_nchw, cfg_list, params):
    x = x_nchw
    pi = 0
    for v in cfg_list:
        if v == "M":
            x = jax.lax.reduce_window(
                x, -jnp.inf, jax.lax.max, (1, 1, 2, 2), (1, 1, 2, 2), "VALID")
        else:
            w, b = params[pi]
            pi += 1
            x = jax.lax.conv_general_dilated(
                x, w, (1, 1), ((1, 1), (1, 1)),
                dimension_numbers=("NCHW", "HWIO", "NCHW"))
            x = jnp.maximum(x + b.reshape(1, -1, 1, 1), 0.0)
    return x


def _conv_ref_nhwc(x, w, b, pool):
    y = jax.lax.conv_general_dilated(
        x, w, (1, 1), ((1, 1), (1, 1)),
        dimension_numbers=("NHWC", "HWIO", "NHWC"))
    y = jnp.maximum(y + b.reshape(1, 1, 1, -1), 0.0)
    if pool:
        y = jax.lax.reduce_window(
            y, -jnp.inf, jax.lax.max, (1, 2, 2, 1), (1, 2, 2, 1), "VALID")
    return y


# Standard VGG configurations (as in the PyTorch module).
cfg = {
    "A": [64, "M", 128, "M", 256, 256, "M", 512, 512, "M", 512, 512, "M"],
    "B": [64, 64, "M", 128, 128, "M", 256, 256, "M", 512, 512, "M", 512, 512, "M"],
    "D": [64, 64, "M", 128, 128, "M", 256, 256, 256, "M", 512, 512, 512, "M",
          512, 512, 512, "M"],
    "E": [64, 64, "M", 128, 128, "M", 256, 256, 256, 256, "M", 512, 512, 512, 512,
          "M", 512, 512, 512, 512, "M"],
}


if __name__ == "__main__":
    key = jax.random.PRNGKey(0)
    # Small VGG-style config for the test (same layer semantics as the module).
    cfg_test = [8, "M", 16, 16, "M"]
    N, Cin, H, W = 2, 3, 16, 16

    k1, k2, k3, k4 = jax.random.split(key, 4)
    x = jax.random.normal(k1, (N, Cin, H, W), jnp.float32)
    params = init_vgg_params(cfg_test, k2, in_channels=Cin)
    # Non-zero biases so the bias path is exercised (module init sets them to 0).
    params = [(w, 0.1 * jax.random.normal(jax.random.fold_in(k3, i), b.shape))
              for i, (w, b) in enumerate(params)]

    ref = jax.block_until_ready(vgg_features_reference(x, cfg_test, params))
    assert ref.shape == (N, 16, H // 4, W // 4)

    # 1) full network, f32 compute, fused conv+maxpool, auto tiling
    #    (whole image per step -> exercises the TN>1 batch-grouped path)
    out = jax.block_until_ready(
        vgg_features_forward(x, cfg_test, params, compute_dtype=jnp.float32))
    assert out.shape == ref.shape, out.shape
    np.testing.assert_allclose(np.asarray(out), np.asarray(ref), rtol=1e-3, atol=1e-3)

    # 2) full network, f32, standalone maxpool + small row tiles
    #    (exercises the double-buffered halo prefetch across row-tile boundaries)
    out2 = jax.block_until_ready(
        vgg_features_forward(x, cfg_test, params, compute_dtype=jnp.float32,
                             fuse_pool=False, max_row_tile=4))
    np.testing.assert_allclose(np.asarray(out2), np.asarray(ref), rtol=1e-3, atol=1e-3)

    # 3) full network, bf16 compute (rated MXU path) with f32 accumulation
    out3 = jax.block_until_ready(
        vgg_features_forward(x, cfg_test, params, compute_dtype=jnp.bfloat16))
    out3f = np.asarray(out3, np.float32)
    assert out3.shape == ref.shape
    assert np.isfinite(out3f).all()
    assert np.max(np.abs(out3f - np.asarray(ref))) < 0.25

    # 4) per-layer check: "tap" contraction mode + fused pool + halo prefetch path
    xs = jax.random.normal(k4, (2, 16, 16, 8), jnp.float32)     # NHWC
    wk, bk = jax.random.split(jax.random.fold_in(k4, 7))
    wl = 0.2 * jax.random.normal(wk, (3, 3, 8, 16), jnp.float32)
    bl = 0.1 * jax.random.normal(bk, (1, 16), jnp.float32)
    got = conv3x3_relu(xs, wl, bl, fuse_pool=True, compute_dtype=jnp.float32,
                       k_mode="tap", max_row_tile=4)
    want = _conv_ref_nhwc(xs, wl, bl, True)
    got = jax.block_until_ready(got)
    np.testing.assert_allclose(np.asarray(got), np.asarray(want),
                               rtol=1e-3, atol=1e-3)

    print("KERNEL_OK")
</pallas_src>

<mosaic_0001>
module attributes {stable_mosaic.version = 11 : i64} {
  func.func @_pointwise_kernel(%arg0: i32, %arg1: i32, %arg2: memref<2x16x16x27xf32, #tpu.memory_space<vmem>>, %arg3: memref<27x8xf32, #tpu.memory_space<vmem>>, %arg4: memref<1x8xf32, #tpu.memory_space<vmem>>, %arg5: memref<2x8x1x64xf32, #tpu.memory_space<vmem>>) attributes {dimension_semantics = [#tpu.dimension_semantics<parallel>, #tpu.dimension_semantics<arbitrary>], iteration_bounds = array<i64: 1, 1>, scalar_prefetch = 0 : i64, scratch_operands = 0 : i64, tpu.core_type = #tpu.core_type<tc>, window_params = [{transform_indices = @transform_0, window_bounds = array<i64: 2, 16, 16, 27>}, {pipeline_mode = #tpu.pipeline_mode<synchronous>, transform_indices = @transform_1, window_bounds = array<i64: 27, 8>}, {pipeline_mode = #tpu.pipeline_mode<synchronous>, transform_indices = @transform_2, window_bounds = array<i64: 1, 8>}, {transform_indices = @transform_3, window_bounds = array<i64: 2, 8, 1, 64>}]} {
    %c0 = arith.constant 0 : index
    %c0_0 = arith.constant 0 : index
    %0 = vector.load %arg4[%c0, %c0_0] : memref<1x8xf32, #tpu.memory_space<vmem>>, vector<1x8xf32>
    %c0_1 = arith.constant 0 : index
    %c0_2 = arith.constant 0 : index
    %c0_3 = arith.constant 0 : index
    %c0_4 = arith.constant 0 : index
    %1 = vector.load %arg2[%c0_1, %c0_2, %c0_3, %c0_4] : memref<2x16x16x27xf32, #tpu.memory_space<vmem>>, vector<1x16x16x27xf32>
    %2 = vector.shape_cast %1 : vector<1x16x16x27xf32> to vector<16x16x27xf32>
    %3 = vector.shape_cast %2 : vector<16x16x27xf32> to vector<256x27xf32>
    %c0_5 = arith.constant 0 : index
    %c0_6 = arith.constant 0 : index
    %4 = vector.load %arg3[%c0_5, %c0_6] : memref<27x8xf32, #tpu.memory_space<vmem>>, vector<27x8xf32>
    %cst = arith.constant dense<0.000000e+00> : vector<256x8xf32>
    %5 = tpu.matmul %3, %4, %cst {dimension_numbers = #tpu.dot_dimension_numbers<[1], [0], [0], [1], [0, 0, 1, 1], [], []>} : vector<256x27xf32>, vector<27x8xf32>, vector<256x8xf32> -> vector<256x8xf32>
    %6 = vector.broadcast %0 : vector<1x8xf32> to vector<256x8xf32>
    %7 = arith.addf %5, %6 : vector<256x8xf32>
    %cst_7 = arith.constant 0.000000e+00 : f32
    %8 = vector.broadcast %cst_7 : f32 to vector<256x8xf32>
    %9 = arith.maximumf %7, %8 : vector<256x8xf32>
    %10 = vector.shape_cast %9 : vector<256x8xf32> to vector<16x16x8xf32>
    %11 = vector.shape_cast %10 : vector<16x16x8xf32> to vector<8x2x16x8xf32>
    %12 = vector.extract_strided_slice %11 {offsets = [0, 0, 0, 0], sizes = [8, 1, 16, 8], strides = [1, 1, 1, 1]} : vector<8x2x16x8xf32> to vector<8x1x16x8xf32>
    %13 = vector.shape_cast %12 : vector<8x1x16x8xf32> to vector<8x16x8xf32>
    %14 = vector.extract_strided_slice %11 {offsets = [0, 1, 0, 0], sizes = [8, 1, 16, 8], strides = [1, 1, 1, 1]} : vector<8x2x16x8xf32> to vector<8x1x16x8xf32>
    %15 = vector.shape_cast %14 : vector<8x1x16x8xf32> to vector<8x16x8xf32>
    %16 = arith.maximumf %13, %15 : vector<8x16x8xf32>
    %17 = vector.shape_cast %16 : vector<8x16x8xf32> to vector<8x8x2x8xf32>
    %cst_8 = arith.constant dense<0xFF800000> : vector<8x8x8xf32>
    %18 = vector.multi_reduction <maximumf>, %17, %cst_8 [2] : vector<8x8x2x8xf32> to vector<8x8x8xf32>
    %19 = vector.shape_cast %18 : vector<8x8x8xf32> to vector<8x1x64xf32>
    %c0_9 = arith.constant 0 : index
    %c0_10 = arith.constant 0 : index
    %c0_11 = arith.constant 0 : index
    %c0_12 = arith.constant 0 : index
    %20 = vector.load %arg5[%c0_9, %c0_10, %c0_11, %c0_12] : memref<2x8x1x64xf32, #tpu.memory_space<vmem>>, vector<1x8x1x64xf32>
    %21 = vector.shape_cast %20 : vector<1x8x1x64xf32> to vector<8x1x64xf32>
    %22 = vector.shape_cast %19 : vector<8x1x64xf32> to vector<1x8x1x64xf32>
    tpu.vector_store %arg5[%c0_9, %c0_10, %c0_11, %c0_12], %22 {strides = array<i32>} : memref<2x8x1x64xf32, #tpu.memory_space<vmem>>, vector<1x8x1x64xf32>,
    %c1 = arith.constant 1 : index
    %c0_13 = arith.constant 0 : index
    %c0_14 = arith.constant 0 : index
    %c0_15 = arith.constant 0 : index
    %23 = vector.load %arg2[%c1, %c0_13, %c0_14, %c0_15] : memref<2x16x16x27xf32, #tpu.memory_space<vmem>>, vector<1x16x16x27xf32>
    %24 = vector.shape_cast %23 : vector<1x16x16x27xf32> to vector<16x16x27xf32>
    %25 = vector.shape_cast %24 : vector<16x16x27xf32> to vector<256x27xf32>
    %c0_16 = arith.constant 0 : index
    %c0_17 = arith.constant 0 : index
    %26 = vector.load %arg3[%c0_16, %c0_17] : memref<27x8xf32, #tpu.memory_space<vmem>>, vector<27x8xf32>
    %cst_18 = arith.constant dense<0.000000e+00> : vector<256x8xf32>
    %27 = tpu.matmul %25, %26, %cst_18 {dimension_numbers = #tpu.dot_dimension_numbers<[1], [0], [0], [1], [0, 0, 1, 1], [], []>} : vector<256x27xf32>, vector<27x8xf32>, vector<256x8xf32> -> vector<256x8xf32>
    %28 = vector.broadcast %0 : vector<1x8xf32> to vector<256x8xf32>
    %29 = arith.addf %27, %28 : vector<256x8xf32>
    %cst_19 = arith.constant 0.000000e+00 : f32
    %30 = vector.broadcast %cst_19 : f32 to vector<256x8xf32>
    %31 = arith.maximumf %29, %30 : vector<256x8xf32>
    %32 = vector.shape_cast %31 : vector<256x8xf32> to vector<16x16x8xf32>
    %33 = vector.shape_cast %32 : vector<16x16x8xf32> to vector<8x2x16x8xf32>
    %34 = vector.extract_strided_slice %33 {offsets = [0, 0, 0, 0], sizes = [8, 1, 16, 8], strides = [1, 1, 1, 1]} : vector<8x2x16x8xf32> to vector<8x1x16x8xf32>
    %35 = vector.shape_cast %34 : vector<8x1x16x8xf32> to vector<8x16x8xf32>
    %36 = vector.extract_strided_slice %33 {offsets = [0, 1, 0, 0], sizes = [8, 1, 16, 8], strides = [1, 1, 1, 1]} : vector<8x2x16x8xf32> to vector<8x1x16x8xf32>
    %37 = vector.shape_cast %36 : vector<8x1x16x8xf32> to vector<8x16x8xf32>
    %38 = arith.maximumf %35, %37 : vector<8x16x8xf32>
    %39 = vector.shape_cast %38 : vector<8x16x8xf32> to vector<8x8x2x8xf32>
    %cst_20 = arith.constant dense<0xFF800000> : vector<8x8x8xf32>
    %40 = vector.multi_reduction <maximumf>, %39, %cst_20 [2] : vector<8x8x2x8xf32> to vector<8x8x8xf32>
    %41 = vector.shape_cast %40 : vector<8x8x8xf32> to vector<8x1x64xf32>
    %c1_21 = arith.constant 1 : index
    %c0_22 = arith.constant 0 : index
    %c0_23 = arith.constant 0 : index
    %c0_24 = arith.constant 0 : index
    %42 = vector.load %arg5[%c1_21, %c0_22, %c0_23, %c0_24] : memref<2x8x1x64xf32, #tpu.memory_space<vmem>>, vector<1x8x1x64xf32>
    %43 = vector.shape_cast %42 : vector<1x8x1x64xf32> to vector<8x1x64xf32>
    %44 = vector.shape_cast %41 : vector<8x1x64xf32> to vector<1x8x1x64xf32>
    tpu.vector_store %arg5[%c1_21, %c0_22, %c0_23, %c0_24], %44 {strides = array<i32>} : memref<2x8x1x64xf32, #tpu.memory_space<vmem>>, vector<1x8x1x64xf32>,
    return
  }
  func.func @transform_0(%arg0: i32, %arg1: i32) -> (i32, i32, i32, i32) {
    %c0_i32 = arith.constant 0 : i32
    %c0_i32_0 = arith.constant 0 : i32
    %c0_i32_1 = arith.constant 0 : i32
    return %arg0, %arg1, %c0_i32, %c0_i32_0 : i32, i32, i32, i32
  }
  func.func @transform_1(%arg0: i32, %arg1: i32) -> (i32, i32) {
    %c0_i32 = arith.constant 0 : i32
    %c0_i32_0 = arith.constant 0 : i32
    %c0_i32_1 = arith.constant 0 : i32
    return %c0_i32, %c0_i32_0 : i32, i32
  }
  func.func @transform_2(%arg0: i32, %arg1: i32) -> (i32, i32) {
    %c0_i32 = arith.constant 0 : i32
    %c0_i32_0 = arith.constant 0 : i32
    %c0_i32_1 = arith.constant 0 : i32
    return %c0_i32, %c0_i32_0 : i32, i32
  }
  func.func @transform_3(%arg0: i32, %arg1: i32) -> (i32, i32, i32, i32) {
    %c0_i32 = arith.constant 0 : i32
    %c0_i32_0 = arith.constant 0 : i32
    %c0_i32_1 = arith.constant 0 : i32
    return %arg0, %arg1, %c0_i32, %c0_i32_0 : i32, i32, i32, i32
  }
}

</mosaic_0001>

<llo_original>
// kernel: tpu_custom_call.1
$region0: #{tpu_custom_call.1}
  #allocation0 [shape = 'u32[]', space=smem, size = 0x4, offset = 0x4, fixed_abs, tag = 'smem constant byte address 0x4 - core index']
  #allocation1 [shape = 'u32[144,128]{1,0:T(1,128)}', space=vmem, size = 0x12000, scoped, tag = 'internal scratch']
  %s0 = inlined_call_operand.hbm [shape: f32[2,16,16,27], index: 0, kind: input, shape index: {}]
  %s1 = inlined_call_operand.vmem [shape: f32[27,8], index: 1, kind: input, shape index: {}]
  %s2 = inlined_call_operand.vmem [shape: f32[1,8], index: 2, kind: input, shape index: {}]
  %s3 = inlined_call_operand.hbm [shape: f32[2,8,1,64], index: 3, kind: output, shape index: {}]
  %s4 = sld [smem:[#allocation0]]
  $region26: #{tpu_custom_call.1} parent=0
    _
  %s6 = ssub.s32 1, %s4
  %s7 = scalar_select 0, %s6, %s4
  $region1: #{tpu_custom_call.1} parent=0
    #allocation2 [shape = 'u8[262144]{0}', space=vmem, size = 0x40000, scoped, tag = 'input window, operand 0, single buffered']
    #allocation3 [shape = 's32[1]{0}', space=sflag, size = 0x4, scoped, tag = 'scoped memory for tpu_custom_call.1']
    #allocation4 [shape = 's32[1]{0}', space=sflag, size = 0x4, scoped, tag = 'scoped memory for tpu_custom_call.1']
    #allocation5 [shape = 'u8[8192]{0}', space=vmem, size = 0x2000, scoped, tag = 'output window, operand 0, single buffered']
    %8 = vsyncpa [#allocation3], 0
    %9 = vsyncpa [#allocation4], 0
    // Predicated region
    $region2: #{tpu_custom_call.1} parent=1 // pred_check
      _
    $region3: #{tpu_custom_call.1} parent=1 // pred_check_branch
      %11 = sbr.rel (0) target = $region5
    $region4: #{tpu_custom_call.1} parent=1 // pred_region
      %s13 = ssub.s32 8192, 8192
      %14 = vsyncadd [#allocation3], %s13
      %s15 = sshll.u32 [#allocation2], 4
      %s16 = int_to_ptr.vmem [resolvable:$true] %s15
      %21 = dma.hbm_to_vmem [thread:$0]  %s0, 8192, %s16, [#allocation3], 128, 128, 8
    $region5: #{tpu_custom_call.1} parent=1 // pred_fallthru
      _
    // Predicated region
    $region6: #{tpu_custom_call.1} parent=1 // pred_check
      _
    $region7: #{tpu_custom_call.1} parent=1 // pred_check_branch
      %23 = sbr.rel (0) target = $region9
    $region8: #{tpu_custom_call.1} parent=1 // pred_region
      _
    $region9: #{tpu_custom_call.1} parent=1 // pred_fallthru
      _
    // Predicated region
    $region10: #{tpu_custom_call.1} parent=1 // pred_check
      _
    $region11: #{tpu_custom_call.1} parent=1 // pred_check_branch
      %25 = sbr.rel (0) target = $region13
    $region12: #{tpu_custom_call.1} parent=1 // pred_region
      _
    $region13: #{tpu_custom_call.1} parent=1 // pred_fallthru
      _
    // Predicated region
    $region14: #{tpu_custom_call.1} parent=1 // pred_check
      _
    $region15: #{tpu_custom_call.1} parent=1 // pred_check_branch
      %27 = sbr.rel (0) target = $region17
    $region16: #{tpu_custom_call.1} parent=1 // pred_region
      %28 = dma.done [#allocation3], 8192
    $region17: #{tpu_custom_call.1} parent=1 // pred_fallthru
      _
    %v29 = vld [vmem:[%s2] sm:$0x1]
    %v30 = vld [vmem:[#allocation2] sm:$0xff]
    %v31 = vld [vmem:[#allocation2 + $0x8] sm:$0xff]
    %v32 = vld [vmem:[#allocation2 + $0x10] sm:$0xff]
    %v33 = vld [vmem:[#allocation2 + $0x18] sm:$0xff]
    %v34 = vld [vmem:[#allocation2 + $0x20] sm:$0xff]
    %v35 = vld [vmem:[#allocation2 + $0x28] sm:$0xff]
    %v36 = vld [vmem:[#allocation2 + $0x30] sm:$0xff]
    %v37 = vld [vmem:[#allocation2 + $0x38] sm:$0xff]
    %v38 = vld [vmem:[#allocation2 + $0x40] sm:$0xff]
    %v39 = vld [vmem:[#allocation2 + $0x48] sm:$0xff]
    %v40 = vld [vmem:[#allocation2 + $0x50] sm:$0xff]
    %v41 = vld [vmem:[#allocation2 + $0x58] sm:$0xff]
    %v42 = vld [vmem:[#allocation2 + $0x60] sm:$0xff]
    %v43 = vld [vmem:[#allocation2 + $0x68] sm:$0xff]
    %v44 = vld [vmem:[#allocation2 + $0x70] sm:$0xff]
    %v45 = vld [vmem:[#allocation2 + $0x78] sm:$0xff]
    %v46 = vld [vmem:[#allocation2 + $0x80] sm:$0xff]
    %v47 = vld [vmem:[#allocation2 + $0x88] sm:$0xff]
    %v48 = vld [vmem:[#allocation2 + $0x90] sm:$0xff]
    %v49 = vld [vmem:[#allocation2 + $0x98] sm:$0xff]
    %v50 = vld [vmem:[#allocation2 + $0xa0] sm:$0xff]
    %v51 = vld [vmem:[#allocation2 + $0xa8] sm:$0xff]
    %v52 = vld [vmem:[#allocation2 + $0xb0] sm:$0xff]
    %v53 = vld [vmem:[#allocation2 + $0xb8] sm:$0xff]
    %v54 = vld [vmem:[#allocation2 + $0xc0] sm:$0xff]
    %v55 = vld [vmem:[#allocation2 + $0xc8] sm:$0xff]
    %v56 = vld [vmem:[#allocation2 + $0xd0] sm:$0xff]
    %v57 = vld [vmem:[#allocation2 + $0xd8] sm:$0xff]
    %v58 = vld [vmem:[#allocation2 + $0xe0] sm:$0xff]
    %v59 = vld [vmem:[#allocation2 + $0xe8] sm:$0xff]
    %v60 = vld [vmem:[#allocation2 + $0xf0] sm:$0xff]
    %v61 = vld [vmem:[#allocation2 + $0xf8] sm:$0xff]
    %v62 = vld [vmem:[%s1] sm:$0xff]
    %v63 = vld [vmem:[%s1 + $0x8] sm:$0xff]
    %v64 = vld [vmem:[%s1 + $0x10] sm:$0xff]
    %v65 = vld [vmem:[%s1 + $0x18] sm:$0x7]
    %v67 = vlaneseq
    %v68 = vshrl.u32 %v67, 7
    %v69 = vsub.s32 0, %v68
    %v70 = vrot.slane %v29, %v69
    %vm72 = vcmask 220160
    %v74 = vsel %vm72, %v30, 0
    %v77 = vsel %vm72, %v31, 0
    %v80 = vsel %vm72, %v32, 0
    %v83 = vsel %vm72, %v33, 0
    %v86 = vsel %vm72, %v34, 0
    %v89 = vsel %vm72, %v35, 0
    %v92 = vsel %vm72, %v36, 0
    %v95 = vsel %vm72, %v37, 0
    %v98 = vsel %vm72, %v38, 0
    %v101 = vsel %vm72, %v39, 0
    %v104 = vsel %vm72, %v40, 0
    %v107 = vsel %vm72, %v41, 0
    %v110 = vsel %vm72, %v42, 0
    %v113 = vsel %vm72, %v43, 0
    %v116 = vsel %vm72, %v44, 0
    %v119 = vsel %vm72, %v45, 0
    %v122 = vsel %vm72, %v46, 0
    %v125 = vsel %vm72, %v47, 0
    %v128 = vsel %vm72, %v48, 0
    %v131 = vsel %vm72, %v49, 0
    %v134 = vsel %vm72, %v50, 0
    %v137 = vsel %vm72, %v51, 0
    %v140 = vsel %vm72, %v52, 0
    %v143 = vsel %vm72, %v53, 0
    %v146 = vsel %vm72, %v54, 0
    %v149 = vsel %vm72, %v55, 0
    %v152 = vsel %vm72, %v56, 0
    %v155 = vsel %vm72, %v57, 0
    %v158 = vsel %vm72, %v58, 0
    %v161 = vsel %vm72, %v59, 0
    %v164 = vsel %vm72, %v60, 0
    %v167 = vsel %vm72, %v61, 0
    %vm169 = vcmask 1042432
    %v171 = vsel %vm169, %v65, 0
    %173 = vmatprep.subr.mxu0 0.0
    %174 = vmatpush1.msra.mxu0 %v62
    %175 = vmatprep.subr.mxu0 0.0
    %176 = vmatpush1.msra.mxu0 %v63
    %177 = vmatprep.subr.mxu0 0.0
    %178 = vmatpush1.msra.mxu0 %v64
    %179 = vmatprep.subr.mxu0 0.0
    %180 = vmatpush1.msra.mxu0 %v171
    %181 = vmatprep.subr.mxu0 0.0
    %182 = vmatpush1.msra.mxu0 0.0
    %183 = vmatprep.subr.mxu0 0.0
    %184 = vmatpush1.msra.mxu0 0.0
    %185 = vmatprep.subr.mxu0 0.0
    %186 = vmatpush1.msra.mxu0 0.0
    %187 = vmatprep.subr.mxu0 0.0
    %188 = vmatpush1.msra.mxu0 0.0
    %189 = vmatprep.subr.mxu0 0.0
    %190 = vmatpush1.msra.mxu0 0.0
    %191 = vmatprep.subr.mxu0 0.0
    %192 = vmatpush1.msra.mxu0 0.0
    %193 = vmatprep.subr.mxu0 0.0
    %194 = vmatpush1.msra.mxu0 0.0
    %195 = vmatprep.subr.mxu0 0.0
    %196 = vmatpush1.msra.mxu0 0.0
    %197 = vmatprep.subr.mxu0 0.0
    %198 = vmatpush1.msra.mxu0 0.0
    %199 = vmatprep.subr.mxu0 0.0
    %200 = vmatpush1.msra.mxu0 0.0
    %201 = vmatprep.subr.mxu0 0.0
    %202 = vmatpush1.msra.mxu0 0.0
    %203 = vmatprep.subr.mxu0 0.0
    %204 = vmatpush1.msra.mxu0 0.0
    %205 = vmatprep.subr.mxu0 0.0
    %206 = vmatpush1.msra.mxu0 0.0
    %207 = vmatprep.subr.mxu0 0.0
    %208 = vmatpush1.msra.mxu0 0.0
    %209 = vmatprep.subr.mxu0 0.0
    %210 = vmatpush1.msra.mxu0 0.0
    %211 = vmatprep.subr.mxu0 0.0
    %212 = vmatpush1.msra.mxu0 0.0
    %213 = vmatprep.subr.mxu0 0.0
    %214 = vmatpush1.msra.mxu0 0.0
    %215 = vmatprep.subr.mxu0 0.0
    %216 = vmatpush1.msra.mxu0 0.0
    %217 = vmatprep.subr.mxu0 0.0
    %218 = vmatpush1.msra.mxu0 0.0
    %219 = vmatprep.subr.mxu0 0.0
    %220 = vmatpush1.msra.mxu0 0.0
    %221 = vmatprep.subr.mxu0 0.0
    %222 = vmatpush1.msra.mxu0 0.0
    %223 = vmatprep.subr.mxu0 0.0
    %224 = vmatpush1.msra.mxu0 0.0
    %225 = vmatprep.subr.mxu0 0.0
    %226 = vmatpush1.msra.mxu0 0.0
    %227 = vmatprep.subr.mxu0 0.0
    %228 = vmatpush1.msra.mxu0 0.0
    %229 = vmatprep.subr.mxu0 0.0
    %230 = vmatpush1.msra.mxu0 0.0
    %231 = vmatprep.subr.mxu0 0.0
    %232 = vmatpush1.msra.mxu0 0.0
    %233 = vmatprep.subr.mxu0 0.0
    %234 = vmatpush1.msra.mxu0 0.0
    %235 = vmatprep.subr.mxu0 0.0
    %236 = vmatpush1.msra.mxu0 0.0
    %237 = vmatprep.mubr.f32.mxu0 0.0
    %238 = vmatmul.mubr.f32.gmra.mrb[0].mxu0 %v74
    %v239 = vpop.f32.mrb[0].mxu0
    %v240 = vadd.f32 %v70, %v239
    %v241 = vpop.f32.mrb[0].mxu0
    %242 = vmatprep.mubr.f32.mxu0 0.0
    %243 = vmatmul.mubr.f32.gmra.mrb[0].mxu0 %v77
    %v244 = vpop.f32.mrb[0].mxu0
    %v245 = vadd.f32 %v70, %v244
    %v246 = vpop.f32.mrb[0].mxu0
    %247 = vmatprep.mubr.f32.mxu0 0.0
    %248 = vmatmul.mubr.f32.gmra.mrb[0].mxu0 %v80
    %v249 = vpop.f32.mrb[0].mxu0
    %v250 = vadd.f32 %v70, %v249
    %v251 = vpop.f32.mrb[0].mxu0
    %252 = vmatprep.mubr.f32.mxu0 0.0
    %253 = vmatmul.mubr.f32.gmra.mrb[0].mxu0 %v83
    %v254 = vpop.f32.mrb[0].mxu0
    %v255 = vadd.f32 %v70, %v254
    %v256 = vpop.f32.mrb[0].mxu0
    %257 = vmatprep.mubr.f32.mxu0 0.0
    %258 = vmatmul.mubr.f32.gmra.mrb[0].mxu0 %v86
    %v259 = vpop.f32.mrb[0].mxu0
    %v260 = vadd.f32 %v70, %v259
    %v261 = vpop.f32.mrb[0].mxu0
    %262 = vmatprep.mubr.f32.mxu0 0.0
    %263 = vmatmul.mubr.f32.gmra.mrb[0].mxu0 %v89
    %v264 = vpop.f32.mrb[0].mxu0
    %v265 = vadd.f32 %v70, %v264
    %v266 = vpop.f32.mrb[0].mxu0
    %267 = vmatprep.mubr.f32.mxu0 0.0
    %268 = vmatmul.mubr.f32.gmra.mrb[0].mxu0 %v92
    %v269 = vpop.f32.mrb[0].mxu0
    %v270 = vadd.f32 %v70, %v269
    %v271 = vpop.f32.mrb[0].mxu0
    %272 = vmatprep.mubr.f32.mxu0 0.0
    %273 = vmatmul.mubr.f32.gmra.mrb[0].mxu0 %v95
    %v274 = vpop.f32.mrb[0].mxu0
    %v275 = vadd.f32 %v70, %v274
    %v276 = vpop.f32.mrb[0].mxu0
    %277 = vmatprep.mubr.f32.mxu0 0.0
    %278 = vmatmul.mubr.f32.gmra.mrb[0].mxu0 %v98
    %v279 = vpop.f32.mrb[0].mxu0
    %v280 = vadd.f32 %v70, %v279
    %v281 = vpop.f32.mrb[0].mxu0
    %282 = vmatprep.mubr.f32.mxu0 0.0
    %283 = vmatmul.mubr.f32.gmra.mrb[0].mxu0 %v101
    %v284 = vpop.f32.mrb[0].mxu0
    %v285 = vadd.f32 %v70, %v284
    %v286 = vpop.f32.mrb[0].mxu0
    %287 = vmatprep.mubr.f32.mxu0 0.0
    %288 = vmatmul.mubr.f32.gmra.mrb[0].mxu0 %v104
    %v289 = vpop.f32.mrb[0].mxu0
    %v290 = vadd.f32 %v70, %v289
    %v291 = vpop.f32.mrb[0].mxu0
    %292 = vmatprep.mubr.f32.mxu0 0.0
    %293 = vmatmul.mubr.f32.gmra.mrb[0].mxu0 %v107
    %v294 = vpop.f32.mrb[0].mxu0
    %v295 = vadd.f32 %v70, %v294
    %v296 = vpop.f32.mrb[0].mxu0
    %297 = vmatprep.mubr.f32.mxu0 0.0
    %298 = vmatmul.mubr.f32.gmra.mrb[0].mxu0 %v110
    %v299 = vpop.f32.mrb[0].mxu0
    %v300 = vadd.f32 %v70, %v299
    %v301 = vpop.f32.mrb[0].mxu0
    %302 = vmatprep.mubr.f32.mxu0 0.0
    %303 = vmatmul.mubr.f32.gmra.mrb[0].mxu0 %v113
    %v304 = vpop.f32.mrb[0].mxu0
    %v305 = vadd.f32 %v70, %v304
    %v306 = vpop.f32.mrb[0].mxu0
    %307 = vmatprep.mubr.f32.mxu0 0.0
    %308 = vmatmul.mubr.f32.gmra.mrb[0].mxu0 %v116
    %v309 = vpop.f32.mrb[0].mxu0
    %v310 = vadd.f32 %v70, %v309
    %v311 = vpop.f32.mrb[0].mxu0
    %312 = vmatprep.mubr.f32.mxu0 0.0
    %313 = vmatmul.mubr.f32.gmra.mrb[0].mxu0 %v119
    %v314 = vpop.f32.mrb[0].mxu0
    %v315 = vadd.f32 %v70, %v314
    %v316 = vpop.f32.mrb[0].mxu0
    %317 = vmatprep.mubr.f32.mxu0 0.0
    %318 = vmatmul.mubr.f32.gmra.mrb[0].mxu0 %v122
    %v319 = vpop.f32.mrb[0].mxu0
    %v320 = vadd.f32 %v70, %v319
    %v321 = vpop.f32.mrb[0].mxu0
    %322 = vmatprep.mubr.f32.mxu0 0.0
    %323 = vmatmul.mubr.f32.gmra.mrb[0].mxu0 %v125
    %v324 = vpop.f32.mrb[0].mxu0
    %v325 = vadd.f32 %v70, %v324
    %v326 = vpop.f32.mrb[0].mxu0
    %327 = vmatprep.mubr.f32.mxu0 0.0
    %328 = vmatmul.mubr.f32.gmra.mrb[0].mxu0 %v128
    %v329 = vpop.f32.mrb[0].mxu0
    %v330 = vadd.f32 %v70, %v329
    %v331 = vpop.f32.mrb[0].mxu0
    %332 = vmatprep.mubr.f32.mxu0 0.0
    %333 = vmatmul.mubr.f32.gmra.mrb[0].mxu0 %v131
    %v334 = vpop.f32.mrb[0].mxu0
    %v335 = vadd.f32 %v70, %v334
    %v336 = vpop.f32.mrb[0].mxu0
    %337 = vmatprep.mubr.f32.mxu0 0.0
    %338 = vmatmul.mubr.f32.gmra.mrb[0].mxu0 %v134
    %v339 = vpop.f32.mrb[0].mxu0
    %v340 = vadd.f32 %v70, %v339
    %v341 = vpop.f32.mrb[0].mxu0
    %342 = vmatprep.mubr.f32.mxu0 0.0
    %343 = vmatmul.mubr.f32.gmra.mrb[0].mxu0 %v137
    %v344 = vpop.f32.mrb[0].mxu0
    %v345 = vadd.f32 %v70, %v344
    %v346 = vpop.f32.mrb[0].mxu0
    %347 = vmatprep.mubr.f32.mxu0 0.0
    %348 = vmatmul.mubr.f32.gmra.mrb[0].mxu0 %v140
    %v349 = vpop.f32.mrb[0].mxu0
    %v350 = vadd.f32 %v70, %v349
    %v351 = vpop.f32.mrb[0].mxu0
    %352 = vmatprep.mubr.f32.mxu0 0.0
    %353 = vmatmul.mubr.f32.gmra.mrb[0].mxu0 %v143
    %v354 = vpop.f32.mrb[0].mxu0
    %v355 = vadd.f32 %v70, %v354
    %v356 = vpop.f32.mrb[0].mxu0
    %357 = vmatprep.mubr.f32.mxu0 0.0
    %358 = vmatmul.mubr.f32.gmra.mrb[0].mxu0 %v146
    %v359 = vpop.f32.mrb[0].mxu0
    %v360 = vadd.f32 %v70, %v359
    %v361 = vpop.f32.mrb[0].mxu0
    %362 = vmatprep.mubr.f32.mxu0 0.0
    %363 = vmatmul.mubr.f32.gmra.mrb[0].mxu0 %v149
    %v364 = vpop.f32.mrb[0].mxu0
    %v365 = vadd.f32 %v70, %v364
    %v366 = vpop.f32.mrb[0].mxu0
    %367 = vmatprep.mubr.f32.mxu0 0.0
    %368 = vmatmul.mubr.f32.gmra.mrb[0].mxu0 %v152
    %v369 = vpop.f32.mrb[0].mxu0
    %v370 = vadd.f32 %v70, %v369
    %v371 = vpop.f32.mrb[0].mxu0
    %372 = vmatprep.mubr.f32.mxu0 0.0
    %373 = vmatmul.mubr.f32.gmra.mrb[0].mxu0 %v155
    %v374 = vpop.f32.mrb[0].mxu0
    %v375 = vadd.f32 %v70, %v374
    %v376 = vpop.f32.mrb[0].mxu0
    %377 = vmatprep.mubr.f32.mxu0 0.0
    %378 = vmatmul.mubr.f32.gmra.mrb[0].mxu0 %v158
    %v379 = vpop.f32.mrb[0].mxu0
    %v380 = vadd.f32 %v70, %v379
    %v381 = vpop.f32.mrb[0].mxu0
    %382 = vmatprep.mubr.f32.mxu0 0.0
    %383 = vmatmul.mubr.f32.gmra.mrb[0].mxu0 %v161
    %v384 = vpop.f32.mrb[0].mxu0
    %v385 = vadd.f32 %v70, %v384
    %v386 = vpop.f32.mrb[0].mxu0
    %387 = vmatprep.mubr.f32.mxu0 0.0
    %388 = vmatmul.mubr.f32.gmra.mrb[0].mxu0 %v164
    %v389 = vpop.f32.mrb[0].mxu0
    %v390 = vadd.f32 %v70, %v389
    %v391 = vpop.f32.mrb[0].mxu0
    %392 = vmatprep.mubr.f32.mxu0 0.0
    %393 = vmatmul.mubr.f32.gmra.mrb[0].mxu0 %v167
    %v394 = vpop.f32.mrb[0].mxu0
    %v395 = vadd.f32 %v70, %v394
    %v396 = vpop.f32.mrb[0].mxu0
    %397 = vdwg.mxu0
    %v398 = vmax.f32 %v240, 0.0
    %v399 = vmax.f32 %v245, 0.0
    %v400 = vmax.f32 %v250, 0.0
    %v401 = vmax.f32 %v255, 0.0
    %v402 = vmax.f32 %v260, 0.0
    %v403 = vmax.f32 %v265, 0.0
    %v404 = vmax.f32 %v270, 0.0
    %v405 = vmax.f32 %v275, 0.0
    %v406 = vmax.f32 %v280, 0.0
    %v407 = vmax.f32 %v285, 0.0
    %v408 = vmax.f32 %v290, 0.0
    %v409 = vmax.f32 %v295, 0.0
    %v410 = vmax.f32 %v300, 0.0
    %v411 = vmax.f32 %v305, 0.0
    %v412 = vmax.f32 %v310, 0.0
    %v413 = vmax.f32 %v315, 0.0
    %v414 = vmax.f32 %v320, 0.0
    %v415 = vmax.f32 %v325, 0.0
    %v416 = vmax.f32 %v330, 0.0
    %v417 = vmax.f32 %v335, 0.0
    %v418 = vmax.f32 %v340, 0.0
    %v419 = vmax.f32 %v345, 0.0
    %v420 = vmax.f32 %v350, 0.0
    %v421 = vmax.f32 %v355, 0.0
    %v422 = vmax.f32 %v360, 0.0
    %v423 = vmax.f32 %v365, 0.0
    %v424 = vmax.f32 %v370, 0.0
    %v425 = vmax.f32 %v375, 0.0
    %v426 = vmax.f32 %v380, 0.0
    %v427 = vmax.f32 %v385, 0.0
    %v428 = vmax.f32 %v390, 0.0
    %v429 = vmax.f32 %v395, 0.0
    %v430 = vmax.f32 %v398, %v400
    %v431 = vmax.f32 %v399, %v401
    %v432 = vmax.f32 %v402, %v404
    %v433 = vmax.f32 %v403, %v405
    %v434 = vmax.f32 %v406, %v408
    %v435 = vmax.f32 %v407, %v409
    %v436 = vmax.f32 %v410, %v412
    %v437 = vmax.f32 %v411, %v413
    %v438 = vmax.f32 %v414, %v416
    %v439 = vmax.f32 %v415, %v417
    %v440 = vmax.f32 %v418, %v420
    %v441 = vmax.f32 %v419, %v421
    %v442 = vmax.f32 %v422, %v424
    %v443 = vmax.f32 %v423, %v425
    %v444 = vmax.f32 %v426, %v428
    %v445 = vmax.f32 %v427, %v429
    %v462 = vcombine.high %v430, %v430
    %v464 = vunpack.c.l.s4 1983009808
    %v465 = vunpack.c.0.s8 %v464
    %v466 = vlaneseq
    %v467 = vshrl.u32 %v466, 7
    %v468 = vsub.s32 %v465, %v467
    %v469 = vrot.slane %v430, %v468
    %v471 = vunpack.c.l.s4 1983009808
    %v472 = vunpack.c.0.s8 %v471
    %v473 = vlaneseq
    %v474 = vshrl.u32 %v473, 7
    %v475 = vsub.s32 %v472, %v474
    %v476 = vrot.slane %v462, %v475
    %v477 = vcombine.high %v469, %v469
    %v478 = vcombine.high %v476, %v476
    %v479 = vcombine.high %v431, %v431
    %v481 = vunpack.c.l.s4 1983009808
    %v482 = vunpack.c.0.s8 %v481
    %v483 = vlaneseq
    %v484 = vshrl.u32 %v483, 7
    %v485 = vsub.s32 %v482, %v484
    %v486 = vrot.slane %v431, %v485
    %v488 = vunpack.c.l.s4 1983009808
    %v489 = vunpack.c.0.s8 %v488
    %v490 = vlaneseq
    %v491 = vshrl.u32 %v490, 7
    %v492 = vsub.s32 %v489, %v491
    %v493 = vrot.slane %v479, %v492
    %v494 = vcombine.high %v486, %v486
    %v495 = vcombine.high %v493, %v493
    %v496 = vcombine.high %v432, %v432
    %v498 = vunpack.c.l.s4 1983009808
    %v499 = vunpack.c.0.s8 %v498
    %v500 = vlaneseq
    %v501 = vshrl.u32 %v500, 7
    %v502 = vsub.s32 %v499, %v501
    %v503 = vrot.slane %v432, %v502
    %v505 = vunpack.c.l.s4 1983009808
    %v506 = vunpack.c.0.s8 %v505
    %v507 = vlaneseq
    %v508 = vshrl.u32 %v507, 7
    %v509 = vsub.s32 %v506, %v508
    %v510 = vrot.slane %v496, %v509
    %v511 = vcombine.high %v503, %v503
    %v512 = vcombine.high %v510, %v510
    %v513 = vcombine.high %v433, %v433
    %v515 = vunpack.c.l.s4 1983009808
    %v516 = vunpack.c.0.s8 %v515
    %v517 = vlaneseq
    %v518 = vshrl.u32 %v517, 7
    %v519 = vsub.s32 %v516, %v518
    %v520 = vrot.slane %v433, %v519
    %v522 = vunpack.c.l.s4 1983009808
    %v523 = vunpack.c.0.s8 %v522
    %v524 = vlaneseq
    %v525 = vshrl.u32 %v524, 7
    %v526 = vsub.s32 %v523, %v525
    %v527 = vrot.slane %v513, %v526
    %v528 = vcombine.high %v520, %v520
    %v529 = vcombine.high %v527, %v527
    %v530 = vcombine.high %v434, %v434
    %v532 = vunpack.c.l.s4 1983009808
    %v533 = vunpack.c.0.s8 %v532
    %v534 = vlaneseq
    %v535 = vshrl.u32 %v534, 7
    %v536 = vsub.s32 %v533, %v535
    %v537 = vrot.slane %v434, %v536
    %v539 = vunpack.c.l.s4 1983009808
    %v540 = vunpack.c.0.s8 %v539
    %v541 = vlaneseq
    %v542 = vshrl.u32 %v541, 7
    %v543 = vsub.s32 %v540, %v542
    %v544 = vrot.slane %v530, %v543
    %v545 = vcombine.high %v537, %v537
    %v546 = vcombine.high %v544, %v544
    %v547 = vcombine.high %v435, %v435
    %v549 = vunpack.c.l.s4 1983009808
    %v550 = vunpack.c.0.s8 %v549
    %v551 = vlaneseq
    %v552 = vshrl.u32 %v551, 7
    %v553 = vsub.s32 %v550, %v552
    %v554 = vrot.slane %v435, %v553
    %v556 = vunpack.c.l.s4 1983009808
    %v557 = vunpack.c.0.s8 %v556
    %v558 = vlaneseq
    %v559 = vshrl.u32 %v558, 7
    %v560 = vsub.s32 %v557, %v559
    %v561 = vrot.slane %v547, %v560
    %v562 = vcombine.high %v554, %v554
    %v563 = vcombine.high %v561, %v561
    %v564 = vcombine.high %v436, %v436
    %v566 = vunpack.c.l.s4 1983009808
    %v567 = vunpack.c.0.s8 %v566
    %v568 = vlaneseq
    %v569 = vshrl.u32 %v568, 7
    %v570 = vsub.s32 %v567, %v569
    %v571 = vrot.slane %v436, %v570
    %v573 = vunpack.c.l.s4 1983009808
    %v574 = vunpack.c.0.s8 %v573
    %v575 = vlaneseq
    %v576 = vshrl.u32 %v575, 7
    %v577 = vsub.s32 %v574, %v576
    %v578 = vrot.slane %v564, %v577
    %v579 = vcombine.high %v571, %v571
    %v580 = vcombine.high %v578, %v578
    %v581 = vcombine.high %v437, %v437
    %v583 = vunpack.c.l.s4 1983009808
    %v584 = vunpack.c.0.s8 %v583
    %v585 = vlaneseq
    %v586 = vshrl.u32 %v585, 7
    %v587 = vsub.s32 %v584, %v586
    %v588 = vrot.slane %v437, %v587
    %v590 = vunpack.c.l.s4 1983009808
    %v591 = vunpack.c.0.s8 %v590
    %v592 = vlaneseq
    %v593 = vshrl.u32 %v592, 7
    %v594 = vsub.s32 %v591, %v593
    %v595 = vrot.slane %v581, %v594
    %v596 = vcombine.high %v588, %v588
    %v597 = vcombine.high %v595, %v595
    %v598 = vcombine.high %v438, %v438
    %v600 = vunpack.c.l.s4 1983009808
    %v601 = vunpack.c.0.s8 %v600
    %v602 = vlaneseq
    %v603 = vshrl.u32 %v602, 7
    %v604 = vsub.s32 %v601, %v603
    %v605 = vrot.slane %v438, %v604
    %v607 = vunpack.c.l.s4 1983009808
    %v608 = vunpack.c.0.s8 %v607
    %v609 = vlaneseq
    %v610 = vshrl.u32 %v609, 7
    %v611 = vsub.s32 %v608, %v610
    %v612 = vrot.slane %v598, %v611
    %v613 = vcombine.high %v605, %v605
    %v614 = vcombine.high %v612, %v612
    %v615 = vcombine.high %v439, %v439
    %v617 = vunpack.c.l.s4 1983009808
    %v618 = vunpack.c.0.s8 %v617
    %v619 = vlaneseq
    %v620 = vshrl.u32 %v619, 7
    %v621 = vsub.s32 %v618, %v620
    %v622 = vrot.slane %v439, %v621
    %v624 = vunpack.c.l.s4 1983009808
    %v625 = vunpack.c.0.s8 %v624
    %v626 = vlaneseq
    %v627 = vshrl.u32 %v626, 7
    %v628 = vsub.s32 %v625, %v627
    %v629 = vrot.slane %v615, %v628
    %v630 = vcombine.high %v622, %v622
    %v631 = vcombine.high %v629, %v629
    %v632 = vcombine.high %v440, %v440
    %v634 = vunpack.c.l.s4 1983009808
    %v635 = vunpack.c.0.s8 %v634
    %v636 = vlaneseq
    %v637 = vshrl.u32 %v636, 7
    %v638 = vsub.s32 %v635, %v637
    %v639 = vrot.slane %v440, %v638
    %v641 = vunpack.c.l.s4 1983009808
    %v642 = vunpack.c.0.s8 %v641
    %v643 = vlaneseq
    %v644 = vshrl.u32 %v643, 7
    %v645 = vsub.s32 %v642, %v644
    %v646 = vrot.slane %v632, %v645
    %v647 = vcombine.high %v639, %v639
    %v648 = vcombine.high %v646, %v646
    %v649 = vcombine.high %v441, %v441
    %v651 = vunpack.c.l.s4 1983009808
    %v652 = vunpack.c.0.s8 %v651
    %v653 = vlaneseq
    %v654 = vshrl.u32 %v653, 7
    %v655 = vsub.s32 %v652, %v654
    %v656 = vrot.slane %v441, %v655
    %v658 = vunpack.c.l.s4 1983009808
    %v659 = vunpack.c.0.s8 %v658
    %v660 = vlaneseq
    %v661 = vshrl.u32 %v660, 7
    %v662 = vsub.s32 %v659, %v661
    %v663 = vrot.slane %v649, %v662
    %v664 = vcombine.high %v656, %v656
    %v665 = vcombine.high %v663, %v663
    %v666 = vcombine.high %v442, %v442
    %v668 = vunpack.c.l.s4 1983009808
    %v669 = vunpack.c.0.s8 %v668
    %v670 = vlaneseq
    %v671 = vshrl.u32 %v670, 7
    %v672 = vsub.s32 %v669, %v671
    %v673 = vrot.slane %v442, %v672
    %v675 = vunpack.c.l.s4 1983009808
    %v676 = vunpack.c.0.s8 %v675
    %v677 = vlaneseq
    %v678 = vshrl.u32 %v677, 7
    %v679 = vsub.s32 %v676, %v678
    %v680 = vrot.slane %v666, %v679
    %v681 = vcombine.high %v673, %v673
    %v682 = vcombine.high %v680, %v680
    %v683 = vcombine.high %v443, %v443
    %v685 = vunpack.c.l.s4 1983009808
    %v686 = vunpack.c.0.s8 %v685
    %v687 = vlaneseq
    %v688 = vshrl.u32 %v687, 7
    %v689 = vsub.s32 %v686, %v688
    %v690 = vrot.slane %v443, %v689
    %v692 = vunpack.c.l.s4 1983009808
    %v693 = vunpack.c.0.s8 %v692
    %v694 = vlaneseq
    %v695 = vshrl.u32 %v694, 7
    %v696 = vsub.s32 %v693, %v695
    %v697 = vrot.slane %v683, %v696
    %v698 = vcombine.high %v690, %v690
    %v699 = vcombine.high %v697, %v697
    %v700 = vcombine.high %v444, %v444
    %v702 = vunpack.c.l.s4 1983009808
    %v703 = vunpack.c.0.s8 %v702
    %v704 = vlaneseq
    %v705 = vshrl.u32 %v704, 7
    %v706 = vsub.s32 %v703, %v705
    %v707 = vrot.slane %v444, %v706
    %v709 = vunpack.c.l.s4 1983009808
    %v710 = vunpack.c.0.s8 %v709
    %v711 = vlaneseq
    %v712 = vshrl.u32 %v711, 7
    %v713 = vsub.s32 %v710, %v712
    %v714 = vrot.slane %v700, %v713
    %v715 = vcombine.high %v707, %v707
    %v716 = vcombine.high %v714, %v714
    %v717 = vcombine.high %v445, %v445
    %v719 = vunpack.c.l.s4 1983009808
    %v720 = vunpack.c.0.s8 %v719
    %v721 = vlaneseq
    %v722 = vshrl.u32 %v721, 7
    %v723 = vsub.s32 %v720, %v722
    %v724 = vrot.slane %v445, %v723
    %v726 = vunpack.c.l.s4 1983009808
    %v727 = vunpack.c.0.s8 %v726
    %v728 = vlaneseq
    %v729 = vshrl.u32 %v728, 7
    %v730 = vsub.s32 %v727, %v729
    %v731 = vrot.slane %v717, %v730
    %v732 = vcombine.high %v724, %v724
    %v733 = vcombine.high %v731, %v731
    %vm798 = vcmask 58368
    %v799 = vsel %vm798, %v469, -inf
    %v800 = vrot.slane %v799, 4
    %v801 = vmax.f32 %v799, %v800
    %v802 = vrot.slane %v801, 2
    %v803 = vmax.f32 %v801, %v802
    %v804 = vrot.slane %v803, 1
    %v805 = vmax.f32 %v803, %v804
    %v806 = vsel %vm798, %v477, -inf
    %v807 = vrot.slane %v806, 4
    %v808 = vmax.f32 %v806, %v807
    %v809 = vrot.slane %v808, 2
    %v810 = vmax.f32 %v808, %v809
    %v811 = vrot.slane %v810, 1
    %v812 = vmax.f32 %v810, %v811
    %v813 = vsel %vm798, %v476, -inf
    %v814 = vrot.slane %v813, 4
    %v815 = vmax.f32 %v813, %v814
    %v816 = vrot.slane %v815, 2
    %v817 = vmax.f32 %v815, %v816
    %v818 = vrot.slane %v817, 1
    %v819 = vmax.f32 %v817, %v818
    %v820 = vsel %vm798, %v478, -inf
    %v821 = vrot.slane %v820, 4
    %v822 = vmax.f32 %v820, %v821
    %v823 = vrot.slane %v822, 2
    %v824 = vmax.f32 %v822, %v823
    %v825 = vrot.slane %v824, 1
    %v826 = vmax.f32 %v824, %v825
    %v827 = vsel %vm798, %v486, -inf
    %v828 = vrot.slane %v827, 4
    %v829 = vmax.f32 %v827, %v828
    %v830 = vrot.slane %v829, 2
    %v831 = vmax.f32 %v829, %v830
    %v832 = vrot.slane %v831, 1
    %v833 = vmax.f32 %v831, %v832
    %v834 = vsel %vm798, %v494, -inf
    %v835 = vrot.slane %v834, 4
    %v836 = vmax.f32 %v834, %v835
    %v837 = vrot.slane %v836, 2
    %v838 = vmax.f32 %v836, %v837
    %v839 = vrot.slane %v838, 1
    %v840 = vmax.f32 %v838, %v839
    %v841 = vsel %vm798, %v493, -inf
    %v842 = vrot.slane %v841, 4
    %v843 = vmax.f32 %v841, %v842
    %v844 = vrot.slane %v843, 2
    %v845 = vmax.f32 %v843, %v844
    %v846 = vrot.slane %v845, 1
    %v847 = vmax.f32 %v845, %v846
    %v848 = vsel %vm798, %v495, -inf
    %v849 = vrot.slane %v848, 4
    %v850 = vmax.f32 %v848, %v849
    %v851 = vrot.slane %v850, 2
    %v852 = vmax.f32 %v850, %v851
    %v853 = vrot.slane %v852, 1
    %v854 = vmax.f32 %v852, %v853
    %v855 = vsel %vm798, %v503, -inf
    %v856 = vrot.slane %v855, 4
    %v857 = vmax.f32 %v855, %v856
    %v858 = vrot.slane %v857, 2
    %v859 = vmax.f32 %v857, %v858
    %v860 = vrot.slane %v859, 1
    %v861 = vmax.f32 %v859, %v860
    %v862 = vsel %vm798, %v511, -inf
    %v863 = vrot.slane %v862, 4
    %v864 = vmax.f32 %v862, %v863
    %v865 = vrot.slane %v864, 2
    %v866 = vmax.f32 %v864, %v865
    %v867 = vrot.slane %v866, 1
    %v868 = vmax.f32 %v866, %v867
    %v869 = vsel %vm798, %v510, -inf
    %v870 = vrot.slane %v869, 4
    %v871 = vmax.f32 %v869, %v870
    %v872 = vrot.slane %v871, 2
    %v873 = vmax.f32 %v871, %v872
    %v874 = vrot.slane %v873, 1
    %v875 = vmax.f32 %v873, %v874
    %v876 = vsel %vm798, %v512, -inf
    %v877 = vrot.slane %v876, 4
    %v878 = vmax.f32 %v876, %v877
    %v879 = vrot.slane %v878, 2
    %v880 = vmax.f32 %v878, %v879
    %v881 = vrot.slane %v880, 1
    %v882 = vmax.f32 %v880, %v881
    %v883 = vsel %vm798, %v520, -inf
    %v884 = vrot.slane %v883, 4
    %v885 = vmax.f32 %v883, %v884
    %v886 = vrot.slane %v885, 2
    %v887 = vmax.f32 %v885, %v886
    %v888 = vrot.slane %v887, 1
    %v889 = vmax.f32 %v887, %v888
    %v890 = vsel %vm798, %v528, -inf
    %v891 = vrot.slane %v890, 4
    %v892 = vmax.f32 %v890, %v891
    %v893 = vrot.slane %v892, 2
    %v894 = vmax.f32 %v892, %v893
    %v895 = vrot.slane %v894, 1
    %v896 = vmax.f32 %v894, %v895
    %v897 = vsel %vm798, %v527, -inf
    %v898 = vrot.slane %v897, 4
    %v899 = vmax.f32 %v897, %v898
    %v900 = vrot.slane %v899, 2
    %v901 = vmax.f32 %v899, %v900
    %v902 = vrot.slane %v901, 1
    %v903 = vmax.f32 %v901, %v902
    %v904 = vsel %vm798, %v529, -inf
    %v905 = vrot.slane %v904, 4
    %v906 = vmax.f32 %v904, %v905
    %v907 = vrot.slane %v906, 2
    %v908 = vmax.f32 %v906, %v907
    %v909 = vrot.slane %v908, 1
    %v910 = vmax.f32 %v908, %v909
    %v911 = vsel %vm798, %v537, -inf
    %v912 = vrot.slane %v911, 4
    %v913 = vmax.f32 %v911, %v912
    %v914 = vrot.slane %v913, 2
    %v915 = vmax.f32 %v913, %v914
    %v916 = vrot.slane %v915, 1
    %v917 = vmax.f32 %v915, %v916
    %v918 = vsel %vm798, %v545, -inf
    %v919 = vrot.slane %v918, 4
    %v920 = vmax.f32 %v918, %v919
    %v921 = vrot.slane %v920, 2
    %v922 = vmax.f32 %v920, %v921
    %v923 = vrot.slane %v922, 1
    %v924 = vmax.f32 %v922, %v923
    %v925 = vsel %vm798, %v544, -inf
    %v926 = vrot.slane %v925, 4
    %v927 = vmax.f32 %v925, %v926
    %v928 = vrot.slane %v927, 2
    %v929 = vmax.f32 %v927, %v928
    %v930 = vrot.slane %v929, 1
    %v931 = vmax.f32 %v929, %v930
    %v932 = vsel %vm798, %v546, -inf
    %v933 = vrot.slane %v932, 4
    %v934 = vmax.f32 %v932, %v933
    %v935 = vrot.slane %v934, 2
    %v936 = vmax.f32 %v934, %v935
    %v937 = vrot.slane %v936, 1
    %v938 = vmax.f32 %v936, %v937
    %v939 = vsel %vm798, %v554, -inf
    %v940 = vrot.slane %v939, 4
    %v941 = vmax.f32 %v939, %v940
    %v942 = vrot.slane %v941, 2
    %v943 = vmax.f32 %v941, %v942
    %v944 = vrot.slane %v943, 1
    %v945 = vmax.f32 %v943, %v944
    %v946 = vsel %vm798, %v562, -inf
    %v947 = vrot.slane %v946, 4
    %v948 = vmax.f32 %v946, %v947
    %v949 = vrot.slane %v948, 2
    %v950 = vmax.f32 %v948, %v949
    %v951 = vrot.slane %v950, 1
    %v952 = vmax.f32 %v950, %v951
    %v953 = vsel %vm798, %v561, -inf
    %v954 = vrot.slane %v953, 4
    %v955 = vmax.f32 %v953, %v954
    %v956 = vrot.slane %v955, 2
    %v957 = vmax.f32 %v955, %v956
    %v958 = vrot.slane %v957, 1
    %v959 = vmax.f32 %v957, %v958
    %v960 = vsel %vm798, %v563, -inf
    %v961 = vrot.slane %v960, 4
    %v962 = vmax.f32 %v960, %v961
    %v963 = vrot.slane %v962, 2
    %v964 = vmax.f32 %v962, %v963
    %v965 = vrot.slane %v964, 1
    %v966 = vmax.f32 %v964, %v965
    %v967 = vsel %vm798, %v571, -inf
    %v968 = vrot.slane %v967, 4
    %v969 = vmax.f32 %v967, %v968
    %v970 = vrot.slane %v969, 2
    %v971 = vmax.f32 %v969, %v970
    %v972 = vrot.slane %v971, 1
    %v973 = vmax.f32 %v971, %v972
    %v974 = vsel %vm798, %v579, -inf
    %v975 = vrot.slane %v974, 4
    %v976 = vmax.f32 %v974, %v975
    %v977 = vrot.slane %v976, 2
    %v978 = vmax.f32 %v976, %v977
    %v979 = vrot.slane %v978, 1
    %v980 = vmax.f32 %v978, %v979
    %v981 = vsel %vm798, %v578, -inf
    %v982 = vrot.slane %v981, 4
    %v983 = vmax.f32 %v981, %v982
    %v984 = vrot.slane %v983, 2
    %v985 = vmax.f32 %v983, %v984
    %v986 = vrot.slane %v985, 1
    %v987 = vmax.f32 %v985, %v986
    %v988 = vsel %vm798, %v580, -inf
    %v989 = vrot.slane %v988, 4
    %v990 = vmax.f32 %v988, %v989
    %v991 = vrot.slane %v990, 2
    %v992 = vmax.f32 %v990, %v991
    %v993 = vrot.slane %v992, 1
    %v994 = vmax.f32 %v992, %v993
    %v995 = vsel %vm798, %v588, -inf
    %v996 = vrot.slane %v995, 4
    %v997 = vmax.f32 %v995, %v996
    %v998 = vrot.slane %v997, 2
    %v999 = vmax.f32 %v997, %v998
    %v1000 = vrot.slane %v999, 1
    %v1001 = vmax.f32 %v999, %v1000
    %v1002 = vsel %vm798, %v596, -inf
    %v1003 = vrot.slane %v1002, 4
    %v1004 = vmax.f32 %v1002, %v1003
    %v1005 = vrot.slane %v1004, 2
    %v1006 = vmax.f32 %v1004, %v1005
    %v1007 = vrot.slane %v1006, 1
    %v1008 = vmax.f32 %v1006, %v1007
    %v1009 = vsel %vm798, %v595, -inf
    %v1010 = vrot.slane %v1009, 4
    %v1011 = vmax.f32 %v1009, %v1010
    %v1012 = vrot.slane %v1011, 2
    %v1013 = vmax.f32 %v1011, %v1012
    %v1014 = vrot.slane %v1013, 1
    %v1015 = vmax.f32 %v1013, %v1014
    %v1016 = vsel %vm798, %v597, -inf
    %v1017 = vrot.slane %v1016, 4
    %v1018 = vmax.f32 %v1016, %v1017
    %v1019 = vrot.slane %v1018, 2
    %v1020 = vmax.f32 %v1018, %v1019
    %v1021 = vrot.slane %v1020, 1
    %v1022 = vmax.f32 %v1020, %v1021
    %v1023 = vsel %vm798, %v605, -inf
    %v1024 = vrot.slane %v1023, 4
    %v1025 = vmax.f32 %v1023, %v1024
    %v1026 = vrot.slane %v1025, 2
    %v1027 = vmax.f32 %v1025, %v1026
    %v1028 = vrot.slane %v1027, 1
    %v1029 = vmax.f32 %v1027, %v1028
    %v1030 = vsel %vm798, %v613, -inf
    %v1031 = vrot.slane %v1030, 4
    %v1032 = vmax.f32 %v1030, %v1031
    %v1033 = vrot.slane %v1032, 2
    %v1034 = vmax.f32 %v1032, %v1033
    %v1035 = vrot.slane %v1034, 1
    %v1036 = vmax.f32 %v1034, %v1035
    %v1037 = vsel %vm798, %v612, -inf
    %v1038 = vrot.slane %v1037, 4
    %v1039 = vmax.f32 %v1037, %v1038
    %v1040 = vrot.slane %v1039, 2
    %v1041 = vmax.f32 %v1039, %v1040
    %v1042 = vrot.slane %v1041, 1
    %v1043 = vmax.f32 %v1041, %v1042
    %v1044 = vsel %vm798, %v614, -inf
    %v1045 = vrot.slane %v1044, 4
    %v1046 = vmax.f32 %v1044, %v1045
    %v1047 = vrot.slane %v1046, 2
    %v1048 = vmax.f32 %v1046, %v1047
    %v1049 = vrot.slane %v1048, 1
    %v1050 = vmax.f32 %v1048, %v1049
    %v1051 = vsel %vm798, %v622, -inf
    %v1052 = vrot.slane %v1051, 4
    %v1053 = vmax.f32 %v1051, %v1052
    %v1054 = vrot.slane %v1053, 2
    %v1055 = vmax.f32 %v1053, %v1054
    %v1056 = vrot.slane %v1055, 1
    %v1057 = vmax.f32 %v1055, %v1056
    %v1058 = vsel %vm798, %v630, -inf
    %v1059 = vrot.slane %v1058, 4
    %v1060 = vmax.f32 %v1058, %v1059
    %v1061 = vrot.slane %v1060, 2
    %v1062 = vmax.f32 %v1060, %v1061
    %v1063 = vrot.slane %v1062, 1
    %v1064 = vmax.f32 %v1062, %v1063
    %v1065 = vsel %vm798, %v629, -inf
    %v1066 = vrot.slane %v1065, 4
    %v1067 = vmax.f32 %v1065, %v1066
    %v1068 = vrot.slane %v1067, 2
    %v1069 = vmax.f32 %v1067, %v1068
    %v1070 = vrot.slane %v1069, 1
    %v1071 = vmax.f32 %v1069, %v1070
    %v1072 = vsel %vm798, %v631, -inf
    %v1073 = vrot.slane %v1072, 4
    %v1074 = vmax.f32 %v1072, %v1073
    %v1075 = vrot.slane %v1074, 2
    %v1076 = vmax.f32 %v1074, %v1075
    %v1077 = vrot.slane %v1076, 1
    %v1078 = vmax.f32 %v1076, %v1077
    %v1079 = vsel %vm798, %v639, -inf
    %v1080 = vrot.slane %v1079, 4
    %v1081 = vmax.f32 %v1079, %v1080
    %v1082 = vrot.slane %v1081, 2
    %v1083 = vmax.f32 %v1081, %v1082
    %v1084 = vrot.slane %v1083, 1
    %v1085 = vmax.f32 %v1083, %v1084
    %v1086 = vsel %vm798, %v647, -inf
    %v1087 = vrot.slane %v1086, 4
    %v1088 = vmax.f32 %v1086, %v1087
    %v1089 = vrot.slane %v1088, 2
    %v1090 = vmax.f32 %v1088, %v1089
    %v1091 = vrot.slane %v1090, 1
    %v1092 = vmax.f32 %v1090, %v1091
    %v1093 = vsel %vm798, %v646, -inf
    %v1094 = vrot.slane %v1093, 4
    %v1095 = vmax.f32 %v1093, %v1094
    %v1096 = vrot.slane %v1095, 2
    %v1097 = vmax.f32 %v1095, %v1096
    %v1098 = vrot.slane %v1097, 1
    %v1099 = vmax.f32 %v1097, %v1098
    %v1100 = vsel %vm798, %v648, -inf
    %v1101 = vrot.slane %v1100, 4
    %v1102 = vmax.f32 %v1100, %v1101
    %v1103 = vrot.slane %v1102, 2
    %v1104 = vmax.f32 %v1102, %v1103
    %v1105 = vrot.slane %v1104, 1
    %v1106 = vmax.f32 %v1104, %v1105
    %v1107 = vsel %vm798, %v656, -inf
    %v1108 = vrot.slane %v1107, 4
    %v1109 = vmax.f32 %v1107, %v1108
    %v1110 = vrot.slane %v1109, 2
    %v1111 = vmax.f32 %v1109, %v1110
    %v1112 = vrot.slane %v1111, 1
    %v1113 = vmax.f32 %v1111, %v1112
    %v1114 = vsel %vm798, %v664, -inf
    %v1115 = vrot.slane %v1114, 4
    %v1116 = vmax.f32 %v1114, %v1115
    %v1117 = vrot.slane %v1116, 2
    %v1118 = vmax.f32 %v1116, %v1117
    %v1119 = vrot.slane %v1118, 1
    %v1120 = vmax.f32 %v1118, %v1119
    %v1121 = vsel %vm798, %v663, -inf
    %v1122 = vrot.slane %v1121, 4
    %v1123 = vmax.f32 %v1121, %v1122
    %v1124 = vrot.slane %v1123, 2
    %v1125 = vmax.f32 %v1123, %v1124
    %v1126 = vrot.slane %v1125, 1
    %v1127 = vmax.f32 %v1125, %v1126
    %v1128 = vsel %vm798, %v665, -inf
    %v1129 = vrot.slane %v1128, 4
    %v1130 = vmax.f32 %v1128, %v1129
    %v1131 = vrot.slane %v1130, 2
    %v1132 = vmax.f32 %v1130, %v1131
    %v1133 = vrot.slane %v1132, 1
    %v1134 = vmax.f32 %v1132, %v1133
    %v1135 = vsel %vm798, %v673, -inf
    %v1136 = vrot.slane %v1135, 4
    %v1137 = vmax.f32 %v1135, %v1136
    %v1138 = vrot.slane %v1137, 2
    %v1139 = vmax.f32 %v1137, %v1138
    %v1140 = vrot.slane %v1139, 1
    %v1141 = vmax.f32 %v1139, %v1140
    %v1142 = vsel %vm798, %v681, -inf
    %v1143 = vrot.slane %v1142, 4
    %v1144 = vmax.f32 %v1142, %v1143
    %v1145 = vrot.slane %v1144, 2
    %v1146 = vmax.f32 %v1144, %v1145
    %v1147 = vrot.slane %v1146, 1
    %v1148 = vmax.f32 %v1146, %v1147
    %v1149 = vsel %vm798, %v680, -inf
    %v1150 = vrot.slane %v1149, 4
    %v1151 = vmax.f32 %v1149, %v1150
    %v1152 = vrot.slane %v1151, 2
    %v1153 = vmax.f32 %v1151, %v1152
    %v1154 = vrot.slane %v1153, 1
    %v1155 = vmax.f32 %v1153, %v1154
    %v1156 = vsel %vm798, %v682, -inf
    %v1157 = vrot.slane %v1156, 4
    %v1158 = vmax.f32 %v1156, %v1157
    %v1159 = vrot.slane %v1158, 2
    %v1160 = vmax.f32 %v1158, %v1159
    %v1161 = vrot.slane %v1160, 1
    %v1162 = vmax.f32 %v1160, %v1161
    %v1163 = vsel %vm798, %v690, -inf
    %v1164 = vrot.slane %v1163, 4
    %v1165 = vmax.f32 %v1163, %v1164
    %v1166 = vrot.slane %v1165, 2
    %v1167 = vmax.f32 %v1165, %v1166
    %v1168 = vrot.slane %v1167, 1
    %v1169 = vmax.f32 %v1167, %v1168
    %v1170 = vsel %vm798, %v698, -inf
    %v1171 = vrot.slane %v1170, 4
    %v1172 = vmax.f32 %v1170, %v1171
    %v1173 = vrot.slane %v1172, 2
    %v1174 = vmax.f32 %v1172, %v1173
    %v1175 = vrot.slane %v1174, 1
    %v1176 = vmax.f32 %v1174, %v1175
    %v1177 = vsel %vm798, %v697, -inf
    %v1178 = vrot.slane %v1177, 4
    %v1179 = vmax.f32 %v1177, %v1178
    %v1180 = vrot.slane %v1179, 2
    %v1181 = vmax.f32 %v1179, %v1180
    %v1182 = vrot.slane %v1181, 1
    %v1183 = vmax.f32 %v1181, %v1182
    %v1184 = vsel %vm798, %v699, -inf
    %v1185 = vrot.slane %v1184, 4
    %v1186 = vmax.f32 %v1184, %v1185
    %v1187 = vrot.slane %v1186, 2
    %v1188 = vmax.f32 %v1186, %v1187
    %v1189 = vrot.slane %v1188, 1
    %v1190 = vmax.f32 %v1188, %v1189
    %v1191 = vsel %vm798, %v707, -inf
    %v1192 = vrot.slane %v1191, 4
    %v1193 = vmax.f32 %v1191, %v1192
    %v1194 = vrot.slane %v1193, 2
    %v1195 = vmax.f32 %v1193, %v1194
    %v1196 = vrot.slane %v1195, 1
    %v1197 = vmax.f32 %v1195, %v1196
    %v1198 = vsel %vm798, %v715, -inf
    %v1199 = vrot.slane %v1198, 4
    %v1200 = vmax.f32 %v1198, %v1199
    %v1201 = vrot.slane %v1200, 2
    %v1202 = vmax.f32 %v1200, %v1201
    %v1203 = vrot.slane %v1202, 1
    %v1204 = vmax.f32 %v1202, %v1203
    %v1205 = vsel %vm798, %v714, -inf
    %v1206 = vrot.slane %v1205, 4
    %v1207 = vmax.f32 %v1205, %v1206
    %v1208 = vrot.slane %v1207, 2
    %v1209 = vmax.f32 %v1207, %v1208
    %v1210 = vrot.slane %v1209, 1
    %v1211 = vmax.f32 %v1209, %v1210
    %v1212 = vsel %vm798, %v716, -inf
    %v1213 = vrot.slane %v1212, 4
    %v1214 = vmax.f32 %v1212, %v1213
    %v1215 = vrot.slane %v1214, 2
    %v1216 = vmax.f32 %v1214, %v1215
    %v1217 = vrot.slane %v1216, 1
    %v1218 = vmax.f32 %v1216, %v1217
    %v1219 = vsel %vm798, %v724, -inf
    %v1220 = vrot.slane %v1219, 4
    %v1221 = vmax.f32 %v1219, %v1220
    %v1222 = vrot.slane %v1221, 2
    %v1223 = vmax.f32 %v1221, %v1222
    %v1224 = vrot.slane %v1223, 1
    %v1225 = vmax.f32 %v1223, %v1224
    %v1226 = vsel %vm798, %v732, -inf
    %v1227 = vrot.slane %v1226, 4
    %v1228 = vmax.f32 %v1226, %v1227
    %v1229 = vrot.slane %v1228, 2
    %v1230 = vmax.f32 %v1228, %v1229
    %v1231 = vrot.slane %v1230, 1
    %v1232 = vmax.f32 %v1230, %v1231
    %v1233 = vsel %vm798, %v731, -inf
    %v1234 = vrot.slane %v1233, 4
    %v1235 = vmax.f32 %v1233, %v1234
    %v1236 = vrot.slane %v1235, 2
    %v1237 = vmax.f32 %v1235, %v1236
    %v1238 = vrot.slane %v1237, 1
    %v1239 = vmax.f32 %v1237, %v1238
    %v1240 = vsel %vm798, %v733, -inf
    %v1241 = vrot.slane %v1240, 4
    %v1242 = vmax.f32 %v1240, %v1241
    %v1243 = vrot.slane %v1242, 2
    %v1244 = vmax.f32 %v1242, %v1243
    %v1245 = vrot.slane %v1244, 1
    %v1246 = vmax.f32 %v1244, %v1245
    %vm1311 = vcmask 1041409
    %v1312 = vsel %vm1311, %v812, %v805
    %vm1313 = vcmask 1042434
    %v1314 = vsel %vm1313, %v819, %v1312
    %vm1315 = vcmask 1043459
    %v1316 = vsel %vm1315, %v826, %v1314
    %vm1317 = vcmask 1044484
    %v1318 = vsel %vm1317, %v833, %v1316
    %vm1319 = vcmask 1045509
    %v1320 = vsel %vm1319, %v840, %v1318
    %vm1321 = vcmask 1046534
    %v1322 = vsel %vm1321, %v847, %v1320
    %vm1323 = vcmask 1047559
    %v1324 = vsel %vm1323, %v854, %v1322
    %v1325 = vsel %vm1311, %v868, %v861
    %v1326 = vsel %vm1313, %v875, %v1325
    %v1327 = vsel %vm1315, %v882, %v1326
    %v1328 = vsel %vm1317, %v889, %v1327
    %v1329 = vsel %vm1319, %v896, %v1328
    %v1330 = vsel %vm1321, %v903, %v1329
    %v1331 = vsel %vm1323, %v910, %v1330
    %v1332 = vsel %vm1311, %v924, %v917
    %v1333 = vsel %vm1313, %v931, %v1332
    %v1334 = vsel %vm1315, %v938, %v1333
    %v1335 = vsel %vm1317, %v945, %v1334
    %v1336 = vsel %vm1319, %v952, %v1335
    %v1337 = vsel %vm1321, %v959, %v1336
    %v1338 = vsel %vm1323, %v966, %v1337
    %v1339 = vsel %vm1311, %v980, %v973
    %v1340 = vsel %vm1313, %v987, %v1339
    %v1341 = vsel %vm1315, %v994, %v1340
    %v1342 = vsel %vm1317, %v1001, %v1341
    %v1343 = vsel %vm1319, %v1008, %v1342
    %v1344 = vsel %vm1321, %v1015, %v1343
    %v1345 = vsel %vm1323, %v1022, %v1344
    %v1346 = vsel %vm1311, %v1036, %v1029
    %v1347 = vsel %vm1313, %v1043, %v1346
    %v1348 = vsel %vm1315, %v1050, %v1347
    %v1349 = vsel %vm1317, %v1057, %v1348
    %v1350 = vsel %vm1319, %v1064, %v1349
    %v1351 = vsel %vm1321, %v1071, %v1350
    %v1352 = vsel %vm1323, %v1078, %v1351
    %v1353 = vsel %vm1311, %v1092, %v1085
    %v1354 = vsel %vm1313, %v1099, %v1353
    %v1355 = vsel %vm1315, %v1106, %v1354
    %v1356 = vsel %vm1317, %v1113, %v1355
    %v1357 = vsel %vm1319, %v1120, %v1356
    %v1358 = vsel %vm1321, %v1127, %v1357
    %v1359 = vsel %vm1323, %v1134, %v1358
    %v1360 = vsel %vm1311, %v1148, %v1141
    %v1361 = vsel %vm1313, %v1155, %v1360
    %v1362 = vsel %vm1315, %v1162, %v1361
    %v1363 = vsel %vm1317, %v1169, %v1362
    %v1364 = vsel %vm1319, %v1176, %v1363
    %v1365 = vsel %vm1321, %v1183, %v1364
    %v1366 = vsel %vm1323, %v1190, %v1365
    %v1367 = vsel %vm1311, %v1204, %v1197
    %v1368 = vsel %vm1313, %v1211, %v1367
    %v1369 = vsel %vm1315, %v1218, %v1368
    %v1370 = vsel %vm1317, %v1225, %v1369
    %v1371 = vsel %vm1319, %v1232, %v1370
    %v1372 = vsel %vm1321, %v1239, %v1371
    %v1373 = vsel %vm1323, %v1246, %v1372
    %v1382 = vcombine.high %v1324, 0.0
    %v1384 = vunpack.c.l.s4 1983009808
    %v1385 = vunpack.c.0.s8 %v1384
    %v1386 = vlaneseq
    %v1387 = vshrl.u32 %v1386, 7
    %v1388 = vsub.s32 %v1385, %v1387
    %v1389 = vrot.slane %v1324, %v1388
    %v1391 = vunpack.c.l.s4 1983009808
    %v1392 = vunpack.c.0.s8 %v1391
    %v1393 = vlaneseq
    %v1394 = vshrl.u32 %v1393, 7
    %v1395 = vsub.s32 %v1392, %v1394
    %v1396 = vrot.slane %v1382, %v1395
    %v1397 = vcombine.high %v1389, 0.0
    %v1399 = vunpack.c.l.s4 1934713408
    %v1400 = vunpack.c.0.s8 %v1399
    %v1401 = vlaneseq
    %v1402 = vshrl.u32 %v1401, 7
    %v1403 = vsub.s32 %v1400, %v1402
    %v1404 = vrot.slane %v1389, %v1403
    %v1406 = vunpack.c.l.s4 1934713408
    %v1407 = vunpack.c.0.s8 %v1406
    %v1408 = vlaneseq
    %v1409 = vshrl.u32 %v1408, 7
    %v1410 = vsub.s32 %v1407, %v1409
    %v1411 = vrot.slane %v1397, %v1410
    %v1412 = vcombine.high %v1396, 0.0
    %v1414 = vunpack.c.l.s4 1934713408
    %v1415 = vunpack.c.0.s8 %v1414
    %v1416 = vlaneseq
    %v1417 = vshrl.u32 %v1416, 7
    %v1418 = vsub.s32 %v1415, %v1417
    %v1419 = vrot.slane %v1396, %v1418
    %v1421 = vunpack.c.l.s4 1934713408
    %v1422 = vunpack.c.0.s8 %v1421
    %v1423 = vlaneseq
    %v1424 = vshrl.u32 %v1423, 7
    %v1425 = vsub.s32 %v1422, %v1424
    %v1426 = vrot.slane %v1412, %v1425
    %v1427 = vcombine.high %v1404, 0.0
    %v1428 = vcombine.high %v1411, 0.0
    %v1429 = vcombine.high %v1419, 0.0
    %v1430 = vcombine.high %v1426, 0.0
    %v1431 = vcombine.high %v1331, 0.0
    %v1433 = vunpack.c.l.s4 1983009808
    %v1434 = vunpack.c.0.s8 %v1433
    %v1435 = vlaneseq
    %v1436 = vshrl.u32 %v1435, 7
    %v1437 = vsub.s32 %v1434, %v1436
    %v1438 = vrot.slane %v1331, %v1437
    %v1440 = vunpack.c.l.s4 1983009808
    %v1441 = vunpack.c.0.s8 %v1440
    %v1442 = vlaneseq
    %v1443 = vshrl.u32 %v1442, 7
    %v1444 = vsub.s32 %v1441, %v1443
    %v1445 = vrot.slane %v1431, %v1444
    %v1446 = vcombine.high %v1438, 0.0
    %v1448 = vunpack.c.l.s4 1934713408
    %v1449 = vunpack.c.0.s8 %v1448
    %v1450 = vlaneseq
    %v1451 = vshrl.u32 %v1450, 7
    %v1452 = vsub.s32 %v1449, %v1451
    %v1453 = vrot.slane %v1438, %v1452
    %v1455 = vunpack.c.l.s4 1934713408
    %v1456 = vunpack.c.0.s8 %v1455
    %v1457 = vlaneseq
    %v1458 = vshrl.u32 %v1457, 7
    %v1459 = vsub.s32 %v1456, %v1458
    %v1460 = vrot.slane %v1446, %v1459
    %v1461 = vcombine.high %v1445, 0.0
    %v1463 = vunpack.c.l.s4 1934713408
    %v1464 = vunpack.c.0.s8 %v1463
    %v1465 = vlaneseq
    %v1466 = vshrl.u32 %v1465, 7
    %v1467 = vsub.s32 %v1464, %v1466
    %v1468 = vrot.slane %v1445, %v1467
    %v1470 = vunpack.c.l.s4 1934713408
    %v1471 = vunpack.c.0.s8 %v1470
    %v1472 = vlaneseq
    %v1473 = vshrl.u32 %v1472, 7
    %v1474 = vsub.s32 %v1471, %v1473
    %v1475 = vrot.slane %v1461, %v1474
    %v1476 = vcombine.high %v1453, 0.0
    %v1477 = vcombine.high %v1460, 0.0
    %v1478 = vcombine.high %v1468, 0.0
    %v1479 = vcombine.high %v1475, 0.0
    %v1480 = vcombine.high %v1338, 0.0
    %v1482 = vunpack.c.l.s4 1983009808
    %v1483 = vunpack.c.0.s8 %v1482
    %v1484 = vlaneseq
    %v1485 = vshrl.u32 %v1484, 7
    %v1486 = vsub.s32 %v1483, %v1485
    %v1487 = vrot.slane %v1338, %v1486
    %v1489 = vunpack.c.l.s4 1983009808
    %v1490 = vunpack.c.0.s8 %v1489
    %v1491 = vlaneseq
    %v1492 = vshrl.u32 %v1491, 7
    %v1493 = vsub.s32 %v1490, %v1492
    %v1494 = vrot.slane %v1480, %v1493
    %v1495 = vcombine.high %v1487, 0.0
    %v1497 = vunpack.c.l.s4 1934713408
    %v1498 = vunpack.c.0.s8 %v1497
    %v1499 = vlaneseq
    %v1500 = vshrl.u32 %v1499, 7
    %v1501 = vsub.s32 %v1498, %v1500
    %v1502 = vrot.slane %v1487, %v1501
    %v1504 = vunpack.c.l.s4 1934713408
    %v1505 = vunpack.c.0.s8 %v1504
    %v1506 = vlaneseq
    %v1507 = vshrl.u32 %v1506, 7
    %v1508 = vsub.s32 %v1505, %v1507
    %v1509 = vrot.slane %v1495, %v1508
    %v1510 = vcombine.high %v1494, 0.0
    %v1512 = vunpack.c.l.s4 1934713408
    %v1513 = vunpack.c.0.s8 %v1512
    %v1514 = vlaneseq
    %v1515 = vshrl.u32 %v1514, 7
    %v1516 = vsub.s32 %v1513, %v1515
    %v1517 = vrot.slane %v1494, %v1516
    %v1519 = vunpack.c.l.s4 1934713408
    %v1520 = vunpack.c.0.s8 %v1519
    %v1521 = vlaneseq
    %v1522 = vshrl.u32 %v1521, 7
    %v1523 = vsub.s32 %v1520, %v1522
    %v1524 = vrot.slane %v1510, %v1523
    %v1525 = vcombine.high %v1502, 0.0
    %v1526 = vcombine.high %v1509, 0.0
    %v1527 = vcombine.high %v1517, 0.0
    %v1528 = vcombine.high %v1524, 0.0
    %v1529 = vcombine.high %v1345, 0.0
    %v1531 = vunpack.c.l.s4 1983009808
    %v1532 = vunpack.c.0.s8 %v1531
    %v1533 = vlaneseq
    %v1534 = vshrl.u32 %v1533, 7
    %v1535 = vsub.s32 %v1532, %v1534
    %v1536 = vrot.slane %v1345, %v1535
    %v1538 = vunpack.c.l.s4 1983009808
    %v1539 = vunpack.c.0.s8 %v1538
    %v1540 = vlaneseq
    %v1541 = vshrl.u32 %v1540, 7
    %v1542 = vsub.s32 %v1539, %v1541
    %v1543 = vrot.slane %v1529, %v1542
    %v1544 = vcombine.high %v1536, 0.0
    %v1546 = vunpack.c.l.s4 1934713408
    %v1547 = vunpack.c.0.s8 %v1546
    %v1548 = vlaneseq
    %v1549 = vshrl.u32 %v1548, 7
    %v1550 = vsub.s32 %v1547, %v1549
    %v1551 = vrot.slane %v1536, %v1550
    %v1553 = vunpack.c.l.s4 1934713408
    %v1554 = vunpack.c.0.s8 %v1553
    %v1555 = vlaneseq
    %v1556 = vshrl.u32 %v1555, 7
    %v1557 = vsub.s32 %v1554, %v1556
    %v1558 = vrot.slane %v1544, %v1557
    %v1559 = vcombine.high %v1543, 0.0
    %v1561 = vunpack.c.l.s4 1934713408
    %v1562 = vunpack.c.0.s8 %v1561
    %v1563 = vlaneseq
    %v1564 = vshrl.u32 %v1563, 7
    %v1565 = vsub.s32 %v1562, %v1564
    %v1566 = vrot.slane %v1543, %v1565
    %v1568 = vunpack.c.l.s4 1934713408
    %v1569 = vunpack.c.0.s8 %v1568
    %v1570 = vlaneseq
    %v1571 = vshrl.u32 %v1570, 7
    %v1572 = vsub.s32 %v1569, %v1571
    %v1573 = vrot.slane %v1559, %v1572
    %v1574 = vcombine.high %v1551, 0.0
    %v1575 = vcombine.high %v1558, 0.0
    %v1576 = vcombine.high %v1566, 0.0
    %v1577 = vcombine.high %v1573, 0.0
    %v1578 = vcombine.high %v1352, 0.0
    %v1580 = vunpack.c.l.s4 1983009808
    %v1581 = vunpack.c.0.s8 %v1580
    %v1582 = vlaneseq
    %v1583 = vshrl.u32 %v1582, 7
    %v1584 = vsub.s32 %v1581, %v1583
    %v1585 = vrot.slane %v1352, %v1584
    %v1587 = vunpack.c.l.s4 1983009808
    %v1588 = vunpack.c.0.s8 %v1587
    %v1589 = vlaneseq
    %v1590 = vshrl.u32 %v1589, 7
    %v1591 = vsub.s32 %v1588, %v1590
    %v1592 = vrot.slane %v1578, %v1591
    %v1593 = vcombine.high %v1585, 0.0
    %v1595 = vunpack.c.l.s4 1934713408
    %v1596 = vunpack.c.0.s8 %v1595
    %v1597 = vlaneseq
    %v1598 = vshrl.u32 %v1597, 7
    %v1599 = vsub.s32 %v1596, %v1598
    %v1600 = vrot.slane %v1585, %v1599
    %v1602 = vunpack.c.l.s4 1934713408
    %v1603 = vunpack.c.0.s8 %v1602
    %v1604 = vlaneseq
    %v1605 = vshrl.u32 %v1604, 7
    %v1606 = vsub.s32 %v1603, %v1605
    %v1607 = vrot.slane %v1593, %v1606
    %v1608 = vcombine.high %v1592, 0.0
    %v1610 = vunpack.c.l.s4 1934713408
    %v1611 = vunpack.c.0.s8 %v1610
    %v1612 = vlaneseq
    %v1613 = vshrl.u32 %v1612, 7
    %v1614 = vsub.s32 %v1611, %v1613
    %v1615 = vrot.slane %v1592, %v1614
    %v1617 = vunpack.c.l.s4 1934713408
    %v1618 = vunpack.c.0.s8 %v1617
    %v1619 = vlaneseq
    %v1620 = vshrl.u32 %v1619, 7
    %v1621 = vsub.s32 %v1618, %v1620
    %v1622 = vrot.slane %v1608, %v1621
    %v1623 = vcombine.high %v1600, 0.0
    %v1624 = vcombine.high %v1607, 0.0
    %v1625 = vcombine.high %v1615, 0.0
    %v1626 = vcombine.high %v1622, 0.0
    %v1627 = vcombine.high %v1359, 0.0
    %v1629 = vunpack.c.l.s4 1983009808
    %v1630 = vunpack.c.0.s8 %v1629
    %v1631 = vlaneseq
    %v1632 = vshrl.u32 %v1631, 7
    %v1633 = vsub.s32 %v1630, %v1632
    %v1634 = vrot.slane %v1359, %v1633
    %v1636 = vunpack.c.l.s4 1983009808
    %v1637 = vunpack.c.0.s8 %v1636
    %v1638 = vlaneseq
    %v1639 = vshrl.u32 %v1638, 7
    %v1640 = vsub.s32 %v1637, %v1639
    %v1641 = vrot.slane %v1627, %v1640
    %v1642 = vcombine.high %v1634, 0.0
    %v1644 = vunpack.c.l.s4 1934713408
    %v1645 = vunpack.c.0.s8 %v1644
    %v1646 = vlaneseq
    %v1647 = vshrl.u32 %v1646, 7
    %v1648 = vsub.s32 %v1645, %v1647
    %v1649 = vrot.slane %v1634, %v1648
    %v1651 = vunpack.c.l.s4 1934713408
    %v1652 = vunpack.c.0.s8 %v1651
    %v1653 = vlaneseq
    %v1654 = vshrl.u32 %v1653, 7
    %v1655 = vsub.s32 %v1652, %v1654
    %v1656 = vrot.slane %v1642, %v1655
    %v1657 = vcombine.high %v1641, 0.0
    %v1659 = vunpack.c.l.s4 1934713408
    %v1660 = vunpack.c.0.s8 %v1659
    %v1661 = vlaneseq
    %v1662 = vshrl.u32 %v1661, 7
    %v1663 = vsub.s32 %v1660, %v1662
    %v1664 = vrot.slane %v1641, %v1663
    %v1666 = vunpack.c.l.s4 1934713408
    %v1667 = vunpack.c.0.s8 %v1666
    %v1668 = vlaneseq
    %v1669 = vshrl.u32 %v1668, 7
    %v1670 = vsub.s32 %v1667, %v1669
    %v1671 = vrot.slane %v1657, %v1670
    %v1672 = vcombine.high %v1649, 0.0
    %v1673 = vcombine.high %v1656, 0.0
    %v1674 = vcombine.high %v1664, 0.0
    %v1675 = vcombine.high %v1671, 0.0
    %v1676 = vcombine.high %v1366, 0.0
    %v1678 = vunpack.c.l.s4 1983009808
    %v1679 = vunpack.c.0.s8 %v1678
    %v1680 = vlaneseq
    %v1681 = vshrl.u32 %v1680, 7
    %v1682 = vsub.s32 %v1679, %v1681
    %v1683 = vrot.slane %v1366, %v1682
    %v1685 = vunpack.c.l.s4 1983009808
    %v1686 = vunpack.c.0.s8 %v1685
    %v1687 = vlaneseq
    %v1688 = vshrl.u32 %v1687, 7
    %v1689 = vsub.s32 %v1686, %v1688
    %v1690 = vrot.slane %v1676, %v1689
    %v1691 = vcombine.high %v1683, 0.0
    %v1693 = vunpack.c.l.s4 1934713408
    %v1694 = vunpack.c.0.s8 %v1693
    %v1695 = vlaneseq
    %v1696 = vshrl.u32 %v1695, 7
    %v1697 = vsub.s32 %v1694, %v1696
    %v1698 = vrot.slane %v1683, %v1697
    %v1700 = vunpack.c.l.s4 1934713408
    %v1701 = vunpack.c.0.s8 %v1700
    %v1702 = vlaneseq
    %v1703 = vshrl.u32 %v1702, 7
    %v1704 = vsub.s32 %v1701, %v1703
    %v1705 = vrot.slane %v1691, %v1704
    %v1706 = vcombine.high %v1690, 0.0
    %v1708 = vunpack.c.l.s4 1934713408
    %v1709 = vunpack.c.0.s8 %v1708
    %v1710 = vlaneseq
    %v1711 = vshrl.u32 %v1710, 7
    %v1712 = vsub.s32 %v1709, %v1711
    %v1713 = vrot.slane %v1690, %v1712
    %v1715 = vunpack.c.l.s4 1934713408
    %v1716 = vunpack.c.0.s8 %v1715
    %v1717 = vlaneseq
    %v1718 = vshrl.u32 %v1717, 7
    %v1719 = vsub.s32 %v1716, %v1718
    %v1720 = vrot.slane %v1706, %v1719
    %v1721 = vcombine.high %v1698, 0.0
    %v1722 = vcombine.high %v1705, 0.0
    %v1723 = vcombine.high %v1713, 0.0
    %v1724 = vcombine.high %v1720, 0.0
    %v1725 = vcombine.high %v1373, 0.0
    %v1727 = vunpack.c.l.s4 1983009808
    %v1728 = vunpack.c.0.s8 %v1727
    %v1729 = vlaneseq
    %v1730 = vshrl.u32 %v1729, 7
    %v1731 = vsub.s32 %v1728, %v1730
    %v1732 = vrot.slane %v1373, %v1731
    %v1734 = vunpack.c.l.s4 1983009808
    %v1735 = vunpack.c.0.s8 %v1734
    %v1736 = vlaneseq
    %v1737 = vshrl.u32 %v1736, 7
    %v1738 = vsub.s32 %v1735, %v1737
    %v1739 = vrot.slane %v1725, %v1738
    %v1740 = vcombine.high %v1732, 0.0
    %v1742 = vunpack.c.l.s4 1934713408
    %v1743 = vunpack.c.0.s8 %v1742
    %v1744 = vlaneseq
    %v1745 = vshrl.u32 %v1744, 7
    %v1746 = vsub.s32 %v1743, %v1745
    %v1747 = vrot.slane %v1732, %v1746
    %v1749 = vunpack.c.l.s4 1934713408
    %v1750 = vunpack.c.0.s8 %v1749
    %v1751 = vlaneseq
    %v1752 = vshrl.u32 %v1751, 7
    %v1753 = vsub.s32 %v1750, %v1752
    %v1754 = vrot.slane %v1740, %v1753
    %v1755 = vcombine.high %v1739, 0.0
    %v1757 = vunpack.c.l.s4 1934713408
    %v1758 = vunpack.c.0.s8 %v1757
    %v1759 = vlaneseq
    %v1760 = vshrl.u32 %v1759, 7
    %v1761 = vsub.s32 %v1758, %v1760
    %v1762 = vrot.slane %v1739, %v1761
    %v1764 = vunpack.c.l.s4 1934713408
    %v1765 = vunpack.c.0.s8 %v1764
    %v1766 = vlaneseq
    %v1767 = vshrl.u32 %v1766, 7
    %v1768 = vsub.s32 %v1765, %v1767
    %v1769 = vrot.slane %v1755, %v1768
    %v1770 = vcombine.high %v1747, 0.0
    %v1771 = vcombine.high %v1754, 0.0
    %v1772 = vcombine.high %v1762, 0.0
    %v1773 = vcombine.high %v1769, 0.0
    %1782 = vrot.lane.b32.xlu0 %v1427, 8
    %v1783 = vpop.permute.xlu0 %1782
    %1784 = vrot.lane.b32.xlu0 %v1476, 8
    %v1785 = vpop.permute.xlu0 %1784
    %1786 = vrot.lane.b32.xlu0 %v1525, 8
    %v1787 = vpop.permute.xlu0 %1786
    %1788 = vrot.lane.b32.xlu0 %v1574, 8
    %v1789 = vpop.permute.xlu0 %1788
    %1790 = vrot.lane.b32.xlu0 %v1623, 8
    %v1791 = vpop.permute.xlu0 %1790
    %1792 = vrot.lane.b32.xlu0 %v1672, 8
    %v1793 = vpop.permute.xlu0 %1792
    %1794 = vrot.lane.b32.xlu0 %v1721, 8
    %v1795 = vpop.permute.xlu0 %1794
    %1796 = vrot.lane.b32.xlu0 %v1770, 8
    %v1797 = vpop.permute.xlu0 %1796
    %1814 = vrot.lane.b32.xlu0 %v1411, 16
    %v1815 = vpop.permute.xlu0 %1814
    %1816 = vrot.lane.b32.xlu0 %v1460, 16
    %v1817 = vpop.permute.xlu0 %1816
    %1818 = vrot.lane.b32.xlu0 %v1509, 16
    %v1819 = vpop.permute.xlu0 %1818
    %1820 = vrot.lane.b32.xlu0 %v1558, 16
    %v1821 = vpop.permute.xlu0 %1820
    %1822 = vrot.lane.b32.xlu0 %v1607, 16
    %v1823 = vpop.permute.xlu0 %1822
    %1824 = vrot.lane.b32.xlu0 %v1656, 16
    %v1825 = vpop.permute.xlu0 %1824
    %1826 = vrot.lane.b32.xlu0 %v1705, 16
    %v1827 = vpop.permute.xlu0 %1826
    %1828 = vrot.lane.b32.xlu0 %v1754, 16
    %v1829 = vpop.permute.xlu0 %1828
    %1846 = vrot.lane.b32.xlu0 %v1428, 24
    %v1847 = vpop.permute.xlu0 %1846
    %1848 = vrot.lane.b32.xlu0 %v1477, 24
    %v1849 = vpop.permute.xlu0 %1848
    %1850 = vrot.lane.b32.xlu0 %v1526, 24
    %v1851 = vpop.permute.xlu0 %1850
    %1852 = vrot.lane.b32.xlu0 %v1575, 24
    %v1853 = vpop.permute.xlu0 %1852
    %1854 = vrot.lane.b32.xlu0 %v1624, 24
    %v1855 = vpop.permute.xlu0 %1854
    %1856 = vrot.lane.b32.xlu0 %v1673, 24
    %v1857 = vpop.permute.xlu0 %1856
    %1858 = vrot.lane.b32.xlu0 %v1722, 24
    %v1859 = vpop.permute.xlu0 %1858
    %1860 = vrot.lane.b32.xlu0 %v1771, 24
    %v1861 = vpop.permute.xlu0 %1860
    %1878 = vrot.lane.b32.xlu0 %v1419, 32
    %v1879 = vpop.permute.xlu0 %1878
    %1880 = vrot.lane.b32.xlu0 %v1468, 32
    %v1881 = vpop.permute.xlu0 %1880
    %1882 = vrot.lane.b32.xlu0 %v1517, 32
    %v1883 = vpop.permute.xlu0 %1882
    %1884 = vrot.lane.b32.xlu0 %v1566, 32
    %v1885 = vpop.permute.xlu0 %1884
    %1886 = vrot.lane.b32.xlu0 %v1615, 32
    %v1887 = vpop.permute.xlu0 %1886
    %1888 = vrot.lane.b32.xlu0 %v1664, 32
    %v1889 = vpop.permute.xlu0 %1888
    %1890 = vrot.lane.b32.xlu0 %v1713, 32
    %v1891 = vpop.permute.xlu0 %1890
    %1892 = vrot.lane.b32.xlu0 %v1762, 32
    %v1893 = vpop.permute.xlu0 %1892
    %1910 = vrot.lane.b32.xlu0 %v1429, 40
    %v1911 = vpop.permute.xlu0 %1910
    %1912 = vrot.lane.b32.xlu0 %v1478, 40
    %v1913 = vpop.permute.xlu0 %1912
    %1914 = vrot.lane.b32.xlu0 %v1527, 40
    %v1915 = vpop.permute.xlu0 %1914
    %1916 = vrot.lane.b32.xlu0 %v1576, 40
    %v1917 = vpop.permute.xlu0 %1916
    %1918 = vrot.lane.b32.xlu0 %v1625, 40
    %v1919 = vpop.permute.xlu0 %1918
    %1920 = vrot.lane.b32.xlu0 %v1674, 40
    %v1921 = vpop.permute.xlu0 %1920
    %1922 = vrot.lane.b32.xlu0 %v1723, 40
    %v1923 = vpop.permute.xlu0 %1922
    %1924 = vrot.lane.b32.xlu0 %v1772, 40
    %v1925 = vpop.permute.xlu0 %1924
    %1942 = vrot.lane.b32.xlu0 %v1426, 48
    %v1943 = vpop.permute.xlu0 %1942
    %1944 = vrot.lane.b32.xlu0 %v1475, 48
    %v1945 = vpop.permute.xlu0 %1944
    %1946 = vrot.lane.b32.xlu0 %v1524, 48
    %v1947 = vpop.permute.xlu0 %1946
    %1948 = vrot.lane.b32.xlu0 %v1573, 48
    %v1949 = vpop.permute.xlu0 %1948
    %1950 = vrot.lane.b32.xlu0 %v1622, 48
    %v1951 = vpop.permute.xlu0 %1950
    %1952 = vrot.lane.b32.xlu0 %v1671, 48
    %v1953 = vpop.permute.xlu0 %1952
    %1954 = vrot.lane.b32.xlu0 %v1720, 48
    %v1955 = vpop.permute.xlu0 %1954
    %1956 = vrot.lane.b32.xlu0 %v1769, 48
    %v1957 = vpop.permute.xlu0 %1956
    %1974 = vrot.lane.b32.xlu0 %v1430, 56
    %v1975 = vpop.permute.xlu0 %1974
    %1976 = vrot.lane.b32.xlu0 %v1479, 56
    %v1977 = vpop.permute.xlu0 %1976
    %1978 = vrot.lane.b32.xlu0 %v1528, 56
    %v1979 = vpop.permute.xlu0 %1978
    %1980 = vrot.lane.b32.xlu0 %v1577, 56
    %v1981 = vpop.permute.xlu0 %1980
    %1982 = vrot.lane.b32.xlu0 %v1626, 56
    %v1983 = vpop.permute.xlu0 %1982
    %1984 = vrot.lane.b32.xlu0 %v1675, 56
    %v1985 = vpop.permute.xlu0 %1984
    %1986 = vrot.lane.b32.xlu0 %v1724, 56
    %v1987 = vpop.permute.xlu0 %1986
    %1988 = vrot.lane.b32.xlu0 %v1773, 56
    %v1989 = vpop.permute.xlu0 %1988
    %vm1998 = vcmask 64512
    %v1999 = vsel %vm1998, %v1404, %v1783
    %v2000 = vsel %vm1998, %v1453, %v1785
    %v2001 = vsel %vm1998, %v1502, %v1787
    %v2002 = vsel %vm1998, %v1551, %v1789
    %v2003 = vsel %vm1998, %v1600, %v1791
    %v2004 = vsel %vm1998, %v1649, %v1793
    %v2005 = vsel %vm1998, %v1698, %v1795
    %v2006 = vsel %vm1998, %v1747, %v1797
    %vm2007 = vcmask 130048
    %v2008 = vsel %vm2007, %v1999, %v1815
    %v2009 = vsel %vm2007, %v2000, %v1817
    %v2010 = vsel %vm2007, %v2001, %v1819
    %v2011 = vsel %vm2007, %v2002, %v1821
    %v2012 = vsel %vm2007, %v2003, %v1823
    %v2013 = vsel %vm2007, %v2004, %v1825
    %v2014 = vsel %vm2007, %v2005, %v1827
    %v2015 = vsel %vm2007, %v2006, %v1829
    %vm2016 = vcmask 195584
    %v2017 = vsel %vm2016, %v2008, %v1847
    %v2018 = vsel %vm2016, %v2009, %v1849
    %v2019 = vsel %vm2016, %v2010, %v1851
    %v2020 = vsel %vm2016, %v2011, %v1853
    %v2021 = vsel %vm2016, %v2012, %v1855
    %v2022 = vsel %vm2016, %v2013, %v1857
    %v2023 = vsel %vm2016, %v2014, %v1859
    %v2024 = vsel %vm2016, %v2015, %v1861
    %vm2025 = vcmask 261120
    %v2026 = vsel %vm2025, %v2017, %v1879
    %v2027 = vsel %vm2025, %v2018, %v1881
    %v2028 = vsel %vm2025, %v2019, %v1883
    %v2029 = vsel %vm2025, %v2020, %v1885
    %v2030 = vsel %vm2025, %v2021, %v1887
    %v2031 = vsel %vm2025, %v2022, %v1889
    %v2032 = vsel %vm2025, %v2023, %v1891
    %v2033 = vsel %vm2025, %v2024, %v1893
    %vm2034 = vcmask 326656
    %v2035 = vsel %vm2034, %v2026, %v1911
    %v2036 = vsel %vm2034, %v2027, %v1913
    %v2037 = vsel %vm2034, %v2028, %v1915
    %v2038 = vsel %vm2034, %v2029, %v1917
    %v2039 = vsel %vm2034, %v2030, %v1919
    %v2040 = vsel %vm2034, %v2031, %v1921
    %v2041 = vsel %vm2034, %v2032, %v1923
    %v2042 = vsel %vm2034, %v2033, %v1925
    %vm2043 = vcmask 392192
    %v2044 = vsel %vm2043, %v2035, %v1943
    %v2045 = vsel %vm2043, %v2036, %v1945
    %v2046 = vsel %vm2043, %v2037, %v1947
    %v2047 = vsel %vm2043, %v2038, %v1949
    %v2048 = vsel %vm2043, %v2039, %v1951
    %v2049 = vsel %vm2043, %v2040, %v1953
    %v2050 = vsel %vm2043, %v2041, %v1955
    %v2051 = vsel %vm2043, %v2042, %v1957
    %vm2052 = vcmask 457728
    %v2053 = vsel %vm2052, %v2044, %v1975
    %v2054 = vsel %vm2052, %v2045, %v1977
    %v2055 = vsel %vm2052, %v2046, %v1979
    %v2056 = vsel %vm2052, %v2047, %v1981
    %v2057 = vsel %vm2052, %v2048, %v1983
    %v2058 = vsel %vm2052, %v2049, %v1985
    %v2059 = vsel %vm2052, %v2050, %v1987
    %v2060 = vsel %vm2052, %v2051, %v1989
    %vm2061 = vcmask 516096
    %2062 = vst.msk [vmem:[#allocation5] sm:$0x1] %vm2061, %v2053
    %2063 = vst.msk [vmem:[#allocation5 + $0x1] sm:$0x1] %vm2061, %v2054
    %2064 = vst.msk [vmem:[#allocation5 + $0x2] sm:$0x1] %vm2061, %v2055
    %2065 = vst.msk [vmem:[#allocation5 + $0x3] sm:$0x1] %vm2061, %v2056
    %2066 = vst.msk [vmem:[#allocation5 + $0x4] sm:$0x1] %vm2061, %v2057
    %2067 = vst.msk [vmem:[#allocation5 + $0x5] sm:$0x1] %vm2061, %v2058
    %2068 = vst.msk [vmem:[#allocation5 + $0x6] sm:$0x1] %vm2061, %v2059
    %2069 = vst.msk [vmem:[#allocation5 + $0x7] sm:$0x1] %vm2061, %v2060
    %s2070 = scalar_lea.vmem [#allocation2], 256
    %v2071 = vld [vmem:[%s2070] sm:$0xff]
    %v2072 = vld [vmem:[%s2070 + $0x8] sm:$0xff]
    %v2073 = vld [vmem:[%s2070 + $0x10] sm:$0xff]
    %v2074 = vld [vmem:[%s2070 + $0x18] sm:$0xff]
    %v2075 = vld [vmem:[%s2070 + $0x20] sm:$0xff]
    %v2076 = vld [vmem:[%s2070 + $0x28] sm:$0xff]
    %v2077 = vld [vmem:[%s2070 + $0x30] sm:$0xff]
    %v2078 = vld [vmem:[%s2070 + $0x38] sm:$0xff]
    %v2079 = vld [vmem:[%s2070 + $0x40] sm:$0xff]
    %v2080 = vld [vmem:[%s2070 + $0x48] sm:$0xff]
    %v2081 = vld [vmem:[%s2070 + $0x50] sm:$0xff]
    %v2082 = vld [vmem:[%s2070 + $0x58] sm:$0xff]
    %v2083 = vld [vmem:[%s2070 + $0x60] sm:$0xff]
    %v2084 = vld [vmem:[%s2070 + $0x68] sm:$0xff]
    %v2085 = vld [vmem:[%s2070 + $0x70] sm:$0xff]
    %v2086 = vld [vmem:[%s2070 + $0x78] sm:$0xff]
    %v2087 = vld [vmem:[%s2070 + $0x80] sm:$0xff]
    %v2088 = vld [vmem:[%s2070 + $0x88] sm:$0xff]
    %v2089 = vld [vmem:[%s2070 + $0x90] sm:$0xff]
    %v2090 = vld [vmem:[%s2070 + $0x98] sm:$0xff]
    %v2091 = vld [vmem:[%s2070 + $0xa0] sm:$0xff]
    %v2092 = vld [vmem:[%s2070 + $0xa8] sm:$0xff]
    %v2093 = vld [vmem:[%s2070 + $0xb0] sm:$0xff]
    %v2094 = vld [vmem:[%s2070 + $0xb8] sm:$0xff]
    %v2095 = vld [vmem:[%s2070 + $0xc0] sm:$0xff]
    %v2096 = vld [vmem:[%s2070 + $0xc8] sm:$0xff]
    %v2097 = vld [vmem:[%s2070 + $0xd0] sm:$0xff]
    %v2098 = vld [vmem:[%s2070 + $0xd8] sm:$0xff]
    %v2099 = vld [vmem:[%s2070 + $0xe0] sm:$0xff]
    %v2100 = vld [vmem:[%s2070 + $0xe8] sm:$0xff]
    %v2101 = vld [vmem:[%s2070 + $0xf0] sm:$0xff]
    %v2102 = vld [vmem:[%s2070 + $0xf8] sm:$0xff]
    %v2103 = vld [vmem:[%s1] sm:$0xff]
    %v2104 = vld [vmem:[%s1 + $0x8] sm:$0xff]
    %v2105 = vld [vmem:[%s1 + $0x10] sm:$0xff]
    %v2106 = vld [vmem:[%s1 + $0x18] sm:$0x7]
    %v2108 = vsel %vm72, %v2071, 0
    %v2111 = vsel %vm72, %v2072, 0
    %v2114 = vsel %vm72, %v2073, 0
    %v2117 = vsel %vm72, %v2074, 0
    %v2120 = vsel %vm72, %v2075, 0
    %v2123 = vsel %vm72, %v2076, 0
    %v2126 = vsel %vm72, %v2077, 0
    %v2129 = vsel %vm72, %v2078, 0
    %v2132 = vsel %vm72, %v2079, 0
    %v2135 = vsel %vm72, %v2080, 0
    %v2138 = vsel %vm72, %v2081, 0
    %v2141 = vsel %vm72, %v2082, 0
    %v2144 = vsel %vm72, %v2083, 0
    %v2147 = vsel %vm72, %v2084, 0
    %v2150 = vsel %vm72, %v2085, 0
    %v2153 = vsel %vm72, %v2086, 0
    %v2156 = vsel %vm72, %v2087, 0
    %v2159 = vsel %vm72, %v2088, 0
    %v2162 = vsel %vm72, %v2089, 0
    %v2165 = vsel %vm72, %v2090, 0
    %v2168 = vsel %vm72, %v2091, 0
    %v2171 = vsel %vm72, %v2092, 0
    %v2174 = vsel %vm72, %v2093, 0
    %v2177 = vsel %vm72, %v2094, 0
    %v2180 = vsel %vm72, %v2095, 0
    %v2183 = vsel %vm72, %v2096, 0
    %v2186 = vsel %vm72, %v2097, 0
    %v2189 = vsel %vm72, %v2098, 0
    %v2192 = vsel %vm72, %v2099, 0
    %v2195 = vsel %vm72, %v2100, 0
    %v2198 = vsel %vm72, %v2101, 0
    %v2201 = vsel %vm72, %v2102, 0
    %v2204 = vsel %vm169, %v2106, 0
    %2206 = vmatprep.subr.mxu0 0.0
    %2207 = vmatpush1.msra.mxu0 %v2103
    %2208 = vmatprep.subr.mxu0 0.0
    %2209 = vmatpush1.msra.mxu0 %v2104
    %2210 = vmatprep.subr.mxu0 0.0
    %2211 = vmatpush1.msra.mxu0 %v2105
    %2212 = vmatprep.subr.mxu0 0.0
    %2213 = vmatpush1.msra.mxu0 %v2204
    %2214 = vmatprep.subr.mxu0 0.0
    %2215 = vmatpush1.msra.mxu0 0.0
    %2216 = vmatprep.subr.mxu0 0.0
    %2217 = vmatpush1.msra.mxu0 0.0
    %2218 = vmatprep.subr.mxu0 0.0
    %2219 = vmatpush1.msra.mxu0 0.0
    %2220 = vmatprep.subr.mxu0 0.0
    %2221 = vmatpush1.msra.mxu0 0.0
    %2222 = vmatprep.subr.mxu0 0.0
    %2223 = vmatpush1.msra.mxu0 0.0
    %2224 = vmatprep.subr.mxu0 0.0
    %2225 = vmatpush1.msra.mxu0 0.0
    %2226 = vmatprep.subr.mxu0 0.0
    %2227 = vmatpush1.msra.mxu0 0.0
    %2228 = vmatprep.subr.mxu0 0.0
    %2229 = vmatpush1.msra.mxu0 0.0
    %2230 = vmatprep.subr.mxu0 0.0
    %2231 = vmatpush1.msra.mxu0 0.0
    %2232 = vmatprep.subr.mxu0 0.0
    %2233 = vmatpush1.msra.mxu0 0.0
    %2234 = vmatprep.subr.mxu0 0.0
    %2235 = vmatpush1.msra.mxu0 0.0
    %2236 = vmatprep.subr.mxu0 0.0
    %2237 = vmatpush1.msra.mxu0 0.0
    %2238 = vmatprep.subr.mxu0 0.0
    %2239 = vmatpush1.msra.mxu0 0.0
    %2240 = vmatprep.subr.mxu0 0.0
    %2241 = vmatpush1.msra.mxu0 0.0
    %2242 = vmatprep.subr.mxu0 0.0
    %2243 = vmatpush1.msra.mxu0 0.0
    %2244 = vmatprep.subr.mxu0 0.0
    %2245 = vmatpush1.msra.mxu0 0.0
    %2246 = vmatprep.subr.mxu0 0.0
    %2247 = vmatpush1.msra.mxu0 0.0
    %2248 = vmatprep.subr.mxu0 0.0
    %2249 = vmatpush1.msra.mxu0 0.0
    %2250 = vmatprep.subr.mxu0 0.0
    %2251 = vmatpush1.msra.mxu0 0.0
    %2252 = vmatprep.subr.mxu0 0.0
    %2253 = vmatpush1.msra.mxu0 0.0
    %2254 = vmatprep.subr.mxu0 0.0
    %2255 = vmatpush1.msra.mxu0 0.0
    %2256 = vmatprep.subr.mxu0 0.0
    %2257 = vmatpush1.msra.mxu0 0.0
    %2258 = vmatprep.subr.mxu0 0.0
    %2259 = vmatpush1.msra.mxu0 0.0
    %2260 = vmatprep.subr.mxu0 0.0
    %2261 = vmatpush1.msra.mxu0 0.0
    %2262 = vmatprep.subr.mxu0 0.0
    %2263 = vmatpush1.msra.mxu0 0.0
    %2264 = vmatprep.subr.mxu0 0.0
    %2265 = vmatpush1.msra.mxu0 0.0
    %2266 = vmatprep.subr.mxu0 0.0
    %2267 = vmatpush1.msra.mxu0 0.0
    %2268 = vmatprep.subr.mxu0 0.0
    %2269 = vmatpush1.msra.mxu0 0.0
    %2270 = vmatprep.mubr.f32.mxu0 0.0
    %2271 = vmatmul.mubr.f32.gmra.mrb[0].mxu0 %v2108
    %v2272 = vpop.f32.mrb[0].mxu0
    %v2273 = vadd.f32 %v70, %v2272
    %v2274 = vpop.f32.mrb[0].mxu0
    %2275 = vmatprep.mubr.f32.mxu0 0.0
    %2276 = vmatmul.mubr.f32.gmra.mrb[0].mxu0 %v2111
    %v2277 = vpop.f32.mrb[0].mxu0
    %v2278 = vadd.f32 %v70, %v2277
    %v2279 = vpop.f32.mrb[0].mxu0
    %2280 = vmatprep.mubr.f32.mxu0 0.0
    %2281 = vmatmul.mubr.f32.gmra.mrb[0].mxu0 %v2114
    %v2282 = vpop.f32.mrb[0].mxu0
    %v2283 = vadd.f32 %v70, %v2282
    %v2284 = vpop.f32.mrb[0].mxu0
    %2285 = vmatprep.mubr.f32.mxu0 0.0
    %2286 = vmatmul.mubr.f32.gmra.mrb[0].mxu0 %v2117
    %v2287 = vpop.f32.mrb[0].mxu0
    %v2288 = vadd.f32 %v70, %v2287
    %v2289 = vpop.f32.mrb[0].mxu0
    %2290 = vmatprep.mubr.f32.mxu0 0.0
    %2291 = vmatmul.mubr.f32.gmra.mrb[0].mxu0 %v2120
    %v2292 = vpop.f32.mrb[0].mxu0
    %v2293 = vadd.f32 %v70, %v2292
    %v2294 = vpop.f32.mrb[0].mxu0
    %2295 = vmatprep.mubr.f32.mxu0 0.0
    %2296 = vmatmul.mubr.f32.gmra.mrb[0].mxu0 %v2123
    %v2297 = vpop.f32.mrb[0].mxu0
    %v2298 = vadd.f32 %v70, %v2297
    %v2299 = vpop.f32.mrb[0].mxu0
    %2300 = vmatprep.mubr.f32.mxu0 0.0
    %2301 = vmatmul.mubr.f32.gmra.mrb[0].mxu0 %v2126
    %v2302 = vpop.f32.mrb[0].mxu0
    %v2303 = vadd.f32 %v70, %v2302
    %v2304 = vpop.f32.mrb[0].mxu0
    %2305 = vmatprep.mubr.f32.mxu0 0.0
    %2306 = vmatmul.mubr.f32.gmra.mrb[0].mxu0 %v2129
    %v2307 = vpop.f32.mrb[0].mxu0
    %v2308 = vadd.f32 %v70, %v2307
    %v2309 = vpop.f32.mrb[0].mxu0
    %2310 = vmatprep.mubr.f32.mxu0 0.0
    %2311 = vmatmul.mubr.f32.gmra.mrb[0].mxu0 %v2132
    %v2312 = vpop.f32.mrb[0].mxu0
    %v2313 = vadd.f32 %v70, %v2312
    %v2314 = vpop.f32.mrb[0].mxu0
    %2315 = vmatprep.mubr.f32.mxu0 0.0
    %2316 = vmatmul.mubr.f32.gmra.mrb[0].mxu0 %v2135
    %v2317 = vpop.f32.mrb[0].mxu0
    %v2318 = vadd.f32 %v70, %v2317
    %v2319 = vpop.f32.mrb[0].mxu0
    %2320 = vmatprep.mubr.f32.mxu0 0.0
    %2321 = vmatmul.mubr.f32.gmra.mrb[0].mxu0 %v2138
    %v2322 = vpop.f32.mrb[0].mxu0
    %v2323 = vadd.f32 %v70, %v2322
    %v2324 = vpop.f32.mrb[0].mxu0
    %2325 = vmatprep.mubr.f32.mxu0 0.0
    %2326 = vmatmul.mubr.f32.gmra.mrb[0].mxu0 %v2141
    %v2327 = vpop.f32.mrb[0].mxu0
    %v2328 = vadd.f32 %v70, %v2327
    %v2329 = vpop.f32.mrb[0].mxu0
    %2330 = vmatprep.mubr.f32.mxu0 0.0
    %2331 = vmatmul.mubr.f32.gmra.mrb[0].mxu0 %v2144
    %v2332 = vpop.f32.mrb[0].mxu0
    %v2333 = vadd.f32 %v70, %v2332
    %v2334 = vpop.f32.mrb[0].mxu0
    %2335 = vmatprep.mubr.f32.mxu0 0.0
    %2336 = vmatmul.mubr.f32.gmra.mrb[0].mxu0 %v2147
    %v2337 = vpop.f32.mrb[0].mxu0
    %v2338 = vadd.f32 %v70, %v2337
    %v2339 = vpop.f32.mrb[0].mxu0
    %2340 = vmatprep.mubr.f32.mxu0 0.0
    %2341 = vmatmul.mubr.f32.gmra.mrb[0].mxu0 %v2150
    %v2342 = vpop.f32.mrb[0].mxu0
    %v2343 = vadd.f32 %v70, %v2342
    %v2344 = vpop.f32.mrb[0].mxu0
    %2345 = vmatprep.mubr.f32.mxu0 0.0
    %2346 = vmatmul.mubr.f32.gmra.mrb[0].mxu0 %v2153
    %v2347 = vpop.f32.mrb[0].mxu0
    %v2348 = vadd.f32 %v70, %v2347
    %v2349 = vpop.f32.mrb[0].mxu0
    %2350 = vmatprep.mubr.f32.mxu0 0.0
    %2351 = vmatmul.mubr.f32.gmra.mrb[0].mxu0 %v2156
    %v2352 = vpop.f32.mrb[0].mxu0
    %v2353 = vadd.f32 %v70, %v2352
    %v2354 = vpop.f32.mrb[0].mxu0
    %2355 = vmatprep.mubr.f32.mxu0 0.0
    %2356 = vmatmul.mubr.f32.gmra.mrb[0].mxu0 %v2159
    %v2357 = vpop.f32.mrb[0].mxu0
    %v2358 = vadd.f32 %v70, %v2357
    %v2359 = vpop.f32.mrb[0].mxu0
    %2360 = vmatprep.mubr.f32.mxu0 0.0
    %2361 = vmatmul.mubr.f32.gmra.mrb[0].mxu0 %v2162
    %v2362 = vpop.f32.mrb[0].mxu0
    %v2363 = vadd.f32 %v70, %v2362
    %v2364 = vpop.f32.mrb[0].mxu0
    %2365 = vmatprep.mubr.f32.mxu0 0.0
    %2366 = vmatmul.mubr.f32.gmra.mrb[0].mxu0 %v2165
    %v2367 = vpop.f32.mrb[0].mxu0
    %v2368 = vadd.f32 %v70, %v2367
    %v2369 = vpop.f32.mrb[0].mxu0
    %2370 = vmatprep.mubr.f32.mxu0 0.0
    %2371 = vmatmul.mubr.f32.gmra.mrb[0].mxu0 %v2168
    %v2372 = vpop.f32.mrb[0].mxu0
    %v2373 = vadd.f32 %v70, %v2372
    %v2374 = vpop.f32.mrb[0].mxu0
    %2375 = vmatprep.mubr.f32.mxu0 0.0
    %2376 = vmatmul.mubr.f32.gmra.mrb[0].mxu0 %v2171
    %v2377 = vpop.f32.mrb[0].mxu0
    %v2378 = vadd.f32 %v70, %v2377
    %v2379 = vpop.f32.mrb[0].mxu0
    %2380 = vmatprep.mubr.f32.mxu0 0.0
    %2381 = vmatmul.mubr.f32.gmra.mrb[0].mxu0 %v2174
    %v2382 = vpop.f32.mrb[0].mxu0
    %v2383 = vadd.f32 %v70, %v2382
    %v2384 = vpop.f32.mrb[0].mxu0
    %2385 = vmatprep.mubr.f32.mxu0 0.0
    %2386 = vmatmul.mubr.f32.gmra.mrb[0].mxu0 %v2177
    %v2387 = vpop.f32.mrb[0].mxu0
    %v2388 = vadd.f32 %v70, %v2387
    %v2389 = vpop.f32.mrb[0].mxu0
    %2390 = vmatprep.mubr.f32.mxu0 0.0
    %2391 = vmatmul.mubr.f32.gmra.mrb[0].mxu0 %v2180
    %v2392 = vpop.f32.mrb[0].mxu0
    %v2393 = vadd.f32 %v70, %v2392
    %v2394 = vpop.f32.mrb[0].mxu0
    %2395 = vmatprep.mubr.f32.mxu0 0.0
    %2396 = vmatmul.mubr.f32.gmra.mrb[0].mxu0 %v2183
    %v2397 = vpop.f32.mrb[0].mxu0
    %v2398 = vadd.f32 %v70, %v2397
    %v2399 = vpop.f32.mrb[0].mxu0
    %2400 = vmatprep.mubr.f32.mxu0 0.0
    %2401 = vmatmul.mubr.f32.gmra.mrb[0].mxu0 %v2186
    %v2402 = vpop.f32.mrb[0].mxu0
    %v2403 = vadd.f32 %v70, %v2402
    %v2404 = vpop.f32.mrb[0].mxu0
    %2405 = vmatprep.mubr.f32.mxu0 0.0
    %2406 = vmatmul.mubr.f32.gmra.mrb[0].mxu0 %v2189
    %v2407 = vpop.f32.mrb[0].mxu0
    %v2408 = vadd.f32 %v70, %v2407
    %v2409 = vpop.f32.mrb[0].mxu0
    %2410 = vmatprep.mubr.f32.mxu0 0.0
    %2411 = vmatmul.mubr.f32.gmra.mrb[0].mxu0 %v2192
    %v2412 = vpop.f32.mrb[0].mxu0
    %v2413 = vadd.f32 %v70, %v2412
    %v2414 = vpop.f32.mrb[0].mxu0
    %2415 = vmatprep.mubr.f32.mxu0 0.0
    %2416 = vmatmul.mubr.f32.gmra.mrb[0].mxu0 %v2195
    %v2417 = vpop.f32.mrb[0].mxu0
    %v2418 = vadd.f32 %v70, %v2417
    %v2419 = vpop.f32.mrb[0].mxu0
    %2420 = vmatprep.mubr.f32.mxu0 0.0
    %2421 = vmatmul.mubr.f32.gmra.mrb[0].mxu0 %v2198
    %v2422 = vpop.f32.mrb[0].mxu0
    %v2423 = vadd.f32 %v70, %v2422
    %v2424 = vpop.f32.mrb[0].mxu0
    %2425 = vmatprep.mubr.f32.mxu0 0.0
    %2426 = vmatmul.mubr.f32.gmra.mrb[0].mxu0 %v2201
    %v2427 = vpop.f32.mrb[0].mxu0
    %v2428 = vadd.f32 %v70, %v2427
    %v2429 = vpop.f32.mrb[0].mxu0
    %2430 = vdwg.mxu0
    %v2431 = vmax.f32 %v2273, 0.0
    %v2432 = vmax.f32 %v2278, 0.0
    %v2433 = vmax.f32 %v2283, 0.0
    %v2434 = vmax.f32 %v2288, 0.0
    %v2435 = vmax.f32 %v2293, 0.0
    %v2436 = vmax.f32 %v2298, 0.0
    %v2437 = vmax.f32 %v2303, 0.0
    %v2438 = vmax.f32 %v2308, 0.0
    %v2439 = vmax.f32 %v2313, 0.0
    %v2440 = vmax.f32 %v2318, 0.0
    %v2441 = vmax.f32 %v2323, 0.0
    %v2442 = vmax.f32 %v2328, 0.0
    %v2443 = vmax.f32 %v2333, 0.0
    %v2444 = vmax.f32 %v2338, 0.0
    %v2445 = vmax.f32 %v2343, 0.0
    %v2446 = vmax.f32 %v2348, 0.0
    %v2447 = vmax.f32 %v2353, 0.0
    %v2448 = vmax.f32 %v2358, 0.0
    %v2449 = vmax.f32 %v2363, 0.0
    %v2450 = vmax.f32 %v2368, 0.0
    %v2451 = vmax.f32 %v2373, 0.0
    %v2452 = vmax.f32 %v2378, 0.0
    %v2453 = vmax.f32 %v2383, 0.0
    %v2454 = vmax.f32 %v2388, 0.0
    %v2455 = vmax.f32 %v2393, 0.0
    %v2456 = vmax.f32 %v2398, 0.0
    %v2457 = vmax.f32 %v2403, 0.0
    %v2458 = vmax.f32 %v2408, 0.0
    %v2459 = vmax.f32 %v2413, 0.0
    %v2460 = vmax.f32 %v2418, 0.0
    %v2461 = vmax.f32 %v2423, 0.0
    %v2462 = vmax.f32 %v2428, 0.0
    %v2463 = vmax.f32 %v2431, %v2433
    %v2464 = vmax.f32 %v2432, %v2434
    %v2465 = vmax.f32 %v2435, %v2437
    %v2466 = vmax.f32 %v2436, %v2438
    %v2467 = vmax.f32 %v2439, %v2441
    %v2468 = vmax.f32 %v2440, %v2442
    %v2469 = vmax.f32 %v2443, %v2445
    %v2470 = vmax.f32 %v2444, %v2446
    %v2471 = vmax.f32 %v2447, %v2449
    %v2472 = vmax.f32 %v2448, %v2450
    %v2473 = vmax.f32 %v2451, %v2453
    %v2474 = vmax.f32 %v2452, %v2454
    %v2475 = vmax.f32 %v2455, %v2457
    %v2476 = vmax.f32 %v2456, %v2458
    %v2477 = vmax.f32 %v2459, %v2461
    %v2478 = vmax.f32 %v2460, %v2462
    %v2495 = vcombine.high %v2463, %v2463
    %v2497 = vunpack.c.l.s4 1983009808
    %v2498 = vunpack.c.0.s8 %v2497
    %v2499 = vlaneseq
    %v2500 = vshrl.u32 %v2499, 7
    %v2501 = vsub.s32 %v2498, %v2500
    %v2502 = vrot.slane %v2463, %v2501
    %v2504 = vunpack.c.l.s4 1983009808
    %v2505 = vunpack.c.0.s8 %v2504
    %v2506 = vlaneseq
    %v2507 = vshrl.u32 %v2506, 7
    %v2508 = vsub.s32 %v2505, %v2507
    %v2509 = vrot.slane %v2495, %v2508
    %v2510 = vcombine.high %v2502, %v2502
    %v2511 = vcombine.high %v2509, %v2509
    %v2512 = vcombine.high %v2464, %v2464
    %v2514 = vunpack.c.l.s4 1983009808
    %v2515 = vunpack.c.0.s8 %v2514
    %v2516 = vlaneseq
    %v2517 = vshrl.u32 %v2516, 7
    %v2518 = vsub.s32 %v2515, %v2517
    %v2519 = vrot.slane %v2464, %v2518
    %v2521 = vunpack.c.l.s4 1983009808
    %v2522 = vunpack.c.0.s8 %v2521
    %v2523 = vlaneseq
    %v2524 = vshrl.u32 %v2523, 7
    %v2525 = vsub.s32 %v2522, %v2524
    %v2526 = vrot.slane %v2512, %v2525
    %v2527 = vcombine.high %v2519, %v2519
    %v2528 = vcombine.high %v2526, %v2526
    %v2529 = vcombine.high %v2465, %v2465
    %v2531 = vunpack.c.l.s4 1983009808
    %v2532 = vunpack.c.0.s8 %v2531
    %v2533 = vlaneseq
    %v2534 = vshrl.u32 %v2533, 7
    %v2535 = vsub.s32 %v2532, %v2534
    %v2536 = vrot.slane %v2465, %v2535
    %v2538 = vunpack.c.l.s4 1983009808
    %v2539 = vunpack.c.0.s8 %v2538
    %v2540 = vlaneseq
    %v2541 = vshrl.u32 %v2540, 7
    %v2542 = vsub.s32 %v2539, %v2541
    %v2543 = vrot.slane %v2529, %v2542
    %v2544 = vcombine.high %v2536, %v2536
    %v2545 = vcombine.high %v2543, %v2543
    %v2546 = vcombine.high %v2466, %v2466
    %v2548 = vunpack.c.l.s4 1983009808
    %v2549 = vunpack.c.0.s8 %v2548
    %v2550 = vlaneseq
    %v2551 = vshrl.u32 %v2550, 7
    %v2552 = vsub.s32 %v2549, %v2551
    %v2553 = vrot.slane %v2466, %v2552
    %v2555 = vunpack.c.l.s4 1983009808
    %v2556 = vunpack.c.0.s8 %v2555
    %v2557 = vlaneseq
    %v2558 = vshrl.u32 %v2557, 7
    %v2559 = vsub.s32 %v2556, %v2558
    %v2560 = vrot.slane %v2546, %v2559
    %v2561 = vcombine.high %v2553, %v2553
    %v2562 = vcombine.high %v2560, %v2560
    %v2563 = vcombine.high %v2467, %v2467
    %v2565 = vunpack.c.l.s4 1983009808
    %v2566 = vunpack.c.0.s8 %v2565
    %v2567 = vlaneseq
    %v2568 = vshrl.u32 %v2567, 7
    %v2569 = vsub.s32 %v2566, %v2568
    %v2570 = vrot.slane %v2467, %v2569
    %v2572 = vunpack.c.l.s4 1983009808
    %v2573 = vunpack.c.0.s8 %v2572
    %v2574 = vlaneseq
    %v2575 = vshrl.u32 %v2574, 7
    %v2576 = vsub.s32 %v2573, %v2575
    %v2577 = vrot.slane %v2563, %v2576
    %v2578 = vcombine.high %v2570, %v2570
    %v2579 = vcombine.high %v2577, %v2577
    %v2580 = vcombine.high %v2468, %v2468
    %v2582 = vunpack.c.l.s4 1983009808
    %v2583 = vunpack.c.0.s8 %v2582
    %v2584 = vlaneseq
    %v2585 = vshrl.u32 %v2584, 7
    %v2586 = vsub.s32 %v2583, %v2585
    %v2587 = vrot.slane %v2468, %v2586
    %v2589 = vunpack.c.l.s4 1983009808
    %v2590 = vunpack.c.0.s8 %v2589
    %v2591 = vlaneseq
    %v2592 = vshrl.u32 %v2591, 7
    %v2593 = vsub.s32 %v2590, %v2592
    %v2594 = vrot.slane %v2580, %v2593
    %v2595 = vcombine.high %v2587, %v2587
    %v2596 = vcombine.high %v2594, %v2594
    %v2597 = vcombine.high %v2469, %v2469
    %v2599 = vunpack.c.l.s4 1983009808
    %v2600 = vunpack.c.0.s8 %v2599
    %v2601 = vlaneseq
    %v2602 = vshrl.u32 %v2601, 7
    %v2603 = vsub.s32 %v2600, %v2602
    %v2604 = vrot.slane %v2469, %v2603
    %v2606 = vunpack.c.l.s4 1983009808
    %v2607 = vunpack.c.0.s8 %v2606
    %v2608 = vlaneseq
    %v2609 = vshrl.u32 %v2608, 7
    %v2610 = vsub.s32 %v2607, %v2609
    %v2611 = vrot.slane %v2597, %v2610
    %v2612 = vcombine.high %v2604, %v2604
    %v2613 = vcombine.high %v2611, %v2611
    %v2614 = vcombine.high %v2470, %v2470
    %v2616 = vunpack.c.l.s4 1983009808
    %v2617 = vunpack.c.0.s8 %v2616
    %v2618 = vlaneseq
    %v2619 = vshrl.u32 %v2618, 7
    %v2620 = vsub.s32 %v2617, %v2619
    %v2621 = vrot.slane %v2470, %v2620
    %v2623 = vunpack.c.l.s4 1983009808
    %v2624 = vunpack.c.0.s8 %v2623
    %v2625 = vlaneseq
    %v2626 = vshrl.u32 %v2625, 7
    %v2627 = vsub.s32 %v2624, %v2626
    %v2628 = vrot.slane %v2614, %v2627
    %v2629 = vcombine.high %v2621, %v2621
    %v2630 = vcombine.high %v2628, %v2628
    %v2631 = vcombine.high %v2471, %v2471
    %v2633 = vunpack.c.l.s4 1983009808
    %v2634 = vunpack.c.0.s8 %v2633
    %v2635 = vlaneseq
    %v2636 = vshrl.u32 %v2635, 7
    %v2637 = vsub.s32 %v2634, %v2636
    %v2638 = vrot.slane %v2471, %v2637
    %v2640 = vunpack.c.l.s4 1983009808
    %v2641 = vunpack.c.0.s8 %v2640
    %v2642 = vlaneseq
    %v2643 = vshrl.u32 %v2642, 7
    %v2644 = vsub.s32 %v2641, %v2643
    %v2645 = vrot.slane %v2631, %v2644
    %v2646 = vcombine.high %v2638, %v2638
    %v2647 = vcombine.high %v2645, %v2645
    %v2648 = vcombine.high %v2472, %v2472
    %v2650 = vunpack.c.l.s4 1983009808
    %v2651 = vunpack.c.0.s8 %v2650
    %v2652 = vlaneseq
    %v2653 = vshrl.u32 %v2652, 7
    %v2654 = vsub.s32 %v2651, %v2653
    %v2655 = vrot.slane %v2472, %v2654
    %v2657 = vunpack.c.l.s4 1983009808
    %v2658 = vunpack.c.0.s8 %v2657
    %v2659 = vlaneseq
    %v2660 = vshrl.u32 %v2659, 7
    %v2661 = vsub.s32 %v2658, %v2660
    %v2662 = vrot.slane %v2648, %v2661
    %v2663 = vcombine.high %v2655, %v2655
    %v2664 = vcombine.high %v2662, %v2662
    %v2665 = vcombine.high %v2473, %v2473
    %v2667 = vunpack.c.l.s4 1983009808
    %v2668 = vunpack.c.0.s8 %v2667
    %v2669 = vlaneseq
    %v2670 = vshrl.u32 %v2669, 7
    %v2671 = vsub.s32 %v2668, %v2670
    %v2672 = vrot.slane %v2473, %v2671
    %v2674 = vunpack.c.l.s4 1983009808
    %v2675 = vunpack.c.0.s8 %v2674
    %v2676 = vlaneseq
    %v2677 = vshrl.u32 %v2676, 7
    %v2678 = vsub.s32 %v2675, %v2677
    %v2679 = vrot.slane %v2665, %v2678
    %v2680 = vcombine.high %v2672, %v2672
    %v2681 = vcombine.high %v2679, %v2679
    %v2682 = vcombine.high %v2474, %v2474
    %v2684 = vunpack.c.l.s4 1983009808
    %v2685 = vunpack.c.0.s8 %v2684
    %v2686 = vlaneseq
    %v2687 = vshrl.u32 %v2686, 7
    %v2688 = vsub.s32 %v2685, %v2687
    %v2689 = vrot.slane %v2474, %v2688
    %v2691 = vunpack.c.l.s4 1983009808
    %v2692 = vunpack.c.0.s8 %v2691
    %v2693 = vlaneseq
    %v2694 = vshrl.u32 %v2693, 7
    %v2695 = vsub.s32 %v2692, %v2694
    %v2696 = vrot.slane %v2682, %v2695
    %v2697 = vcombine.high %v2689, %v2689
    %v2698 = vcombine.high %v2696, %v2696
    %v2699 = vcombine.high %v2475, %v2475
    %v2701 = vunpack.c.l.s4 1983009808
    %v2702 = vunpack.c.0.s8 %v2701
    %v2703 = vlaneseq
    %v2704 = vshrl.u32 %v2703, 7
    %v2705 = vsub.s32 %v2702, %v2704
    %v2706 = vrot.slane %v2475, %v2705
    %v2708 = vunpack.c.l.s4 1983009808
    %v2709 = vunpack.c.0.s8 %v2708
    %v2710 = vlaneseq
    %v2711 = vshrl.u32 %v2710, 7
    %v2712 = vsub.s32 %v2709, %v2711
    %v2713 = vrot.slane %v2699, %v2712
    %v2714 = vcombine.high %v2706, %v2706
    %v2715 = vcombine.high %v2713, %v2713
    %v2716 = vcombine.high %v2476, %v2476
    %v2718 = vunpack.c.l.s4 1983009808
    %v2719 = vunpack.c.0.s8 %v2718
    %v2720 = vlaneseq
    %v2721 = vshrl.u32 %v2720, 7
    %v2722 = vsub.s32 %v2719, %v2721
    %v2723 = vrot.slane %v2476, %v2722
    %v2725 = vunpack.c.l.s4 1983009808
    %v2726 = vunpack.c.0.s8 %v2725
    %v2727 = vlaneseq
    %v2728 = vshrl.u32 %v2727, 7
    %v2729 = vsub.s32 %v2726, %v2728
    %v2730 = vrot.slane %v2716, %v2729
    %v2731 = vcombine.high %v2723, %v2723
    %v2732 = vcombine.high %v2730, %v2730
    %v2733 = vcombine.high %v2477, %v2477
    %v2735 = vunpack.c.l.s4 1983009808
    %v2736 = vunpack.c.0.s8 %v2735
    %v2737 = vlaneseq
    %v2738 = vshrl.u32 %v2737, 7
    %v2739 = vsub.s32 %v2736, %v2738
    %v2740 = vrot.slane %v2477, %v2739
    %v2742 = vunpack.c.l.s4 1983009808
    %v2743 = vunpack.c.0.s8 %v2742
    %v2744 = vlaneseq
    %v2745 = vshrl.u32 %v2744, 7
    %v2746 = vsub.s32 %v2743, %v2745
    %v2747 = vrot.slane %v2733, %v2746
    %v2748 = vcombine.high %v2740, %v2740
    %v2749 = vcombine.high %v2747, %v2747
    %v2750 = vcombine.high %v2478, %v2478
    %v2752 = vunpack.c.l.s4 1983009808
    %v2753 = vunpack.c.0.s8 %v2752
    %v2754 = vlaneseq
    %v2755 = vshrl.u32 %v2754, 7
    %v2756 = vsub.s32 %v2753, %v2755
    %v2757 = vrot.slane %v2478, %v2756
    %v2759 = vunpack.c.l.s4 1983009808
    %v2760 = vunpack.c.0.s8 %v2759
    %v2761 = vlaneseq
    %v2762 = vshrl.u32 %v2761, 7
    %v2763 = vsub.s32 %v2760, %v2762
    %v2764 = vrot.slane %v2750, %v2763
    %v2765 = vcombine.high %v2757, %v2757
    %v2766 = vcombine.high %v2764, %v2764
    %v2831 = vsel %vm798, %v2502, -inf
    %v2832 = vrot.slane %v2831, 4
    %v2833 = vmax.f32 %v2831, %v2832
    %v2834 = vrot.slane %v2833, 2
    %v2835 = vmax.f32 %v2833, %v2834
    %v2836 = vrot.slane %v2835, 1
    %v2837 = vmax.f32 %v2835, %v2836
    %v2838 = vsel %vm798, %v2510, -inf
    %v2839 = vrot.slane %v2838, 4
    %v2840 = vmax.f32 %v2838, %v2839
    %v2841 = vrot.slane %v2840, 2
    %v2842 = vmax.f32 %v2840, %v2841
    %v2843 = vrot.slane %v2842, 1
    %v2844 = vmax.f32 %v2842, %v2843
    %v2845 = vsel %vm798, %v2509, -inf
    %v2846 = vrot.slane %v2845, 4
    %v2847 = vmax.f32 %v2845, %v2846
    %v2848 = vrot.slane %v2847, 2
    %v2849 = vmax.f32 %v2847, %v2848
    %v2850 = vrot.slane %v2849, 1
    %v2851 = vmax.f32 %v2849, %v2850
    %v2852 = vsel %vm798, %v2511, -inf
    %v2853 = vrot.slane %v2852, 4
    %v2854 = vmax.f32 %v2852, %v2853
    %v2855 = vrot.slane %v2854, 2
    %v2856 = vmax.f32 %v2854, %v2855
    %v2857 = vrot.slane %v2856, 1
    %v2858 = vmax.f32 %v2856, %v2857
    %v2859 = vsel %vm798, %v2519, -inf
    %v2860 = vrot.slane %v2859, 4
    %v2861 = vmax.f32 %v2859, %v2860
    %v2862 = vrot.slane %v2861, 2
    %v2863 = vmax.f32 %v2861, %v2862
    %v2864 = vrot.slane %v2863, 1
    %v2865 = vmax.f32 %v2863, %v2864
    %v2866 = vsel %vm798, %v2527, -inf
    %v2867 = vrot.slane %v2866, 4
    %v2868 = vmax.f32 %v2866, %v2867
    %v2869 = vrot.slane %v2868, 2
    %v2870 = vmax.f32 %v2868, %v2869
    %v2871 = vrot.slane %v2870, 1
    %v2872 = vmax.f32 %v2870, %v2871
    %v2873 = vsel %vm798, %v2526, -inf
    %v2874 = vrot.slane %v2873, 4
    %v2875 = vmax.f32 %v2873, %v2874
    %v2876 = vrot.slane %v2875, 2
    %v2877 = vmax.f32 %v2875, %v2876
    %v2878 = vrot.slane %v2877, 1
    %v2879 = vmax.f32 %v2877, %v2878
    %v2880 = vsel %vm798, %v2528, -inf
    %v2881 = vrot.slane %v2880, 4
    %v2882 = vmax.f32 %v2880, %v2881
    %v2883 = vrot.slane %v2882, 2
    %v2884 = vmax.f32 %v2882, %v2883
    %v2885 = vrot.slane %v2884, 1
    %v2886 = vmax.f32 %v2884, %v2885
    %v2887 = vsel %vm798, %v2536, -inf
    %v2888 = vrot.slane %v2887, 4
    %v2889 = vmax.f32 %v2887, %v2888
    %v2890 = vrot.slane %v2889, 2
    %v2891 = vmax.f32 %v2889, %v2890
    %v2892 = vrot.slane %v2891, 1
    %v2893 = vmax.f32 %v2891, %v2892
    %v2894 = vsel %vm798, %v2544, -inf
    %v2895 = vrot.slane %v2894, 4
    %v2896 = vmax.f32 %v2894, %v2895
    %v2897 = vrot.slane %v2896, 2
    %v2898 = vmax.f32 %v2896, %v2897
    %v2899 = vrot.slane %v2898, 1
    %v2900 = vmax.f32 %v2898, %v2899
    %v2901 = vsel %vm798, %v2543, -inf
    %v2902 = vrot.slane %v2901, 4
    %v2903 = vmax.f32 %v2901, %v2902
    %v2904 = vrot.slane %v2903, 2
    %v2905 = vmax.f32 %v2903, %v2904
    %v2906 = vrot.slane %v2905, 1
    %v2907 = vmax.f32 %v2905, %v2906
    %v2908 = vsel %vm798, %v2545, -inf
    %v2909 = vrot.slane %v2908, 4
    %v2910 = vmax.f32 %v2908, %v2909
    %v2911 = vrot.slane %v2910, 2
    %v2912 = vmax.f32 %v2910, %v2911
    %v2913 = vrot.slane %v2912, 1
    %v2914 = vmax.f32 %v2912, %v2913
    %v2915 = vsel %vm798, %v2553, -inf
    %v2916 = vrot.slane %v2915, 4
    %v2917 = vmax.f32 %v2915, %v2916
    %v2918 = vrot.slane %v2917, 2
    %v2919 = vmax.f32 %v2917, %v2918
    %v2920 = vrot.slane %v2919, 1
    %v2921 = vmax.f32 %v2919, %v2920
    %v2922 = vsel %vm798, %v2561, -inf
    %v2923 = vrot.slane %v2922, 4
    %v2924 = vmax.f32 %v2922, %v2923
    %v2925 = vrot.slane %v2924, 2
    %v2926 = vmax.f32 %v2924, %v2925
    %v2927 = vrot.slane %v2926, 1
    %v2928 = vmax.f32 %v2926, %v2927
    %v2929 = vsel %vm798, %v2560, -inf
    %v2930 = vrot.slane %v2929, 4
    %v2931 = vmax.f32 %v2929, %v2930
    %v2932 = vrot.slane %v2931, 2
    %v2933 = vmax.f32 %v2931, %v2932
    %v2934 = vrot.slane %v2933, 1
    %v2935 = vmax.f32 %v2933, %v2934
    %v2936 = vsel %vm798, %v2562, -inf
    %v2937 = vrot.slane %v2936, 4
    %v2938 = vmax.f32 %v2936, %v2937
    %v2939 = vrot.slane %v2938, 2
    %v2940 = vmax.f32 %v2938, %v2939
    %v2941 = vrot.slane %v2940, 1
    %v2942 = vmax.f32 %v2940, %v2941
    %v2943 = vsel %vm798, %v2570, -inf
    %v2944 = vrot.slane %v2943, 4
    %v2945 = vmax.f32 %v2943, %v2944
    %v2946 = vrot.slane %v2945, 2
    %v2947 = vmax.f32 %v2945, %v2946
    %v2948 = vrot.slane %v2947, 1
    %v2949 = vmax.f32 %v2947, %v2948
    %v2950 = vsel %vm798, %v2578, -inf
    %v2951 = vrot.slane %v2950, 4
    %v2952 = vmax.f32 %v2950, %v2951
    %v2953 = vrot.slane %v2952, 2
    %v2954 = vmax.f32 %v2952, %v2953
    %v2955 = vrot.slane %v2954, 1
    %v2956 = vmax.f32 %v2954, %v2955
    %v2957 = vsel %vm798, %v2577, -inf
    %v2958 = vrot.slane %v2957, 4
    %v2959 = vmax.f32 %v2957, %v2958
    %v2960 = vrot.slane %v2959, 2
    %v2961 = vmax.f32 %v2959, %v2960
    %v2962 = vrot.slane %v2961, 1
    %v2963 = vmax.f32 %v2961, %v2962
    %v2964 = vsel %vm798, %v2579, -inf
    %v2965 = vrot.slane %v2964, 4
    %v2966 = vmax.f32 %v2964, %v2965
    %v2967 = vrot.slane %v2966, 2
    %v2968 = vmax.f32 %v2966, %v2967
    %v2969 = vrot.slane %v2968, 1
    %v2970 = vmax.f32 %v2968, %v2969
    %v2971 = vsel %vm798, %v2587, -inf
    %v2972 = vrot.slane %v2971, 4
    %v2973 = vmax.f32 %v2971, %v2972
    %v2974 = vrot.slane %v2973, 2
    %v2975 = vmax.f32 %v2973, %v2974
    %v2976 = vrot.slane %v2975, 1
    %v2977 = vmax.f32 %v2975, %v2976
    %v2978 = vsel %vm798, %v2595, -inf
    %v2979 = vrot.slane %v2978, 4
    %v2980 = vmax.f32 %v2978, %v2979
    %v2981 = vrot.slane %v2980, 2
    %v2982 = vmax.f32 %v2980, %v2981
    %v2983 = vrot.slane %v2982, 1
    %v2984 = vmax.f32 %v2982, %v2983
    %v2985 = vsel %vm798, %v2594, -inf
    %v2986 = vrot.slane %v2985, 4
    %v2987 = vmax.f32 %v2985, %v2986
    %v2988 = vrot.slane %v2987, 2
    %v2989 = vmax.f32 %v2987, %v2988
    %v2990 = vrot.slane %v2989, 1
    %v2991 = vmax.f32 %v2989, %v2990
    %v2992 = vsel %vm798, %v2596, -inf
    %v2993 = vrot.slane %v2992, 4
    %v2994 = vmax.f32 %v2992, %v2993
    %v2995 = vrot.slane %v2994, 2
    %v2996 = vmax.f32 %v2994, %v2995
    %v2997 = vrot.slane %v2996, 1
    %v2998 = vmax.f32 %v2996, %v2997
    %v2999 = vsel %vm798, %v2604, -inf
    %v3000 = vrot.slane %v2999, 4
    %v3001 = vmax.f32 %v2999, %v3000
    %v3002 = vrot.slane %v3001, 2
    %v3003 = vmax.f32 %v3001, %v3002
    %v3004 = vrot.slane %v3003, 1
    %v3005 = vmax.f32 %v3003, %v3004
    %v3006 = vsel %vm798, %v2612, -inf
    %v3007 = vrot.slane %v3006, 4
    %v3008 = vmax.f32 %v3006, %v3007
    %v3009 = vrot.slane %v3008, 2
    %v3010 = vmax.f32 %v3008, %v3009
    %v3011 = vrot.slane %v3010, 1
    %v3012 = vmax.f32 %v3010, %v3011
    %v3013 = vsel %vm798, %v2611, -inf
    %v3014 = vrot.slane %v3013, 4
    %v3015 = vmax.f32 %v3013, %v3014
    %v3016 = vrot.slane %v3015, 2
    %v3017 = vmax.f32 %v3015, %v3016
    %v3018 = vrot.slane %v3017, 1
    %v3019 = vmax.f32 %v3017, %v3018
    %v3020 = vsel %vm798, %v2613, -inf
    %v3021 = vrot.slane %v3020, 4
    %v3022 = vmax.f32 %v3020, %v3021
    %v3023 = vrot.slane %v3022, 2
    %v3024 = vmax.f32 %v3022, %v3023
    %v3025 = vrot.slane %v3024, 1
    %v3026 = vmax.f32 %v3024, %v3025
    %v3027 = vsel %vm798, %v2621, -inf
    %v3028 = vrot.slane %v3027, 4
    %v3029 = vmax.f32 %v3027, %v3028
    %v3030 = vrot.slane %v3029, 2
    %v3031 = vmax.f32 %v3029, %v3030
    %v3032 = vrot.slane %v3031, 1
    %v3033 = vmax.f32 %v3031, %v3032
    %v3034 = vsel %vm798, %v2629, -inf
    %v3035 = vrot.slane %v3034, 4
    %v3036 = vmax.f32 %v3034, %v3035
    %v3037 = vrot.slane %v3036, 2
    %v3038 = vmax.f32 %v3036, %v3037
    %v3039 = vrot.slane %v3038, 1
    %v3040 = vmax.f32 %v3038, %v3039
    %v3041 = vsel %vm798, %v2628, -inf
    %v3042 = vrot.slane %v3041, 4
    %v3043 = vmax.f32 %v3041, %v3042
    %v3044 = vrot.slane %v3043, 2
    %v3045 = vmax.f32 %v3043, %v3044
    %v3046 = vrot.slane %v3045, 1
    %v3047 = vmax.f32 %v3045, %v3046
    %v3048 = vsel %vm798, %v2630, -inf
    %v3049 = vrot.slane %v3048, 4
    %v3050 = vmax.f32 %v3048, %v3049
    %v3051 = vrot.slane %v3050, 2
    %v3052 = vmax.f32 %v3050, %v3051
    %v3053 = vrot.slane %v3052, 1
    %v3054 = vmax.f32 %v3052, %v3053
    %v3055 = vsel %vm798, %v2638, -inf
    %v3056 = vrot.slane %v3055, 4
    %v3057 = vmax.f32 %v3055, %v3056
    %v3058 = vrot.slane %v3057, 2
    %v3059 = vmax.f32 %v3057, %v3058
    %v3060 = vrot.slane %v3059, 1
    %v3061 = vmax.f32 %v3059, %v3060
    %v3062 = vsel %vm798, %v2646, -inf
    %v3063 = vrot.slane %v3062, 4
    %v3064 = vmax.f32 %v3062, %v3063
    %v3065 = vrot.slane %v3064, 2
    %v3066 = vmax.f32 %v3064, %v3065
    %v3067 = vrot.slane %v3066, 1
    %v3068 = vmax.f32 %v3066, %v3067
    %v3069 = vsel %vm798, %v2645, -inf
    %v3070 = vrot.slane %v3069, 4
    %v3071 = vmax.f32 %v3069, %v3070
    %v3072 = vrot.slane %v3071, 2
    %v3073 = vmax.f32 %v3071, %v3072
    %v3074 = vrot.slane %v3073, 1
    %v3075 = vmax.f32 %v3073, %v3074
    %v3076 = vsel %vm798, %v2647, -inf
    %v3077 = vrot.slane %v3076, 4
    %v3078 = vmax.f32 %v3076, %v3077
    %v3079 = vrot.slane %v3078, 2
    %v3080 = vmax.f32 %v3078, %v3079
    %v3081 = vrot.slane %v3080, 1
    %v3082 = vmax.f32 %v3080, %v3081
    %v3083 = vsel %vm798, %v2655, -inf
    %v3084 = vrot.slane %v3083, 4
    %v3085 = vmax.f32 %v3083, %v3084
    %v3086 = vrot.slane %v3085, 2
    %v3087 = vmax.f32 %v3085, %v3086
    %v3088 = vrot.slane %v3087, 1
    %v3089 = vmax.f32 %v3087, %v3088
    %v3090 = vsel %vm798, %v2663, -inf
    %v3091 = vrot.slane %v3090, 4
    %v3092 = vmax.f32 %v3090, %v3091
    %v3093 = vrot.slane %v3092, 2
    %v3094 = vmax.f32 %v3092, %v3093
    %v3095 = vrot.slane %v3094, 1
    %v3096 = vmax.f32 %v3094, %v3095
    %v3097 = vsel %vm798, %v2662, -inf
    %v3098 = vrot.slane %v3097, 4
    %v3099 = vmax.f32 %v3097, %v3098
    %v3100 = vrot.slane %v3099, 2
    %v3101 = vmax.f32 %v3099, %v3100
    %v3102 = vrot.slane %v3101, 1
    %v3103 = vmax.f32 %v3101, %v3102
    %v3104 = vsel %vm798, %v2664, -inf
    %v3105 = vrot.slane %v3104, 4
    %v3106 = vmax.f32 %v3104, %v3105
    %v3107 = vrot.slane %v3106, 2
    %v3108 = vmax.f32 %v3106, %v3107
    %v3109 = vrot.slane %v3108, 1
    %v3110 = vmax.f32 %v3108, %v3109
    %v3111 = vsel %vm798, %v2672, -inf
    %v3112 = vrot.slane %v3111, 4
    %v3113 = vmax.f32 %v3111, %v3112
    %v3114 = vrot.slane %v3113, 2
    %v3115 = vmax.f32 %v3113, %v3114
    %v3116 = vrot.slane %v3115, 1
    %v3117 = vmax.f32 %v3115, %v3116
    %v3118 = vsel %vm798, %v2680, -inf
    %v3119 = vrot.slane %v3118, 4
    %v3120 = vmax.f32 %v3118, %v3119
    %v3121 = vrot.slane %v3120, 2
    %v3122 = vmax.f32 %v3120, %v3121
    %v3123 = vrot.slane %v3122, 1
    %v3124 = vmax.f32 %v3122, %v3123
    %v3125 = vsel %vm798, %v2679, -inf
    %v3126 = vrot.slane %v3125, 4
    %v3127 = vmax.f32 %v3125, %v3126
    %v3128 = vrot.slane %v3127, 2
    %v3129 = vmax.f32 %v3127, %v3128
    %v3130 = vrot.slane %v3129, 1
    %v3131 = vmax.f32 %v3129, %v3130
    %v3132 = vsel %vm798, %v2681, -inf
    %v3133 = vrot.slane %v3132, 4
    %v3134 = vmax.f32 %v3132, %v3133
    %v3135 = vrot.slane %v3134, 2
    %v3136 = vmax.f32 %v3134, %v3135
    %v3137 = vrot.slane %v3136, 1
    %v3138 = vmax.f32 %v3136, %v3137
    %v3139 = vsel %vm798, %v2689, -inf
    %v3140 = vrot.slane %v3139, 4
    %v3141 = vmax.f32 %v3139, %v3140
    %v3142 = vrot.slane %v3141, 2
    %v3143 = vmax.f32 %v3141, %v3142
    %v3144 = vrot.slane %v3143, 1
    %v3145 = vmax.f32 %v3143, %v3144
    %v3146 = vsel %vm798, %v2697, -inf
    %v3147 = vrot.slane %v3146, 4
    %v3148 = vmax.f32 %v3146, %v3147
    %v3149 = vrot.slane %v3148, 2
    %v3150 = vmax.f32 %v3148, %v3149
    %v3151 = vrot.slane %v3150, 1
    %v3152 = vmax.f32 %v3150, %v3151
    %v3153 = vsel %vm798, %v2696, -inf
    %v3154 = vrot.slane %v3153, 4
    %v3155 = vmax.f32 %v3153, %v3154
    %v3156 = vrot.slane %v3155, 2
    %v3157 = vmax.f32 %v3155, %v3156
    %v3158 = vrot.slane %v3157, 1
    %v3159 = vmax.f32 %v3157, %v3158
    %v3160 = vsel %vm798, %v2698, -inf
    %v3161 = vrot.slane %v3160, 4
    %v3162 = vmax.f32 %v3160, %v3161
    %v3163 = vrot.slane %v3162, 2
    %v3164 = vmax.f32 %v3162, %v3163
    %v3165 = vrot.slane %v3164, 1
    %v3166 = vmax.f32 %v3164, %v3165
    %v3167 = vsel %vm798, %v2706, -inf
    %v3168 = vrot.slane %v3167, 4
    %v3169 = vmax.f32 %v3167, %v3168
    %v3170 = vrot.slane %v3169, 2
    %v3171 = vmax.f32 %v3169, %v3170
    %v3172 = vrot.slane %v3171, 1
    %v3173 = vmax.f32 %v3171, %v3172
    %v3174 = vsel %vm798, %v2714, -inf
    %v3175 = vrot.slane %v3174, 4
    %v3176 = vmax.f32 %v3174, %v3175
    %v3177 = vrot.slane %v3176, 2
    %v3178 = vmax.f32 %v3176, %v3177
    %v3179 = vrot.slane %v3178, 1
    %v3180 = vmax.f32 %v3178, %v3179
    %v3181 = vsel %vm798, %v2713, -inf
    %v3182 = vrot.slane %v3181, 4
    %v3183 = vmax.f32 %v3181, %v3182
    %v3184 = vrot.slane %v3183, 2
    %v3185 = vmax.f32 %v3183, %v3184
    %v3186 = vrot.slane %v3185, 1
    %v3187 = vmax.f32 %v3185, %v3186
    %v3188 = vsel %vm798, %v2715, -inf
    %v3189 = vrot.slane %v3188, 4
    %v3190 = vmax.f32 %v3188, %v3189
    %v3191 = vrot.slane %v3190, 2
    %v3192 = vmax.f32 %v3190, %v3191
    %v3193 = vrot.slane %v3192, 1
    %v3194 = vmax.f32 %v3192, %v3193
    %v3195 = vsel %vm798, %v2723, -inf
    %v3196 = vrot.slane %v3195, 4
    %v3197 = vmax.f32 %v3195, %v3196
    %v3198 = vrot.slane %v3197, 2
    %v3199 = vmax.f32 %v3197, %v3198
    %v3200 = vrot.slane %v3199, 1
    %v3201 = vmax.f32 %v3199, %v3200
    %v3202 = vsel %vm798, %v2731, -inf
    %v3203 = vrot.slane %v3202, 4
    %v3204 = vmax.f32 %v3202, %v3203
    %v3205 = vrot.slane %v3204, 2
    %v3206 = vmax.f32 %v3204, %v3205
    %v3207 = vrot.slane %v3206, 1
    %v3208 = vmax.f32 %v3206, %v3207
    %v3209 = vsel %vm798, %v2730, -inf
    %v3210 = vrot.slane %v3209, 4
    %v3211 = vmax.f32 %v3209, %v3210
    %v3212 = vrot.slane %v3211, 2
    %v3213 = vmax.f32 %v3211, %v3212
    %v3214 = vrot.slane %v3213, 1
    %v3215 = vmax.f32 %v3213, %v3214
    %v3216 = vsel %vm798, %v2732, -inf
    %v3217 = vrot.slane %v3216, 4
    %v3218 = vmax.f32 %v3216, %v3217
    %v3219 = vrot.slane %v3218, 2
    %v3220 = vmax.f32 %v3218, %v3219
    %v3221 = vrot.slane %v3220, 1
    %v3222 = vmax.f32 %v3220, %v3221
    %v3223 = vsel %vm798, %v2740, -inf
    %v3224 = vrot.slane %v3223, 4
    %v3225 = vmax.f32 %v3223, %v3224
    %v3226 = vrot.slane %v3225, 2
    %v3227 = vmax.f32 %v3225, %v3226
    %v3228 = vrot.slane %v3227, 1
    %v3229 = vmax.f32 %v3227, %v3228
    %v3230 = vsel %vm798, %v2748, -inf
    %v3231 = vrot.slane %v3230, 4
    %v3232 = vmax.f32 %v3230, %v3231
    %v3233 = vrot.slane %v3232, 2
    %v3234 = vmax.f32 %v3232, %v3233
    %v3235 = vrot.slane %v3234, 1
    %v3236 = vmax.f32 %v3234, %v3235
    %v3237 = vsel %vm798, %v2747, -inf
    %v3238 = vrot.slane %v3237, 4
    %v3239 = vmax.f32 %v3237, %v3238
    %v3240 = vrot.slane %v3239, 2
    %v3241 = vmax.f32 %v3239, %v3240
    %v3242 = vrot.slane %v3241, 1
    %v3243 = vmax.f32 %v3241, %v3242
    %v3244 = vsel %vm798, %v2749, -inf
    %v3245 = vrot.slane %v3244, 4
    %v3246 = vmax.f32 %v3244, %v3245
    %v3247 = vrot.slane %v3246, 2
    %v3248 = vmax.f32 %v3246, %v3247
    %v3249 = vrot.slane %v3248, 1
    %v3250 = vmax.f32 %v3248, %v3249
    %v3251 = vsel %vm798, %v2757, -inf
    %v3252 = vrot.slane %v3251, 4
    %v3253 = vmax.f32 %v3251, %v3252
    %v3254 = vrot.slane %v3253, 2
    %v3255 = vmax.f32 %v3253, %v3254
    %v3256 = vrot.slane %v3255, 1
    %v3257 = vmax.f32 %v3255, %v3256
    %v3258 = vsel %vm798, %v2765, -inf
    %v3259 = vrot.slane %v3258, 4
    %v3260 = vmax.f32 %v3258, %v3259
    %v3261 = vrot.slane %v3260, 2
    %v3262 = vmax.f32 %v3260, %v3261
    %v3263 = vrot.slane %v3262, 1
    %v3264 = vmax.f32 %v3262, %v3263
    %v3265 = vsel %vm798, %v2764, -inf
    %v3266 = vrot.slane %v3265, 4
    %v3267 = vmax.f32 %v3265, %v3266
    %v3268 = vrot.slane %v3267, 2
    %v3269 = vmax.f32 %v3267, %v3268
    %v3270 = vrot.slane %v3269, 1
    %v3271 = vmax.f32 %v3269, %v3270
    %v3272 = vsel %vm798, %v2766, -inf
    %v3273 = vrot.slane %v3272, 4
    %v3274 = vmax.f32 %v3272, %v3273
    %v3275 = vrot.slane %v3274, 2
    %v3276 = vmax.f32 %v3274, %v3275
    %v3277 = vrot.slane %v3276, 1
    %v3278 = vmax.f32 %v3276, %v3277
    %v3343 = vsel %vm1311, %v2844, %v2837
    %v3344 = vsel %vm1313, %v2851, %v3343
    %v3345 = vsel %vm1315, %v2858, %v3344
    %v3346 = vsel %vm1317, %v2865, %v3345
    %v3347 = vsel %vm1319, %v2872, %v3346
    %v3348 = vsel %vm1321, %v2879, %v3347
    %v3349 = vsel %vm1323, %v2886, %v3348
    %v3350 = vsel %vm1311, %v2900, %v2893
    %v3351 = vsel %vm1313, %v2907, %v3350
    %v3352 = vsel %vm1315, %v2914, %v3351
    %v3353 = vsel %vm1317, %v2921, %v3352
    %v3354 = vsel %vm1319, %v2928, %v3353
    %v3355 = vsel %vm1321, %v2935, %v3354
    %v3356 = vsel %vm1323, %v2942, %v3355
    %v3357 = vsel %vm1311, %v2956, %v2949
    %v3358 = vsel %vm1313, %v2963, %v3357
    %v3359 = vsel %vm1315, %v2970, %v3358
    %v3360 = vsel %vm1317, %v2977, %v3359
    %v3361 = vsel %vm1319, %v2984, %v3360
    %v3362 = vsel %vm1321, %v2991, %v3361
    %v3363 = vsel %vm1323, %v2998, %v3362
    %v3364 = vsel %vm1311, %v3012, %v3005
    %v3365 = vsel %vm1313, %v3019, %v3364
    %v3366 = vsel %vm1315, %v3026, %v3365
    %v3367 = vsel %vm1317, %v3033, %v3366
    %v3368 = vsel %vm1319, %v3040, %v3367
    %v3369 = vsel %vm1321, %v3047, %v3368
    %v3370 = vsel %vm1323, %v3054, %v3369
    %v3371 = vsel %vm1311, %v3068, %v3061
    %v3372 = vsel %vm1313, %v3075, %v3371
    %v3373 = vsel %vm1315, %v3082, %v3372
    %v3374 = vsel %vm1317, %v3089, %v3373
    %v3375 = vsel %vm1319, %v3096, %v3374
    %v3376 = vsel %vm1321, %v3103, %v3375
    %v3377 = vsel %vm1323, %v3110, %v3376
    %v3378 = vsel %vm1311, %v3124, %v3117
    %v3379 = vsel %vm1313, %v3131, %v3378
    %v3380 = vsel %vm1315, %v3138, %v3379
    %v3381 = vsel %vm1317, %v3145, %v3380
    %v3382 = vsel %vm1319, %v3152, %v3381
    %v3383 = vsel %vm1321, %v3159, %v3382
    %v3384 = vsel %vm1323, %v3166, %v3383
    %v3385 = vsel %vm1311, %v3180, %v3173
    %v3386 = vsel %vm1313, %v3187, %v3385
    %v3387 = vsel %vm1315, %v3194, %v3386
    %v3388 = vsel %vm1317, %v3201, %v3387
    %v3389 = vsel %vm1319, %v3208, %v3388
    %v3390 = vsel %vm1321, %v3215, %v3389
    %v3391 = vsel %vm1323, %v3222, %v3390
    %v3392 = vsel %vm1311, %v3236, %v3229
    %v3393 = vsel %vm1313, %v3243, %v3392
    %v3394 = vsel %vm1315, %v3250, %v3393
    %v3395 = vsel %vm1317, %v3257, %v3394
    %v3396 = vsel %vm1319, %v3264, %v3395
    %v3397 = vsel %vm1321, %v3271, %v3396
    %v3398 = vsel %vm1323, %v3278, %v3397
    %v3407 = vcombine.high %v3349, 0.0
    %v3409 = vunpack.c.l.s4 1983009808
    %v3410 = vunpack.c.0.s8 %v3409
    %v3411 = vlaneseq
    %v3412 = vshrl.u32 %v3411, 7
    %v3413 = vsub.s32 %v3410, %v3412
    %v3414 = vrot.slane %v3349, %v3413
    %v3416 = vunpack.c.l.s4 1983009808
    %v3417 = vunpack.c.0.s8 %v3416
    %v3418 = vlaneseq
    %v3419 = vshrl.u32 %v3418, 7
    %v3420 = vsub.s32 %v3417, %v3419
    %v3421 = vrot.slane %v3407, %v3420
    %v3422 = vcombine.high %v3414, 0.0
    %v3424 = vunpack.c.l.s4 1934713408
    %v3425 = vunpack.c.0.s8 %v3424
    %v3426 = vlaneseq
    %v3427 = vshrl.u32 %v3426, 7
    %v3428 = vsub.s32 %v3425, %v3427
    %v3429 = vrot.slane %v3414, %v3428
    %v3431 = vunpack.c.l.s4 1934713408
    %v3432 = vunpack.c.0.s8 %v3431
    %v3433 = vlaneseq
    %v3434 = vshrl.u32 %v3433, 7
    %v3435 = vsub.s32 %v3432, %v3434
    %v3436 = vrot.slane %v3422, %v3435
    %v3437 = vcombine.high %v3421, 0.0
    %v3439 = vunpack.c.l.s4 1934713408
    %v3440 = vunpack.c.0.s8 %v3439
    %v3441 = vlaneseq
    %v3442 = vshrl.u32 %v3441, 7
    %v3443 = vsub.s32 %v3440, %v3442
    %v3444 = vrot.slane %v3421, %v3443
    %v3446 = vunpack.c.l.s4 1934713408
    %v3447 = vunpack.c.0.s8 %v3446
    %v3448 = vlaneseq
    %v3449 = vshrl.u32 %v3448, 7
    %v3450 = vsub.s32 %v3447, %v3449
    %v3451 = vrot.slane %v3437, %v3450
    %v3452 = vcombine.high %v3429, 0.0
    %v3453 = vcombine.high %v3436, 0.0
    %v3454 = vcombine.high %v3444, 0.0
    %v3455 = vcombine.high %v3451, 0.0
    %v3456 = vcombine.high %v3356, 0.0
    %v3458 = vunpack.c.l.s4 1983009808
    %v3459 = vunpack.c.0.s8 %v3458
    %v3460 = vlaneseq
    %v3461 = vshrl.u32 %v3460, 7
    %v3462 = vsub.s32 %v3459, %v3461
    %v3463 = vrot.slane %v3356, %v3462
    %v3465 = vunpack.c.l.s4 1983009808
    %v3466 = vunpack.c.0.s8 %v3465
    %v3467 = vlaneseq
    %v3468 = vshrl.u32 %v3467, 7
    %v3469 = vsub.s32 %v3466, %v3468
    %v3470 = vrot.slane %v3456, %v3469
    %v3471 = vcombine.high %v3463, 0.0
    %v3473 = vunpack.c.l.s4 1934713408
    %v3474 = vunpack.c.0.s8 %v3473
    %v3475 = vlaneseq
    %v3476 = vshrl.u32 %v3475, 7
    %v3477 = vsub.s32 %v3474, %v3476
    %v3478 = vrot.slane %v3463, %v3477
    %v3480 = vunpack.c.l.s4 1934713408
    %v3481 = vunpack.c.0.s8 %v3480
    %v3482 = vlaneseq
    %v3483 = vshrl.u32 %v3482, 7
    %v3484 = vsub.s32 %v3481, %v3483
    %v3485 = vrot.slane %v3471, %v3484
    %v3486 = vcombine.high %v3470, 0.0
    %v3488 = vunpack.c.l.s4 1934713408
    %v3489 = vunpack.c.0.s8 %v3488
    %v3490 = vlaneseq
    %v3491 = vshrl.u32 %v3490, 7
    %v3492 = vsub.s32 %v3489, %v3491
    %v3493 = vrot.slane %v3470, %v3492
    %v3495 = vunpack.c.l.s4 1934713408
    %v3496 = vunpack.c.0.s8 %v3495
    %v3497 = vlaneseq
    %v3498 = vshrl.u32 %v3497, 7
    %v3499 = vsub.s32 %v3496, %v3498
    %v3500 = vrot.slane %v3486, %v3499
    %v3501 = vcombine.high %v3478, 0.0
    %v3502 = vcombine.high %v3485, 0.0
    %v3503 = vcombine.high %v3493, 0.0
    %v3504 = vcombine.high %v3500, 0.0
    %v3505 = vcombine.high %v3363, 0.0
    %v3507 = vunpack.c.l.s4 1983009808
    %v3508 = vunpack.c.0.s8 %v3507
    %v3509 = vlaneseq
    %v3510 = vshrl.u32 %v3509, 7
    %v3511 = vsub.s32 %v3508, %v3510
    %v3512 = vrot.slane %v3363, %v3511
    %v3514 = vunpack.c.l.s4 1983009808
    %v3515 = vunpack.c.0.s8 %v3514
    %v3516 = vlaneseq
    %v3517 = vshrl.u32 %v3516, 7
    %v3518 = vsub.s32 %v3515, %v3517
    %v3519 = vrot.slane %v3505, %v3518
    %v3520 = vcombine.high %v3512, 0.0
    %v3522 = vunpack.c.l.s4 1934713408
    %v3523 = vunpack.c.0.s8 %v3522
    %v3524 = vlaneseq
    %v3525 = vshrl.u32 %v3524, 7
    %v3526 = vsub.s32 %v3523, %v3525
    %v3527 = vrot.slane %v3512, %v3526
    %v3529 = vunpack.c.l.s4 1934713408
    %v3530 = vunpack.c.0.s8 %v3529
    %v3531 = vlaneseq
    %v3532 = vshrl.u32 %v3531, 7
    %v3533 = vsub.s32 %v3530, %v3532
    %v3534 = vrot.slane %v3520, %v3533
    %v3535 = vcombine.high %v3519, 0.0
    %v3537 = vunpack.c.l.s4 1934713408
    %v3538 = vunpack.c.0.s8 %v3537
    %v3539 = vlaneseq
    %v3540 = vshrl.u32 %v3539, 7
    %v3541 = vsub.s32 %v3538, %v3540
    %v3542 = vrot.slane %v3519, %v3541
    %v3544 = vunpack.c.l.s4 1934713408
    %v3545 = vunpack.c.0.s8 %v3544
    %v3546 = vlaneseq
    %v3547 = vshrl.u32 %v3546, 7
    %v3548 = vsub.s32 %v3545, %v3547
    %v3549 = vrot.slane %v3535, %v3548
    %v3550 = vcombine.high %v3527, 0.0
    %v3551 = vcombine.high %v3534, 0.0
    %v3552 = vcombine.high %v3542, 0.0
    %v3553 = vcombine.high %v3549, 0.0
    %v3554 = vcombine.high %v3370, 0.0
    %v3556 = vunpack.c.l.s4 1983009808
    %v3557 = vunpack.c.0.s8 %v3556
    %v3558 = vlaneseq
    %v3559 = vshrl.u32 %v3558, 7
    %v3560 = vsub.s32 %v3557, %v3559
    %v3561 = vrot.slane %v3370, %v3560
    %v3563 = vunpack.c.l.s4 1983009808
    %v3564 = vunpack.c.0.s8 %v3563
    %v3565 = vlaneseq
    %v3566 = vshrl.u32 %v3565, 7
    %v3567 = vsub.s32 %v3564, %v3566
    %v3568 = vrot.slane %v3554, %v3567
    %v3569 = vcombine.high %v3561, 0.0
    %v3571 = vunpack.c.l.s4 1934713408
    %v3572 = vunpack.c.0.s8 %v3571
    %v3573 = vlaneseq
    %v3574 = vshrl.u32 %v3573, 7
    %v3575 = vsub.s32 %v3572, %v3574
    %v3576 = vrot.slane %v3561, %v3575
    %v3578 = vunpack.c.l.s4 1934713408
    %v3579 = vunpack.c.0.s8 %v3578
    %v3580 = vlaneseq
    %v3581 = vshrl.u32 %v3580, 7
    %v3582 = vsub.s32 %v3579, %v3581
    %v3583 = vrot.slane %v3569, %v3582
    %v3584 = vcombine.high %v3568, 0.0
    %v3586 = vunpack.c.l.s4 1934713408
    %v3587 = vunpack.c.0.s8 %v3586
    %v3588 = vlaneseq
    %v3589 = vshrl.u32 %v3588, 7
    %v3590 = vsub.s32 %v3587, %v3589
    %v3591 = vrot.slane %v3568, %v3590
    %v3593 = vunpack.c.l.s4 1934713408
    %v3594 = vunpack.c.0.s8 %v3593
    %v3595 = vlaneseq
    %v3596 = vshrl.u32 %v3595, 7
    %v3597 = vsub.s32 %v3594, %v3596
    %v3598 = vrot.slane %v3584, %v3597
    %v3599 = vcombine.high %v3576, 0.0
    %v3600 = vcombine.high %v3583, 0.0
    %v3601 = vcombine.high %v3591, 0.0
    %v3602 = vcombine.high %v3598, 0.0
    %v3603 = vcombine.high %v3377, 0.0
    %v3605 = vunpack.c.l.s4 1983009808
    %v3606 = vunpack.c.0.s8 %v3605
    %v3607 = vlaneseq
    %v3608 = vshrl.u32 %v3607, 7
    %v3609 = vsub.s32 %v3606, %v3608
    %v3610 = vrot.slane %v3377, %v3609
    %v3612 = vunpack.c.l.s4 1983009808
    %v3613 = vunpack.c.0.s8 %v3612
    %v3614 = vlaneseq
    %v3615 = vshrl.u32 %v3614, 7
    %v3616 = vsub.s32 %v3613, %v3615
    %v3617 = vrot.slane %v3603, %v3616
    %v3618 = vcombine.high %v3610, 0.0
    %v3620 = vunpack.c.l.s4 1934713408
    %v3621 = vunpack.c.0.s8 %v3620
    %v3622 = vlaneseq
    %v3623 = vshrl.u32 %v3622, 7
    %v3624 = vsub.s32 %v3621, %v3623
    %v3625 = vrot.slane %v3610, %v3624
    %v3627 = vunpack.c.l.s4 1934713408
    %v3628 = vunpack.c.0.s8 %v3627
    %v3629 = vlaneseq
    %v3630 = vshrl.u32 %v3629, 7
    %v3631 = vsub.s32 %v3628, %v3630
    %v3632 = vrot.slane %v3618, %v3631
    %v3633 = vcombine.high %v3617, 0.0
    %v3635 = vunpack.c.l.s4 1934713408
    %v3636 = vunpack.c.0.s8 %v3635
    %v3637 = vlaneseq
    %v3638 = vshrl.u32 %v3637, 7
    %v3639 = vsub.s32 %v3636, %v3638
    %v3640 = vrot.slane %v3617, %v3639
    %v3642 = vunpack.c.l.s4 1934713408
    %v3643 = vunpack.c.0.s8 %v3642
    %v3644 = vlaneseq
    %v3645 = vshrl.u32 %v3644, 7
    %v3646 = vsub.s32 %v3643, %v3645
    %v3647 = vrot.slane %v3633, %v3646
    %v3648 = vcombine.high %v3625, 0.0
    %v3649 = vcombine.high %v3632, 0.0
    %v3650 = vcombine.high %v3640, 0.0
    %v3651 = vcombine.high %v3647, 0.0
    %v3652 = vcombine.high %v3384, 0.0
    %v3654 = vunpack.c.l.s4 1983009808
    %v3655 = vunpack.c.0.s8 %v3654
    %v3656 = vlaneseq
    %v3657 = vshrl.u32 %v3656, 7
    %v3658 = vsub.s32 %v3655, %v3657
    %v3659 = vrot.slane %v3384, %v3658
    %v3661 = vunpack.c.l.s4 1983009808
    %v3662 = vunpack.c.0.s8 %v3661
    %v3663 = vlaneseq
    %v3664 = vshrl.u32 %v3663, 7
    %v3665 = vsub.s32 %v3662, %v3664
    %v3666 = vrot.slane %v3652, %v3665
    %v3667 = vcombine.high %v3659, 0.0
    %v3669 = vunpack.c.l.s4 1934713408
    %v3670 = vunpack.c.0.s8 %v3669
    %v3671 = vlaneseq
    %v3672 = vshrl.u32 %v3671, 7
    %v3673 = vsub.s32 %v3670, %v3672
    %v3674 = vrot.slane %v3659, %v3673
    %v3676 = vunpack.c.l.s4 1934713408
    %v3677 = vunpack.c.0.s8 %v3676
    %v3678 = vlaneseq
    %v3679 = vshrl.u32 %v3678, 7
    %v3680 = vsub.s32 %v3677, %v3679
    %v3681 = vrot.slane %v3667, %v3680
    %v3682 = vcombine.high %v3666, 0.0
    %v3684 = vunpack.c.l.s4 1934713408
    %v3685 = vunpack.c.0.s8 %v3684
    %v3686 = vlaneseq
    %v3687 = vshrl.u32 %v3686, 7
    %v3688 = vsub.s32 %v3685, %v3687
    %v3689 = vrot.slane %v3666, %v3688
    %v3691 = vunpack.c.l.s4 1934713408
    %v3692 = vunpack.c.0.s8 %v3691
    %v3693 = vlaneseq
    %v3694 = vshrl.u32 %v3693, 7
    %v3695 = vsub.s32 %v3692, %v3694
    %v3696 = vrot.slane %v3682, %v3695
    %v3697 = vcombine.high %v3674, 0.0
    %v3698 = vcombine.high %v3681, 0.0
    %v3699 = vcombine.high %v3689, 0.0
    %v3700 = vcombine.high %v3696, 0.0
    %v3701 = vcombine.high %v3391, 0.0
    %v3703 = vunpack.c.l.s4 1983009808
    %v3704 = vunpack.c.0.s8 %v3703
    %v3705 = vlaneseq
    %v3706 = vshrl.u32 %v3705, 7
    %v3707 = vsub.s32 %v3704, %v3706
    %v3708 = vrot.slane %v3391, %v3707
    %v3710 = vunpack.c.l.s4 1983009808
    %v3711 = vunpack.c.0.s8 %v3710
    %v3712 = vlaneseq
    %v3713 = vshrl.u32 %v3712, 7
    %v3714 = vsub.s32 %v3711, %v3713
    %v3715 = vrot.slane %v3701, %v3714
    %v3716 = vcombine.high %v3708, 0.0
    %v3718 = vunpack.c.l.s4 1934713408
    %v3719 = vunpack.c.0.s8 %v3718
    %v3720 = vlaneseq
    %v3721 = vshrl.u32 %v3720, 7
    %v3722 = vsub.s32 %v3719, %v3721
    %v3723 = vrot.slane %v3708, %v3722
    %v3725 = vunpack.c.l.s4 1934713408
    %v3726 = vunpack.c.0.s8 %v3725
    %v3727 = vlaneseq
    %v3728 = vshrl.u32 %v3727, 7
    %v3729 = vsub.s32 %v3726, %v3728
    %v3730 = vrot.slane %v3716, %v3729
    %v3731 = vcombine.high %v3715, 0.0
    %v3733 = vunpack.c.l.s4 1934713408
    %v3734 = vunpack.c.0.s8 %v3733
    %v3735 = vlaneseq
    %v3736 = vshrl.u32 %v3735, 7
    %v3737 = vsub.s32 %v3734, %v3736
    %v3738 = vrot.slane %v3715, %v3737
    %v3740 = vunpack.c.l.s4 1934713408
    %v3741 = vunpack.c.0.s8 %v3740
    %v3742 = vlaneseq
    %v3743 = vshrl.u32 %v3742, 7
    %v3744 = vsub.s32 %v3741, %v3743
    %v3745 = vrot.slane %v3731, %v3744
    %v3746 = vcombine.high %v3723, 0.0
    %v3747 = vcombine.high %v3730, 0.0
    %v3748 = vcombine.high %v3738, 0.0
    %v3749 = vcombine.high %v3745, 0.0
    %v3750 = vcombine.high %v3398, 0.0
    %v3752 = vunpack.c.l.s4 1983009808
    %v3753 = vunpack.c.0.s8 %v3752
    %v3754 = vlaneseq
    %v3755 = vshrl.u32 %v3754, 7
    %v3756 = vsub.s32 %v3753, %v3755
    %v3757 = vrot.slane %v3398, %v3756
    %v3759 = vunpack.c.l.s4 1983009808
    %v3760 = vunpack.c.0.s8 %v3759
    %v3761 = vlaneseq
    %v3762 = vshrl.u32 %v3761, 7
    %v3763 = vsub.s32 %v3760, %v3762
    %v3764 = vrot.slane %v3750, %v3763
    %v3765 = vcombine.high %v3757, 0.0
    %v3767 = vunpack.c.l.s4 1934713408
    %v3768 = vunpack.c.0.s8 %v3767
    %v3769 = vlaneseq
    %v3770 = vshrl.u32 %v3769, 7
    %v3771 = vsub.s32 %v3768, %v3770
    %v3772 = vrot.slane %v3757, %v3771
    %v3774 = vunpack.c.l.s4 1934713408
    %v3775 = vunpack.c.0.s8 %v3774
    %v3776 = vlaneseq
    %v3777 = vshrl.u32 %v3776, 7
    %v3778 = vsub.s32 %v3775, %v3777
    %v3779 = vrot.slane %v3765, %v3778
    %v3780 = vcombine.high %v3764, 0.0
    %v3782 = vunpack.c.l.s4 1934713408
    %v3783 = vunpack.c.0.s8 %v3782
    %v3784 = vlaneseq
    %v3785 = vshrl.u32 %v3784, 7
    %v3786 = vsub.s32 %v3783, %v3785
    %v3787 = vrot.slane %v3764, %v3786
    %v3789 = vunpack.c.l.s4 1934713408
    %v3790 = vunpack.c.0.s8 %v3789
    %v3791 = vlaneseq
    %v3792 = vshrl.u32 %v3791, 7
    %v3793 = vsub.s32 %v3790, %v3792
    %v3794 = vrot.slane %v3780, %v3793
    %v3795 = vcombine.high %v3772, 0.0
    %v3796 = vcombine.high %v3779, 0.0
    %v3797 = vcombine.high %v3787, 0.0
    %v3798 = vcombine.high %v3794, 0.0
    %3807 = vrot.lane.b32.xlu0 %v3452, 8
    %v3808 = vpop.permute.xlu0 %3807
    %3809 = vrot.lane.b32.xlu0 %v3501, 8
    %v3810 = vpop.permute.xlu0 %3809
    %3811 = vrot.lane.b32.xlu0 %v3550, 8
    %v3812 = vpop.permute.xlu0 %3811
    %3813 = vrot.lane.b32.xlu0 %v3599, 8
    %v3814 = vpop.permute.xlu0 %3813
    %3815 = vrot.lane.b32.xlu0 %v3648, 8
    %v3816 = vpop.permute.xlu0 %3815
    %3817 = vrot.lane.b32.xlu0 %v3697, 8
    %v3818 = vpop.permute.xlu0 %3817
    %3819 = vrot.lane.b32.xlu0 %v3746, 8
    %v3820 = vpop.permute.xlu0 %3819
    %3821 = vrot.lane.b32.xlu0 %v3795, 8
    %v3822 = vpop.permute.xlu0 %3821
    %3839 = vrot.lane.b32.xlu0 %v3436, 16
    %v3840 = vpop.permute.xlu0 %3839
    %3841 = vrot.lane.b32.xlu0 %v3485, 16
    %v3842 = vpop.permute.xlu0 %3841
    %3843 = vrot.lane.b32.xlu0 %v3534, 16
    %v3844 = vpop.permute.xlu0 %3843
    %3845 = vrot.lane.b32.xlu0 %v3583, 16
    %v3846 = vpop.permute.xlu0 %3845
    %3847 = vrot.lane.b32.xlu0 %v3632, 16
    %v3848 = vpop.permute.xlu0 %3847
    %3849 = vrot.lane.b32.xlu0 %v3681, 16
    %v3850 = vpop.permute.xlu0 %3849
    %3851 = vrot.lane.b32.xlu0 %v3730, 16
    %v3852 = vpop.permute.xlu0 %3851
    %3853 = vrot.lane.b32.xlu0 %v3779, 16
    %v3854 = vpop.permute.xlu0 %3853
    %3871 = vrot.lane.b32.xlu0 %v3453, 24
    %v3872 = vpop.permute.xlu0 %3871
    %3873 = vrot.lane.b32.xlu0 %v3502, 24
    %v3874 = vpop.permute.xlu0 %3873
    %3875 = vrot.lane.b32.xlu0 %v3551, 24
    %v3876 = vpop.permute.xlu0 %3875
    %3877 = vrot.lane.b32.xlu0 %v3600, 24
    %v3878 = vpop.permute.xlu0 %3877
    %3879 = vrot.lane.b32.xlu0 %v3649, 24
    %v3880 = vpop.permute.xlu0 %3879
    %3881 = vrot.lane.b32.xlu0 %v3698, 24
    %v3882 = vpop.permute.xlu0 %3881
    %3883 = vrot.lane.b32.xlu0 %v3747, 24
    %v3884 = vpop.permute.xlu0 %3883
    %3885 = vrot.lane.b32.xlu0 %v3796, 24
    %v3886 = vpop.permute.xlu0 %3885
    %3903 = vrot.lane.b32.xlu0 %v3444, 32
    %v3904 = vpop.permute.xlu0 %3903
    %3905 = vrot.lane.b32.xlu0 %v3493, 32
    %v3906 = vpop.permute.xlu0 %3905
    %3907 = vrot.lane.b32.xlu0 %v3542, 32
    %v3908 = vpop.permute.xlu0 %3907
    %3909 = vrot.lane.b32.xlu0 %v3591, 32
    %v3910 = vpop.permute.xlu0 %3909
    %3911 = vrot.lane.b32.xlu0 %v3640, 32
    %v3912 = vpop.permute.xlu0 %3911
    %3913 = vrot.lane.b32.xlu0 %v3689, 32
    %v3914 = vpop.permute.xlu0 %3913
    %3915 = vrot.lane.b32.xlu0 %v3738, 32
    %v3916 = vpop.permute.xlu0 %3915
    %3917 = vrot.lane.b32.xlu0 %v3787, 32
    %v3918 = vpop.permute.xlu0 %3917
    %3935 = vrot.lane.b32.xlu0 %v3454, 40
    %v3936 = vpop.permute.xlu0 %3935
    %3937 = vrot.lane.b32.xlu0 %v3503, 40
    %v3938 = vpop.permute.xlu0 %3937
    %3939 = vrot.lane.b32.xlu0 %v3552, 40
    %v3940 = vpop.permute.xlu0 %3939
    %3941 = vrot.lane.b32.xlu0 %v3601, 40
    %v3942 = vpop.permute.xlu0 %3941
    %3943 = vrot.lane.b32.xlu0 %v3650, 40
    %v3944 = vpop.permute.xlu0 %3943
    %3945 = vrot.lane.b32.xlu0 %v3699, 40
    %v3946 = vpop.permute.xlu0 %3945
    %3947 = vrot.lane.b32.xlu0 %v3748, 40
    %v3948 = vpop.permute.xlu0 %3947
    %3949 = vrot.lane.b32.xlu0 %v3797, 40
    %v3950 = vpop.permute.xlu0 %3949
    %3967 = vrot.lane.b32.xlu0 %v3451, 48
    %v3968 = vpop.permute.xlu0 %3967
    %3969 = vrot.lane.b32.xlu0 %v3500, 48
    %v3970 = vpop.permute.xlu0 %3969
    %3971 = vrot.lane.b32.xlu0 %v3549, 48
    %v3972 = vpop.permute.xlu0 %3971
    %3973 = vrot.lane.b32.xlu0 %v3598, 48
    %v3974 = vpop.permute.xlu0 %3973
    %3975 = vrot.lane.b32.xlu0 %v3647, 48
    %v3976 = vpop.permute.xlu0 %3975
    %3977 = vrot.lane.b32.xlu0 %v3696, 48
    %v3978 = vpop.permute.xlu0 %3977
    %3979 = vrot.lane.b32.xlu0 %v3745, 48
    %v3980 = vpop.permute.xlu0 %3979
    %3981 = vrot.lane.b32.xlu0 %v3794, 48
    %v3982 = vpop.permute.xlu0 %3981
    %3999 = vrot.lane.b32.xlu0 %v3455, 56
    %v4000 = vpop.permute.xlu0 %3999
    %4001 = vrot.lane.b32.xlu0 %v3504, 56
    %v4002 = vpop.permute.xlu0 %4001
    %4003 = vrot.lane.b32.xlu0 %v3553, 56
    %v4004 = vpop.permute.xlu0 %4003
    %4005 = vrot.lane.b32.xlu0 %v3602, 56
    %v4006 = vpop.permute.xlu0 %4005
    %4007 = vrot.lane.b32.xlu0 %v3651, 56
    %v4008 = vpop.permute.xlu0 %4007
    %4009 = vrot.lane.b32.xlu0 %v3700, 56
    %v4010 = vpop.permute.xlu0 %4009
    %4011 = vrot.lane.b32.xlu0 %v3749, 56
    %v4012 = vpop.permute.xlu0 %4011
    %4013 = vrot.lane.b32.xlu0 %v3798, 56
    %v4014 = vpop.permute.xlu0 %4013
    %v4023 = vsel %vm1998, %v3429, %v3808
    %v4024 = vsel %vm1998, %v3478, %v3810
    %v4025 = vsel %vm1998, %v3527, %v3812
    %v4026 = vsel %vm1998, %v3576, %v3814
    %v4027 = vsel %vm1998, %v3625, %v3816
    %v4028 = vsel %vm1998, %v3674, %v3818
    %v4029 = vsel %vm1998, %v3723, %v3820
    %v4030 = vsel %vm1998, %v3772, %v3822
    %v4031 = vsel %vm2007, %v4023, %v3840
    %v4032 = vsel %vm2007, %v4024, %v3842
    %v4033 = vsel %vm2007, %v4025, %v3844
    %v4034 = vsel %vm2007, %v4026, %v3846
    %v4035 = vsel %vm2007, %v4027, %v3848
    %v4036 = vsel %vm2007, %v4028, %v3850
    %v4037 = vsel %vm2007, %v4029, %v3852
    %v4038 = vsel %vm2007, %v4030, %v3854
    %v4039 = vsel %vm2016, %v4031, %v3872
    %v4040 = vsel %vm2016, %v4032, %v3874
    %v4041 = vsel %vm2016, %v4033, %v3876
    %v4042 = vsel %vm2016, %v4034, %v3878
    %v4043 = vsel %vm2016, %v4035, %v3880
    %v4044 = vsel %vm2016, %v4036, %v3882
    %v4045 = vsel %vm2016, %v4037, %v3884
    %v4046 = vsel %vm2016, %v4038, %v3886
    %v4047 = vsel %vm2025, %v4039, %v3904
    %v4048 = vsel %vm2025, %v4040, %v3906
    %v4049 = vsel %vm2025, %v4041, %v3908
    %v4050 = vsel %vm2025, %v4042, %v3910
    %v4051 = vsel %vm2025, %v4043, %v3912
    %v4052 = vsel %vm2025, %v4044, %v3914
    %v4053 = vsel %vm2025, %v4045, %v3916
    %v4054 = vsel %vm2025, %v4046, %v3918
    %v4055 = vsel %vm2034, %v4047, %v3936
    %v4056 = vsel %vm2034, %v4048, %v3938
    %v4057 = vsel %vm2034, %v4049, %v3940
    %v4058 = vsel %vm2034, %v4050, %v3942
    %v4059 = vsel %vm2034, %v4051, %v3944
    %v4060 = vsel %vm2034, %v4052, %v3946
    %v4061 = vsel %vm2034, %v4053, %v3948
    %v4062 = vsel %vm2034, %v4054, %v3950
    %v4063 = vsel %vm2043, %v4055, %v3968
    %v4064 = vsel %vm2043, %v4056, %v3970
    %v4065 = vsel %vm2043, %v4057, %v3972
    %v4066 = vsel %vm2043, %v4058, %v3974
    %v4067 = vsel %vm2043, %v4059, %v3976
    %v4068 = vsel %vm2043, %v4060, %v3978
    %v4069 = vsel %vm2043, %v4061, %v3980
    %v4070 = vsel %vm2043, %v4062, %v3982
    %v4071 = vsel %vm2052, %v4063, %v4000
    %v4072 = vsel %vm2052, %v4064, %v4002
    %v4073 = vsel %vm2052, %v4065, %v4004
    %v4074 = vsel %vm2052, %v4066, %v4006
    %v4075 = vsel %vm2052, %v4067, %v4008
    %v4076 = vsel %vm2052, %v4068, %v4010
    %v4077 = vsel %vm2052, %v4069, %v4012
    %v4078 = vsel %vm2052, %v4070, %v4014
    %s4079 = scalar_lea.vmem [#allocation5], 8
    %4080 = vst.msk [vmem:[%s4079] sm:$0x1] %vm2061, %v4071
    %4081 = vst.msk [vmem:[%s4079 + $0x1] sm:$0x1] %vm2061, %v4072
    %4082 = vst.msk [vmem:[%s4079 + $0x2] sm:$0x1] %vm2061, %v4073
    %4083 = vst.msk [vmem:[%s4079 + $0x3] sm:$0x1] %vm2061, %v4074
    %4084 = vst.msk [vmem:[%s4079 + $0x4] sm:$0x1] %vm2061, %v4075
    %4085 = vst.msk [vmem:[%s4079 + $0x5] sm:$0x1] %vm2061, %v4076
    %4086 = vst.msk [vmem:[%s4079 + $0x6] sm:$0x1] %vm2061, %v4077
    %4087 = vst.msk [vmem:[%s4079 + $0x7] sm:$0x1] %vm2061, %v4078
    // Predicated region
    $region18: #{tpu_custom_call.1} parent=1 // pred_check
      _
    $region19: #{tpu_custom_call.1} parent=1 // pred_check_branch
      %4089 = sbr.rel (0) target = $region21
    $region20: #{tpu_custom_call.1} parent=1 // pred_region
      %s4091 = ssub.s32 256, 256
      %4092 = vsyncadd [#allocation4], %s4091
      %s4093 = sshll.u32 [#allocation5], 4
      %s4094 = int_to_ptr.vmem [resolvable:$true] %s4093
      %4099 = dma.vmem_to_hbm [thread:$0]  %s4094, 256, %s3, [#allocation4], 16, 16, 1
    $region21: #{tpu_custom_call.1} parent=1 // pred_fallthru
      _
    // Predicated region
    $region22: #{tpu_custom_call.1} parent=1 // pred_check
      _
    $region23: #{tpu_custom_call.1} parent=1 // pred_check_branch
      %4101 = sbr.rel (0) target = $region25
    $region24: #{tpu_custom_call.1} parent=1 // pred_region
      %4102 = dma.done [#allocation4], 256
    $region25: #{tpu_custom_call.1} parent=1 // pred_fallthru
      _
    %4103 = vsyncpa [#allocation3], 1
    %4104 = vsyncpa [#allocation4], 1

</llo_original>
